<compile_context>
chip_gen: v5e
topology: v5e:2x2
jax: 0.10.0
libtpu: 0.0.40
codegen_flags: <defaults>
</compile_context>

<pallas_src>
import numpy as np
import jax
import jax.numpy as jnp
from jax.experimental import pallas as pl
from jax.experimental.pallas import tpu as pltpu


# ----------------------------- host-side weight prep -------------------------

def _banded_conv_weight(w, width):
    """Fold a (3,3,Cin,Cout) conv weight into one stacked banded matrix.

    Returns (3*width*Cin, width*Cout): the three kh row-taps are stacked along
    K (kh-major) so the whole 3x3 conv is a single MXU matmul against an LHS
    whose lanes are [tap(kh=0) | tap(kh=1) | tap(kh=2)], each tap in (w, cin)
    order.  Output columns are ordered (w % 2, w // 2, cout) so the 2x2 average
    pool over W is lane-half0 + lane-half1 and pooled columns come out in
    (w, cout) order for the next layer.  W zero-padding is baked into the band.
    """
    w = np.asarray(w, np.float32)
    _, _, cin, cout = w.shape
    half = (width // 2) * cout
    bands = np.zeros((3, width * cin, width * cout), np.float32)
    for kh in range(3):
        for wo in range(width):
            col0 = (wo % 2) * half + (wo // 2) * cout
            for kw in range(3):
                wi = wo + kw - 1
                if 0 <= wi < width:
                    bands[kh, wi * cin:(wi + 1) * cin, col0:col0 + cout] = w[kh, kw]
    return jnp.asarray(bands.reshape(3 * width * cin, width * cout))


def prepare_params(params, *, depth=6, height=16, width=16):
    """One-time host prep: stacked banded conv weights, tiled biases, permuted fc1."""
    (w1, b1, w2, b2, w3, b3, wf1, bf1, wf2, bf2) = params
    c3, hh, ww = 32, height // 8, width // 8
    blk = ww * c3                                    # lane width of one (h, d) block

    # kernel feature order : k = (h*depth + d)*blk + w*c3 + c
    # pytorch flatten order: p = ((c*depth + d)*hh + h)*ww + w
    k_of_p = np.empty((c3, depth, hh, ww), np.int32)
    for c in range(c3):
        for d in range(depth):
            for h in range(hh):
                for w in range(ww):
                    k_of_p[c, d, h, w] = (h * depth + d) * blk + w * c3 + c
    k_of_p = k_of_p.reshape(-1)
    p_of_k = np.argsort(k_of_p)                      # kernel col -> pytorch row

    return dict(
        B1=_banded_conv_weight(w1, width),           # (48, 128)
        B2=_banded_conv_weight(w2, width // 2),      # (192, 128)
        B3=_banded_conv_weight(w3, width // 4),      # (192, 128)
        bb1=jnp.tile(jnp.asarray(b1).reshape(1, -1), (1, width)),
        bb2=jnp.tile(jnp.asarray(b2).reshape(1, -1), (1, width // 2)),
        bb3=jnp.tile(jnp.asarray(b3).reshape(1, -1), (1, width // 4)),
        wf1=jnp.asarray(np.asarray(wf1, np.float32)[p_of_k]),
        bf1=jnp.asarray(bf1), wf2=jnp.asarray(wf2), bf2=jnp.asarray(bf2),
        k_of_p=jnp.asarray(k_of_p),
        depth=depth, height=height, width=width)


# --------------------------------- fused kernel -------------------------------

def _fused_forward_call(a0, kp, n_pad):
    D, H, W = kp["depth"], kp["height"], kp["width"]
    H2, H4, H8 = H // 2, H // 4, H // 8
    C1, C2, C3 = 8, 16, 32
    S = D * n_pad                                    # sublane axis: d*n_pad + n
    TH = 2                                           # conv output rows per tile
    feat_cols = H8 * D * (W // 8) * C3               # 768
    f32 = jnp.float32

    def kernel(a0_ref, w1_ref, bb1_ref, w2_ref, bb2_ref, w3_ref, bb3_ref,
               wf1_ref, bf1_ref, wf2_ref, bf2_ref,
               feats_ref, logits_ref, p2, p3):

        def epilogue(acc, bias, wc, cout):
            """bias + ReLU + 2x2 avg-pool on one (TH*S, wc*cout) conv tile."""
            r = jnp.maximum(acc + bias, 0.0).reshape(TH // 2, 2, S, wc * cout)
            rh = r[:, 0] + r[:, 1]                          # pool over H pairs
            half = (wc // 2) * cout
            return 0.25 * (rh[:, :, :half] + rh[:, :, half:])  # pool over W

        # Zero only the two H-halo rows of each padded activation scratch.
        z2 = jnp.zeros((1, S, (W // 2) * C1), f32)
        z3 = jnp.zeros((1, S, (W // 4) * C2), f32)
        p2[0:1] = z2
        p2[H2 + 1:H2 + 2] = z2
        p3[0:1] = z3
        p3[H4 + 1:H4 + 2] = z3

        # conv1: host-prebuilt tap-replicated LHS (H, S, 3*W); 1 matmul / tile.
        for h0 in range(0, H, TH):
            lhs = a0_ref[h0:h0 + TH].reshape(TH * S, 3 * W)
            acc = jnp.dot(lhs, w1_ref[...], preferred_element_type=f32)
            p2[1 + h0 // 2:2 + h0 // 2] = epilogue(acc, bb1_ref[...], W, C1)

        # conv2: one contiguous (TH+2)-row window read per tile, the 3 taps
        # concatenated along lanes (64-lane pieces, tile-aligned), 1 matmul.
        for h0 in range(0, H2, TH):
            win = p2[h0:h0 + TH + 2]                        # (TH+2, S, 64)
            lhs = jnp.concatenate([win[kh:kh + TH] for kh in range(3)],
                                  axis=-1).reshape(TH * S, 3 * (W // 2) * C1)
            acc = jnp.dot(lhs, w2_ref[...], preferred_element_type=f32)
            p3[1 + h0 // 2:2 + h0 // 2] = epilogue(acc, bb2_ref[...], W // 2, C2)

        # conv3: pooled rows kept in registers to feed feats assembly directly.
        a3_rows = []
        for h0 in range(0, H4, TH):
            win = p3[h0:h0 + TH + 2]                        # (TH+2, S, 64)
            lhs = jnp.concatenate([win[kh:kh + TH] for kh in range(3)],
                                  axis=-1).reshape(TH * S, 3 * (W // 4) * C2)
            acc = jnp.dot(lhs, w3_ref[...], preferred_element_type=f32)
            a3_rows.append(epilogue(acc, bb3_ref[...], W // 4, C3)[0])  # (S, 64)

        # Lane-dense (n_pad, 768) feature slab in kernel column order
        # k = (h*D + d)*64 + w*32 + c, written with ONE unmasked store.
        pieces = [a3_rows[h][d * n_pad:(d + 1) * n_pad, :]
                  for h in range(H8) for d in range(D)]      # 12 x (n_pad, 64)
        pairs = [jnp.concatenate(pieces[i:i + 2], axis=-1)   # 64+64 -> 128
                 for i in range(0, len(pieces), 2)]
        feats = jnp.concatenate(pairs, axis=-1)              # (n_pad, 768)
        feats_ref[...] = feats

        # Fused FC head (wf1 rows were pre-permuted to kernel feature order).
        h1 = jnp.dot(feats, wf1_ref[...], preferred_element_type=f32) + bf1_ref[...]
        logits_ref[...] = (jnp.dot(h1, wf2_ref[...], preferred_element_type=f32)
                           + bf2_ref[...])

    inputs = (a0, kp["B1"], kp["bb1"], kp["B2"], kp["bb2"], kp["B3"], kp["bb3"],
              kp["wf1"], kp["bf1"], kp["wf2"], kp["bf2"])
    vmem = pl.BlockSpec(memory_space=pltpu.MemorySpace.VMEM)

    return pl.pallas_call(
        kernel,
        out_shape=(jax.ShapeDtypeStruct((n_pad, feat_cols), f32),
                   jax.ShapeDtypeStruct((n_pad, 2), f32)),
        in_specs=[vmem] * len(inputs),
        out_specs=(vmem, vmem),
        scratch_shapes=[
            pltpu.VMEM((H2 + 2, S, (W // 2) * C1), f32),   # conv2 padded input
            pltpu.VMEM((H4 + 2, S, (W // 4) * C2), f32),   # conv3 padded input
        ],
        compiler_params=pltpu.CompilerParams(
            vmem_limit_bytes=32 * 1024 * 1024),            # v7x guardrail (<= 64 MiB)
    )(*inputs)


def make_forward(params, *, depth=6, height=16, width=16):
    """Returns jitted forward(x) -> (pred (N,2), prob (N,2), fc_full (N,768))."""
    kp = prepare_params(params, depth=depth, height=height, width=width)
    D, H, W = depth, height, width

    @jax.jit
    def forward(x):
        N = x.shape[0]
        n_pad = ((N + 7) // 8) * 8
        S = D * n_pad
        # NCDHW -> (H+2, S, W): S row = d*n_pad + n (d-major, batch zero-padded
        # to 8 per depth); the H halo rows ride the same pad op.  Then the 3 kh
        # taps are replicated along lanes so conv1's LHS is read-ready.
        xt = jnp.transpose(x[:, 0], (2, 1, 0, 3))            # (H, D, N, W)
        xt = jnp.pad(xt, ((1, 1), (0, 0), (0, n_pad - N), (0, 0)))
        xp = xt.reshape(H + 2, S, W)
        a0 = jnp.concatenate([xp[kh:kh + H] for kh in range(3)], axis=-1)

        feats, logits = _fused_forward_call(a0, kp, n_pad)
        pred = logits[:N]
        prob = jax.nn.softmax(pred, axis=-1)
        fc_full = jnp.take(feats[:N], kp["k_of_p"], axis=1)  # kernel -> PyTorch order
        return pred, prob, fc_full

    return forward


# ---------------------------- params & reference ------------------------------

def init_params(key):
    ks = jax.random.split(key, 10)

    def u(k, shape, fan_in):
        bound = 1.0 / float(np.sqrt(fan_in))
        return jax.random.uniform(k, shape, jnp.float32, -bound, bound)

    w1 = u(ks[0], (3, 3, 1, 8), 1 * 9);    b1 = u(ks[1], (1, 8), 1 * 9)
    w2 = u(ks[2], (3, 3, 8, 16), 8 * 9);   b2 = u(ks[3], (1, 16), 8 * 9)
    w3 = u(ks[4], (3, 3, 16, 32), 16 * 9); b3 = u(ks[5], (1, 32), 16 * 9)
    wf1 = u(ks[6], (768, 192), 768);       bf1 = u(ks[7], (1, 192), 768)
    wf2 = u(ks[8], (192, 2), 192);         bf2 = u(ks[9], (1, 2), 192)
    return (w1, b1, w2, b2, w3, b3, wf1, bf1, wf2, bf2)


def reference_forward(x, params):
    """Pure-JAX reference with identical semantics (for a sanity check)."""
    (w1, b1, w2, b2, w3, b3, wf1, bf1, wf2, bf2) = params
    N, _, D, H, W = x.shape

    def block(a, w, b):
        out = jax.lax.conv_general_dilated(
            a, w, window_strides=(1, 1), padding=((1, 1), (1, 1)),
            dimension_numbers=("NHWC", "HWIO", "NHWC"))
        out = jnp.maximum(out + b.reshape(1, 1, 1, -1), 0.0)
        S_, Hh, Ww, C = out.shape
        return out.reshape(S_, Hh // 2, 2, Ww // 2, 2, C).mean(axis=(2, 4))

    a = x[:, 0].reshape(N * D, H, W, 1)
    a = block(a, w1, b1)
    a = block(a, w2, b2)
    a = block(a, w3, b3)
    fc_full = jnp.transpose(a.reshape(N, D, H // 8, W // 8, 32),
                            (0, 4, 1, 2, 3)).reshape(N, -1)
    h = fc_full @ wf1 + bf1
    logits = h @ wf2 + bf2
    return logits, jax.nn.softmax(logits, axis=-1), fc_full


# ------------------------------------ main ------------------------------------

if __name__ == "__main__":
    key = jax.random.PRNGKey(0)
    kx, kparam = jax.random.split(key)

    # 768 fc features = 32 * D * (H/8) * (W/8)  =>  D=6, H=W=16.
    N, D, H, W = 2, 6, 16, 16
    x = jax.random.normal(kx, (N, 1, D, H, W), dtype=jnp.float32)
    params = init_params(kparam)

    forward = make_forward(params, depth=D, height=H, width=W)
    pred, prob, fc_full = forward(x)
    jax.block_until_ready((pred, prob, fc_full))

    ref_pred, ref_prob, ref_fc = reference_forward(x, params)

    def _close(a, b, tol=1e-4):
        a = np.asarray(a); b = np.asarray(b)
        return np.max(np.abs(a - b)) <= tol * max(float(np.max(np.abs(b))), 1.0)

    assert pred.shape == (N, 2) and prob.shape == (N, 2) and fc_full.shape == (N, 768)
    assert _close(fc_full, ref_fc), "conv-stack mismatch"
    assert _close(pred, ref_pred), "fc logits mismatch"
    assert _close(prob, ref_prob), "softmax mismatch"

    print("KERNEL_OK")
</pallas_src>

<mosaic_0001>
module attributes {stable_mosaic.version = 11 : i64} {
  func.func @kernel(%arg0: memref<16x48x48xf32, #tpu.memory_space<vmem>>, %arg1: memref<48x128xf32, #tpu.memory_space<vmem>>, %arg2: memref<1x128xf32, #tpu.memory_space<vmem>>, %arg3: memref<192x128xf32, #tpu.memory_space<vmem>>, %arg4: memref<1x128xf32, #tpu.memory_space<vmem>>, %arg5: memref<192x128xf32, #tpu.memory_space<vmem>>, %arg6: memref<1x128xf32, #tpu.memory_space<vmem>>, %arg7: memref<768x192xf32, #tpu.memory_space<vmem>>, %arg8: memref<1x192xf32, #tpu.memory_space<vmem>>, %arg9: memref<192x2xf32, #tpu.memory_space<vmem>>, %arg10: memref<1x2xf32, #tpu.memory_space<vmem>>, %arg11: memref<8x768xf32, #tpu.memory_space<vmem>>, %arg12: memref<8x2xf32, #tpu.memory_space<vmem>>, %arg13: memref<10x48x64xf32, #tpu.memory_space<vmem>>, %arg14: memref<6x48x64xf32, #tpu.memory_space<vmem>>) attributes {dimension_semantics = [], scalar_prefetch = 0 : i64, scratch_operands = 2 : i64, tpu.core_type = #tpu.core_type<tc>} {
    %cst = arith.constant 0.000000e+00 : f32
    %0 = vector.broadcast %cst : f32 to vector<1x48x64xf32>
    %cst_0 = arith.constant 0.000000e+00 : f32
    %1 = vector.broadcast %cst_0 : f32 to vector<1x48x64xf32>
    %c0 = arith.constant 0 : index
    %c0_1 = arith.constant 0 : index
    %c0_2 = arith.constant 0 : index
    %2 = vector.load %arg13[%c0, %c0_1, %c0_2] : memref<10x48x64xf32, #tpu.memory_space<vmem>>, vector<1x48x64xf32>
    tpu.vector_store %arg13[%c0, %c0_1, %c0_2], %0 {strides = array<i32>} : memref<10x48x64xf32, #tpu.memory_space<vmem>>, vector<1x48x64xf32>,
    %c9 = arith.constant 9 : index
    %c0_3 = arith.constant 0 : index
    %c0_4 = arith.constant 0 : index
    %3 = vector.load %arg13[%c9, %c0_3, %c0_4] : memref<10x48x64xf32, #tpu.memory_space<vmem>>, vector<1x48x64xf32>
    tpu.vector_store %arg13[%c9, %c0_3, %c0_4], %0 {strides = array<i32>} : memref<10x48x64xf32, #tpu.memory_space<vmem>>, vector<1x48x64xf32>,
    %c0_5 = arith.constant 0 : index
    %c0_6 = arith.constant 0 : index
    %c0_7 = arith.constant 0 : index
    %4 = vector.load %arg14[%c0_5, %c0_6, %c0_7] : memref<6x48x64xf32, #tpu.memory_space<vmem>>, vector<1x48x64xf32>
    tpu.vector_store %arg14[%c0_5, %c0_6, %c0_7], %1 {strides = array<i32>} : memref<6x48x64xf32, #tpu.memory_space<vmem>>, vector<1x48x64xf32>,
    %c5 = arith.constant 5 : index
    %c0_8 = arith.constant 0 : index
    %c0_9 = arith.constant 0 : index
    %5 = vector.load %arg14[%c5, %c0_8, %c0_9] : memref<6x48x64xf32, #tpu.memory_space<vmem>>, vector<1x48x64xf32>
    tpu.vector_store %arg14[%c5, %c0_8, %c0_9], %1 {strides = array<i32>} : memref<6x48x64xf32, #tpu.memory_space<vmem>>, vector<1x48x64xf32>,
    %c0_10 = arith.constant 0 : index
    %c0_11 = arith.constant 0 : index
    %c0_12 = arith.constant 0 : index
    %6 = vector.load %arg0[%c0_10, %c0_11, %c0_12] : memref<16x48x48xf32, #tpu.memory_space<vmem>>, vector<2x48x48xf32>
    %7 = vector.shape_cast %6 : vector<2x48x48xf32> to vector<96x48xf32>
    %c0_13 = arith.constant 0 : index
    %c0_14 = arith.constant 0 : index
    %8 = vector.load %arg1[%c0_13, %c0_14] : memref<48x128xf32, #tpu.memory_space<vmem>>, vector<48x128xf32>
    %cst_15 = arith.constant dense<0.000000e+00> : vector<96x128xf32>
    %9 = tpu.matmul %7, %8, %cst_15 {dimension_numbers = #tpu.dot_dimension_numbers<[1], [0], [0], [1], [0, 0, 1, 1], [], []>} : vector<96x48xf32>, vector<48x128xf32>, vector<96x128xf32> -> vector<96x128xf32>
    %c0_16 = arith.constant 0 : index
    %c0_17 = arith.constant 0 : index
    %10 = vector.load %arg2[%c0_16, %c0_17] : memref<1x128xf32, #tpu.memory_space<vmem>>, vector<1x128xf32>
    %11 = vector.broadcast %10 : vector<1x128xf32> to vector<96x128xf32>
    %12 = arith.addf %9, %11 : vector<96x128xf32>
    %cst_18 = arith.constant 0.000000e+00 : f32
    %13 = vector.broadcast %cst_18 : f32 to vector<96x128xf32>
    %14 = arith.maximumf %12, %13 : vector<96x128xf32>
    %15 = vector.shape_cast %14 : vector<96x128xf32> to vector<1x2x48x128xf32>
    %16 = vector.extract_strided_slice %15 {offsets = [0, 0, 0, 0], sizes = [1, 1, 48, 128], strides = [1, 1, 1, 1]} : vector<1x2x48x128xf32> to vector<1x1x48x128xf32>
    %17 = vector.shape_cast %16 : vector<1x1x48x128xf32> to vector<1x48x128xf32>
    %18 = vector.extract_strided_slice %15 {offsets = [0, 1, 0, 0], sizes = [1, 1, 48, 128], strides = [1, 1, 1, 1]} : vector<1x2x48x128xf32> to vector<1x1x48x128xf32>
    %19 = vector.shape_cast %18 : vector<1x1x48x128xf32> to vector<1x48x128xf32>
    %20 = arith.addf %17, %19 : vector<1x48x128xf32>
    %21 = vector.extract_strided_slice %20 {offsets = [0, 0, 0], sizes = [1, 48, 64], strides = [1, 1, 1]} : vector<1x48x128xf32> to vector<1x48x64xf32>
    %22 = vector.extract_strided_slice %20 {offsets = [0, 0, 64], sizes = [1, 48, 64], strides = [1, 1, 1]} : vector<1x48x128xf32> to vector<1x48x64xf32>
    %23 = arith.addf %21, %22 : vector<1x48x64xf32>
    %cst_19 = arith.constant 2.500000e-01 : f32
    %24 = vector.broadcast %cst_19 : f32 to vector<1x48x64xf32>
    %25 = arith.mulf %24, %23 : vector<1x48x64xf32>
    %c1 = arith.constant 1 : index
    %c0_20 = arith.constant 0 : index
    %c0_21 = arith.constant 0 : index
    %26 = vector.load %arg13[%c1, %c0_20, %c0_21] : memref<10x48x64xf32, #tpu.memory_space<vmem>>, vector<1x48x64xf32>
    tpu.vector_store %arg13[%c1, %c0_20, %c0_21], %25 {strides = array<i32>} : memref<10x48x64xf32, #tpu.memory_space<vmem>>, vector<1x48x64xf32>,
    %c2 = arith.constant 2 : index
    %c0_22 = arith.constant 0 : index
    %c0_23 = arith.constant 0 : index
    %27 = vector.load %arg0[%c2, %c0_22, %c0_23] : memref<16x48x48xf32, #tpu.memory_space<vmem>>, vector<2x48x48xf32>
    %28 = vector.shape_cast %27 : vector<2x48x48xf32> to vector<96x48xf32>
    %c0_24 = arith.constant 0 : index
    %c0_25 = arith.constant 0 : index
    %29 = vector.load %arg1[%c0_24, %c0_25] : memref<48x128xf32, #tpu.memory_space<vmem>>, vector<48x128xf32>
    %cst_26 = arith.constant dense<0.000000e+00> : vector<96x128xf32>
    %30 = tpu.matmul %28, %29, %cst_26 {dimension_numbers = #tpu.dot_dimension_numbers<[1], [0], [0], [1], [0, 0, 1, 1], [], []>} : vector<96x48xf32>, vector<48x128xf32>, vector<96x128xf32> -> vector<96x128xf32>
    %c0_27 = arith.constant 0 : index
    %c0_28 = arith.constant 0 : index
    %31 = vector.load %arg2[%c0_27, %c0_28] : memref<1x128xf32, #tpu.memory_space<vmem>>, vector<1x128xf32>
    %32 = vector.broadcast %31 : vector<1x128xf32> to vector<96x128xf32>
    %33 = arith.addf %30, %32 : vector<96x128xf32>
    %cst_29 = arith.constant 0.000000e+00 : f32
    %34 = vector.broadcast %cst_29 : f32 to vector<96x128xf32>
    %35 = arith.maximumf %33, %34 : vector<96x128xf32>
    %36 = vector.shape_cast %35 : vector<96x128xf32> to vector<1x2x48x128xf32>
    %37 = vector.extract_strided_slice %36 {offsets = [0, 0, 0, 0], sizes = [1, 1, 48, 128], strides = [1, 1, 1, 1]} : vector<1x2x48x128xf32> to vector<1x1x48x128xf32>
    %38 = vector.shape_cast %37 : vector<1x1x48x128xf32> to vector<1x48x128xf32>
    %39 = vector.extract_strided_slice %36 {offsets = [0, 1, 0, 0], sizes = [1, 1, 48, 128], strides = [1, 1, 1, 1]} : vector<1x2x48x128xf32> to vector<1x1x48x128xf32>
    %40 = vector.shape_cast %39 : vector<1x1x48x128xf32> to vector<1x48x128xf32>
    %41 = arith.addf %38, %40 : vector<1x48x128xf32>
    %42 = vector.extract_strided_slice %41 {offsets = [0, 0, 0], sizes = [1, 48, 64], strides = [1, 1, 1]} : vector<1x48x128xf32> to vector<1x48x64xf32>
    %43 = vector.extract_strided_slice %41 {offsets = [0, 0, 64], sizes = [1, 48, 64], strides = [1, 1, 1]} : vector<1x48x128xf32> to vector<1x48x64xf32>
    %44 = arith.addf %42, %43 : vector<1x48x64xf32>
    %cst_30 = arith.constant 2.500000e-01 : f32
    %45 = vector.broadcast %cst_30 : f32 to vector<1x48x64xf32>
    %46 = arith.mulf %45, %44 : vector<1x48x64xf32>
    %c2_31 = arith.constant 2 : index
    %c0_32 = arith.constant 0 : index
    %c0_33 = arith.constant 0 : index
    %47 = vector.load %arg13[%c2_31, %c0_32, %c0_33] : memref<10x48x64xf32, #tpu.memory_space<vmem>>, vector<1x48x64xf32>
    tpu.vector_store %arg13[%c2_31, %c0_32, %c0_33], %46 {strides = array<i32>} : memref<10x48x64xf32, #tpu.memory_space<vmem>>, vector<1x48x64xf32>,
    %c4 = arith.constant 4 : index
    %c0_34 = arith.constant 0 : index
    %c0_35 = arith.constant 0 : index
    %48 = vector.load %arg0[%c4, %c0_34, %c0_35] : memref<16x48x48xf32, #tpu.memory_space<vmem>>, vector<2x48x48xf32>
    %49 = vector.shape_cast %48 : vector<2x48x48xf32> to vector<96x48xf32>
    %c0_36 = arith.constant 0 : index
    %c0_37 = arith.constant 0 : index
    %50 = vector.load %arg1[%c0_36, %c0_37] : memref<48x128xf32, #tpu.memory_space<vmem>>, vector<48x128xf32>
    %cst_38 = arith.constant dense<0.000000e+00> : vector<96x128xf32>
    %51 = tpu.matmul %49, %50, %cst_38 {dimension_numbers = #tpu.dot_dimension_numbers<[1], [0], [0], [1], [0, 0, 1, 1], [], []>} : vector<96x48xf32>, vector<48x128xf32>, vector<96x128xf32> -> vector<96x128xf32>
    %c0_39 = arith.constant 0 : index
    %c0_40 = arith.constant 0 : index
    %52 = vector.load %arg2[%c0_39, %c0_40] : memref<1x128xf32, #tpu.memory_space<vmem>>, vector<1x128xf32>
    %53 = vector.broadcast %52 : vector<1x128xf32> to vector<96x128xf32>
    %54 = arith.addf %51, %53 : vector<96x128xf32>
    %cst_41 = arith.constant 0.000000e+00 : f32
    %55 = vector.broadcast %cst_41 : f32 to vector<96x128xf32>
    %56 = arith.maximumf %54, %55 : vector<96x128xf32>
    %57 = vector.shape_cast %56 : vector<96x128xf32> to vector<1x2x48x128xf32>
    %58 = vector.extract_strided_slice %57 {offsets = [0, 0, 0, 0], sizes = [1, 1, 48, 128], strides = [1, 1, 1, 1]} : vector<1x2x48x128xf32> to vector<1x1x48x128xf32>
    %59 = vector.shape_cast %58 : vector<1x1x48x128xf32> to vector<1x48x128xf32>
    %60 = vector.extract_strided_slice %57 {offsets = [0, 1, 0, 0], sizes = [1, 1, 48, 128], strides = [1, 1, 1, 1]} : vector<1x2x48x128xf32> to vector<1x1x48x128xf32>
    %61 = vector.shape_cast %60 : vector<1x1x48x128xf32> to vector<1x48x128xf32>
    %62 = arith.addf %59, %61 : vector<1x48x128xf32>
    %63 = vector.extract_strided_slice %62 {offsets = [0, 0, 0], sizes = [1, 48, 64], strides = [1, 1, 1]} : vector<1x48x128xf32> to vector<1x48x64xf32>
    %64 = vector.extract_strided_slice %62 {offsets = [0, 0, 64], sizes = [1, 48, 64], strides = [1, 1, 1]} : vector<1x48x128xf32> to vector<1x48x64xf32>
    %65 = arith.addf %63, %64 : vector<1x48x64xf32>
    %cst_42 = arith.constant 2.500000e-01 : f32
    %66 = vector.broadcast %cst_42 : f32 to vector<1x48x64xf32>
    %67 = arith.mulf %66, %65 : vector<1x48x64xf32>
    %c3 = arith.constant 3 : index
    %c0_43 = arith.constant 0 : index
    %c0_44 = arith.constant 0 : index
    %68 = vector.load %arg13[%c3, %c0_43, %c0_44] : memref<10x48x64xf32, #tpu.memory_space<vmem>>, vector<1x48x64xf32>
    tpu.vector_store %arg13[%c3, %c0_43, %c0_44], %67 {strides = array<i32>} : memref<10x48x64xf32, #tpu.memory_space<vmem>>, vector<1x48x64xf32>,
    %c6 = arith.constant 6 : index
    %c0_45 = arith.constant 0 : index
    %c0_46 = arith.constant 0 : index
    %69 = vector.load %arg0[%c6, %c0_45, %c0_46] : memref<16x48x48xf32, #tpu.memory_space<vmem>>, vector<2x48x48xf32>
    %70 = vector.shape_cast %69 : vector<2x48x48xf32> to vector<96x48xf32>
    %c0_47 = arith.constant 0 : index
    %c0_48 = arith.constant 0 : index
    %71 = vector.load %arg1[%c0_47, %c0_48] : memref<48x128xf32, #tpu.memory_space<vmem>>, vector<48x128xf32>
    %cst_49 = arith.constant dense<0.000000e+00> : vector<96x128xf32>
    %72 = tpu.matmul %70, %71, %cst_49 {dimension_numbers = #tpu.dot_dimension_numbers<[1], [0], [0], [1], [0, 0, 1, 1], [], []>} : vector<96x48xf32>, vector<48x128xf32>, vector<96x128xf32> -> vector<96x128xf32>
    %c0_50 = arith.constant 0 : index
    %c0_51 = arith.constant 0 : index
    %73 = vector.load %arg2[%c0_50, %c0_51] : memref<1x128xf32, #tpu.memory_space<vmem>>, vector<1x128xf32>
    %74 = vector.broadcast %73 : vector<1x128xf32> to vector<96x128xf32>
    %75 = arith.addf %72, %74 : vector<96x128xf32>
    %cst_52 = arith.constant 0.000000e+00 : f32
    %76 = vector.broadcast %cst_52 : f32 to vector<96x128xf32>
    %77 = arith.maximumf %75, %76 : vector<96x128xf32>
    %78 = vector.shape_cast %77 : vector<96x128xf32> to vector<1x2x48x128xf32>
    %79 = vector.extract_strided_slice %78 {offsets = [0, 0, 0, 0], sizes = [1, 1, 48, 128], strides = [1, 1, 1, 1]} : vector<1x2x48x128xf32> to vector<1x1x48x128xf32>
    %80 = vector.shape_cast %79 : vector<1x1x48x128xf32> to vector<1x48x128xf32>
    %81 = vector.extract_strided_slice %78 {offsets = [0, 1, 0, 0], sizes = [1, 1, 48, 128], strides = [1, 1, 1, 1]} : vector<1x2x48x128xf32> to vector<1x1x48x128xf32>
    %82 = vector.shape_cast %81 : vector<1x1x48x128xf32> to vector<1x48x128xf32>
    %83 = arith.addf %80, %82 : vector<1x48x128xf32>
    %84 = vector.extract_strided_slice %83 {offsets = [0, 0, 0], sizes = [1, 48, 64], strides = [1, 1, 1]} : vector<1x48x128xf32> to vector<1x48x64xf32>
    %85 = vector.extract_strided_slice %83 {offsets = [0, 0, 64], sizes = [1, 48, 64], strides = [1, 1, 1]} : vector<1x48x128xf32> to vector<1x48x64xf32>
    %86 = arith.addf %84, %85 : vector<1x48x64xf32>
    %cst_53 = arith.constant 2.500000e-01 : f32
    %87 = vector.broadcast %cst_53 : f32 to vector<1x48x64xf32>
    %88 = arith.mulf %87, %86 : vector<1x48x64xf32>
    %c4_54 = arith.constant 4 : index
    %c0_55 = arith.constant 0 : index
    %c0_56 = arith.constant 0 : index
    %89 = vector.load %arg13[%c4_54, %c0_55, %c0_56] : memref<10x48x64xf32, #tpu.memory_space<vmem>>, vector<1x48x64xf32>
    tpu.vector_store %arg13[%c4_54, %c0_55, %c0_56], %88 {strides = array<i32>} : memref<10x48x64xf32, #tpu.memory_space<vmem>>, vector<1x48x64xf32>,
    %c8 = arith.constant 8 : index
    %c0_57 = arith.constant 0 : index
    %c0_58 = arith.constant 0 : index
    %90 = vector.load %arg0[%c8, %c0_57, %c0_58] : memref<16x48x48xf32, #tpu.memory_space<vmem>>, vector<2x48x48xf32>
    %91 = vector.shape_cast %90 : vector<2x48x48xf32> to vector<96x48xf32>
    %c0_59 = arith.constant 0 : index
    %c0_60 = arith.constant 0 : index
    %92 = vector.load %arg1[%c0_59, %c0_60] : memref<48x128xf32, #tpu.memory_space<vmem>>, vector<48x128xf32>
    %cst_61 = arith.constant dense<0.000000e+00> : vector<96x128xf32>
    %93 = tpu.matmul %91, %92, %cst_61 {dimension_numbers = #tpu.dot_dimension_numbers<[1], [0], [0], [1], [0, 0, 1, 1], [], []>} : vector<96x48xf32>, vector<48x128xf32>, vector<96x128xf32> -> vector<96x128xf32>
    %c0_62 = arith.constant 0 : index
    %c0_63 = arith.constant 0 : index
    %94 = vector.load %arg2[%c0_62, %c0_63] : memref<1x128xf32, #tpu.memory_space<vmem>>, vector<1x128xf32>
    %95 = vector.broadcast %94 : vector<1x128xf32> to vector<96x128xf32>
    %96 = arith.addf %93, %95 : vector<96x128xf32>
    %cst_64 = arith.constant 0.000000e+00 : f32
    %97 = vector.broadcast %cst_64 : f32 to vector<96x128xf32>
    %98 = arith.maximumf %96, %97 : vector<96x128xf32>
    %99 = vector.shape_cast %98 : vector<96x128xf32> to vector<1x2x48x128xf32>
    %100 = vector.extract_strided_slice %99 {offsets = [0, 0, 0, 0], sizes = [1, 1, 48, 128], strides = [1, 1, 1, 1]} : vector<1x2x48x128xf32> to vector<1x1x48x128xf32>
    %101 = vector.shape_cast %100 : vector<1x1x48x128xf32> to vector<1x48x128xf32>
    %102 = vector.extract_strided_slice %99 {offsets = [0, 1, 0, 0], sizes = [1, 1, 48, 128], strides = [1, 1, 1, 1]} : vector<1x2x48x128xf32> to vector<1x1x48x128xf32>
    %103 = vector.shape_cast %102 : vector<1x1x48x128xf32> to vector<1x48x128xf32>
    %104 = arith.addf %101, %103 : vector<1x48x128xf32>
    %105 = vector.extract_strided_slice %104 {offsets = [0, 0, 0], sizes = [1, 48, 64], strides = [1, 1, 1]} : vector<1x48x128xf32> to vector<1x48x64xf32>
    %106 = vector.extract_strided_slice %104 {offsets = [0, 0, 64], sizes = [1, 48, 64], strides = [1, 1, 1]} : vector<1x48x128xf32> to vector<1x48x64xf32>
    %107 = arith.addf %105, %106 : vector<1x48x64xf32>
    %cst_65 = arith.constant 2.500000e-01 : f32
    %108 = vector.broadcast %cst_65 : f32 to vector<1x48x64xf32>
    %109 = arith.mulf %108, %107 : vector<1x48x64xf32>
    %c5_66 = arith.constant 5 : index
    %c0_67 = arith.constant 0 : index
    %c0_68 = arith.constant 0 : index
    %110 = vector.load %arg13[%c5_66, %c0_67, %c0_68] : memref<10x48x64xf32, #tpu.memory_space<vmem>>, vector<1x48x64xf32>
    tpu.vector_store %arg13[%c5_66, %c0_67, %c0_68], %109 {strides = array<i32>} : memref<10x48x64xf32, #tpu.memory_space<vmem>>, vector<1x48x64xf32>,
    %c10 = arith.constant 10 : index
    %c0_69 = arith.constant 0 : index
    %c0_70 = arith.constant 0 : index
    %111 = vector.load %arg0[%c10, %c0_69, %c0_70] : memref<16x48x48xf32, #tpu.memory_space<vmem>>, vector<2x48x48xf32>
    %112 = vector.shape_cast %111 : vector<2x48x48xf32> to vector<96x48xf32>
    %c0_71 = arith.constant 0 : index
    %c0_72 = arith.constant 0 : index
    %113 = vector.load %arg1[%c0_71, %c0_72] : memref<48x128xf32, #tpu.memory_space<vmem>>, vector<48x128xf32>
    %cst_73 = arith.constant dense<0.000000e+00> : vector<96x128xf32>
    %114 = tpu.matmul %112, %113, %cst_73 {dimension_numbers = #tpu.dot_dimension_numbers<[1], [0], [0], [1], [0, 0, 1, 1], [], []>} : vector<96x48xf32>, vector<48x128xf32>, vector<96x128xf32> -> vector<96x128xf32>
    %c0_74 = arith.constant 0 : index
    %c0_75 = arith.constant 0 : index
    %115 = vector.load %arg2[%c0_74, %c0_75] : memref<1x128xf32, #tpu.memory_space<vmem>>, vector<1x128xf32>
    %116 = vector.broadcast %115 : vector<1x128xf32> to vector<96x128xf32>
    %117 = arith.addf %114, %116 : vector<96x128xf32>
    %cst_76 = arith.constant 0.000000e+00 : f32
    %118 = vector.broadcast %cst_76 : f32 to vector<96x128xf32>
    %119 = arith.maximumf %117, %118 : vector<96x128xf32>
    %120 = vector.shape_cast %119 : vector<96x128xf32> to vector<1x2x48x128xf32>
    %121 = vector.extract_strided_slice %120 {offsets = [0, 0, 0, 0], sizes = [1, 1, 48, 128], strides = [1, 1, 1, 1]} : vector<1x2x48x128xf32> to vector<1x1x48x128xf32>
    %122 = vector.shape_cast %121 : vector<1x1x48x128xf32> to vector<1x48x128xf32>
    %123 = vector.extract_strided_slice %120 {offsets = [0, 1, 0, 0], sizes = [1, 1, 48, 128], strides = [1, 1, 1, 1]} : vector<1x2x48x128xf32> to vector<1x1x48x128xf32>
    %124 = vector.shape_cast %123 : vector<1x1x48x128xf32> to vector<1x48x128xf32>
    %125 = arith.addf %122, %124 : vector<1x48x128xf32>
    %126 = vector.extract_strided_slice %125 {offsets = [0, 0, 0], sizes = [1, 48, 64], strides = [1, 1, 1]} : vector<1x48x128xf32> to vector<1x48x64xf32>
    %127 = vector.extract_strided_slice %125 {offsets = [0, 0, 64], sizes = [1, 48, 64], strides = [1, 1, 1]} : vector<1x48x128xf32> to vector<1x48x64xf32>
    %128 = arith.addf %126, %127 : vector<1x48x64xf32>
    %cst_77 = arith.constant 2.500000e-01 : f32
    %129 = vector.broadcast %cst_77 : f32 to vector<1x48x64xf32>
    %130 = arith.mulf %129, %128 : vector<1x48x64xf32>
    %c6_78 = arith.constant 6 : index
    %c0_79 = arith.constant 0 : index
    %c0_80 = arith.constant 0 : index
    %131 = vector.load %arg13[%c6_78, %c0_79, %c0_80] : memref<10x48x64xf32, #tpu.memory_space<vmem>>, vector<1x48x64xf32>
    tpu.vector_store %arg13[%c6_78, %c0_79, %c0_80], %130 {strides = array<i32>} : memref<10x48x64xf32, #tpu.memory_space<vmem>>, vector<1x48x64xf32>,
    %c12 = arith.constant 12 : index
    %c0_81 = arith.constant 0 : index
    %c0_82 = arith.constant 0 : index
    %132 = vector.load %arg0[%c12, %c0_81, %c0_82] : memref<16x48x48xf32, #tpu.memory_space<vmem>>, vector<2x48x48xf32>
    %133 = vector.shape_cast %132 : vector<2x48x48xf32> to vector<96x48xf32>
    %c0_83 = arith.constant 0 : index
    %c0_84 = arith.constant 0 : index
    %134 = vector.load %arg1[%c0_83, %c0_84] : memref<48x128xf32, #tpu.memory_space<vmem>>, vector<48x128xf32>
    %cst_85 = arith.constant dense<0.000000e+00> : vector<96x128xf32>
    %135 = tpu.matmul %133, %134, %cst_85 {dimension_numbers = #tpu.dot_dimension_numbers<[1], [0], [0], [1], [0, 0, 1, 1], [], []>} : vector<96x48xf32>, vector<48x128xf32>, vector<96x128xf32> -> vector<96x128xf32>
    %c0_86 = arith.constant 0 : index
    %c0_87 = arith.constant 0 : index
    %136 = vector.load %arg2[%c0_86, %c0_87] : memref<1x128xf32, #tpu.memory_space<vmem>>, vector<1x128xf32>
    %137 = vector.broadcast %136 : vector<1x128xf32> to vector<96x128xf32>
    %138 = arith.addf %135, %137 : vector<96x128xf32>
    %cst_88 = arith.constant 0.000000e+00 : f32
    %139 = vector.broadcast %cst_88 : f32 to vector<96x128xf32>
    %140 = arith.maximumf %138, %139 : vector<96x128xf32>
    %141 = vector.shape_cast %140 : vector<96x128xf32> to vector<1x2x48x128xf32>
    %142 = vector.extract_strided_slice %141 {offsets = [0, 0, 0, 0], sizes = [1, 1, 48, 128], strides = [1, 1, 1, 1]} : vector<1x2x48x128xf32> to vector<1x1x48x128xf32>
    %143 = vector.shape_cast %142 : vector<1x1x48x128xf32> to vector<1x48x128xf32>
    %144 = vector.extract_strided_slice %141 {offsets = [0, 1, 0, 0], sizes = [1, 1, 48, 128], strides = [1, 1, 1, 1]} : vector<1x2x48x128xf32> to vector<1x1x48x128xf32>
    %145 = vector.shape_cast %144 : vector<1x1x48x128xf32> to vector<1x48x128xf32>
    %146 = arith.addf %143, %145 : vector<1x48x128xf32>
    %147 = vector.extract_strided_slice %146 {offsets = [0, 0, 0], sizes = [1, 48, 64], strides = [1, 1, 1]} : vector<1x48x128xf32> to vector<1x48x64xf32>
    %148 = vector.extract_strided_slice %146 {offsets = [0, 0, 64], sizes = [1, 48, 64], strides = [1, 1, 1]} : vector<1x48x128xf32> to vector<1x48x64xf32>
    %149 = arith.addf %147, %148 : vector<1x48x64xf32>
    %cst_89 = arith.constant 2.500000e-01 : f32
    %150 = vector.broadcast %cst_89 : f32 to vector<1x48x64xf32>
    %151 = arith.mulf %150, %149 : vector<1x48x64xf32>
    %c7 = arith.constant 7 : index
    %c0_90 = arith.constant 0 : index
    %c0_91 = arith.constant 0 : index
    %152 = vector.load %arg13[%c7, %c0_90, %c0_91] : memref<10x48x64xf32, #tpu.memory_space<vmem>>, vector<1x48x64xf32>
    tpu.vector_store %arg13[%c7, %c0_90, %c0_91], %151 {strides = array<i32>} : memref<10x48x64xf32, #tpu.memory_space<vmem>>, vector<1x48x64xf32>,
    %c14 = arith.constant 14 : index
    %c0_92 = arith.constant 0 : index
    %c0_93 = arith.constant 0 : index
    %153 = vector.load %arg0[%c14, %c0_92, %c0_93] : memref<16x48x48xf32, #tpu.memory_space<vmem>>, vector<2x48x48xf32>
    %154 = vector.shape_cast %153 : vector<2x48x48xf32> to vector<96x48xf32>
    %c0_94 = arith.constant 0 : index
    %c0_95 = arith.constant 0 : index
    %155 = vector.load %arg1[%c0_94, %c0_95] : memref<48x128xf32, #tpu.memory_space<vmem>>, vector<48x128xf32>
    %cst_96 = arith.constant dense<0.000000e+00> : vector<96x128xf32>
    %156 = tpu.matmul %154, %155, %cst_96 {dimension_numbers = #tpu.dot_dimension_numbers<[1], [0], [0], [1], [0, 0, 1, 1], [], []>} : vector<96x48xf32>, vector<48x128xf32>, vector<96x128xf32> -> vector<96x128xf32>
    %c0_97 = arith.constant 0 : index
    %c0_98 = arith.constant 0 : index
    %157 = vector.load %arg2[%c0_97, %c0_98] : memref<1x128xf32, #tpu.memory_space<vmem>>, vector<1x128xf32>
    %158 = vector.broadcast %157 : vector<1x128xf32> to vector<96x128xf32>
    %159 = arith.addf %156, %158 : vector<96x128xf32>
    %cst_99 = arith.constant 0.000000e+00 : f32
    %160 = vector.broadcast %cst_99 : f32 to vector<96x128xf32>
    %161 = arith.maximumf %159, %160 : vector<96x128xf32>
    %162 = vector.shape_cast %161 : vector<96x128xf32> to vector<1x2x48x128xf32>
    %163 = vector.extract_strided_slice %162 {offsets = [0, 0, 0, 0], sizes = [1, 1, 48, 128], strides = [1, 1, 1, 1]} : vector<1x2x48x128xf32> to vector<1x1x48x128xf32>
    %164 = vector.shape_cast %163 : vector<1x1x48x128xf32> to vector<1x48x128xf32>
    %165 = vector.extract_strided_slice %162 {offsets = [0, 1, 0, 0], sizes = [1, 1, 48, 128], strides = [1, 1, 1, 1]} : vector<1x2x48x128xf32> to vector<1x1x48x128xf32>
    %166 = vector.shape_cast %165 : vector<1x1x48x128xf32> to vector<1x48x128xf32>
    %167 = arith.addf %164, %166 : vector<1x48x128xf32>
    %168 = vector.extract_strided_slice %167 {offsets = [0, 0, 0], sizes = [1, 48, 64], strides = [1, 1, 1]} : vector<1x48x128xf32> to vector<1x48x64xf32>
    %169 = vector.extract_strided_slice %167 {offsets = [0, 0, 64], sizes = [1, 48, 64], strides = [1, 1, 1]} : vector<1x48x128xf32> to vector<1x48x64xf32>
    %170 = arith.addf %168, %169 : vector<1x48x64xf32>
    %cst_100 = arith.constant 2.500000e-01 : f32
    %171 = vector.broadcast %cst_100 : f32 to vector<1x48x64xf32>
    %172 = arith.mulf %171, %170 : vector<1x48x64xf32>
    %c8_101 = arith.constant 8 : index
    %c0_102 = arith.constant 0 : index
    %c0_103 = arith.constant 0 : index
    %173 = vector.load %arg13[%c8_101, %c0_102, %c0_103] : memref<10x48x64xf32, #tpu.memory_space<vmem>>, vector<1x48x64xf32>
    tpu.vector_store %arg13[%c8_101, %c0_102, %c0_103], %172 {strides = array<i32>} : memref<10x48x64xf32, #tpu.memory_space<vmem>>, vector<1x48x64xf32>,
    %c0_104 = arith.constant 0 : index
    %c0_105 = arith.constant 0 : index
    %c0_106 = arith.constant 0 : index
    %174 = vector.load %arg13[%c0_104, %c0_105, %c0_106] : memref<10x48x64xf32, #tpu.memory_space<vmem>>, vector<4x48x64xf32>
    %175 = vector.extract_strided_slice %174 {offsets = [0, 0, 0], sizes = [2, 48, 64], strides = [1, 1, 1]} : vector<4x48x64xf32> to vector<2x48x64xf32>
    %176 = vector.extract_strided_slice %174 {offsets = [1, 0, 0], sizes = [2, 48, 64], strides = [1, 1, 1]} : vector<4x48x64xf32> to vector<2x48x64xf32>
    %177 = vector.extract_strided_slice %174 {offsets = [2, 0, 0], sizes = [2, 48, 64], strides = [1, 1, 1]} : vector<4x48x64xf32> to vector<2x48x64xf32>
    %178 = tpu.concatenate %175, %176, %177 in 2 : vector<2x48x64xf32>, vector<2x48x64xf32>, vector<2x48x64xf32> -> vector<2x48x192xf32>
    %179 = vector.shape_cast %178 : vector<2x48x192xf32> to vector<96x192xf32>
    %c0_107 = arith.constant 0 : index
    %c0_108 = arith.constant 0 : index
    %180 = vector.load %arg3[%c0_107, %c0_108] : memref<192x128xf32, #tpu.memory_space<vmem>>, vector<192x128xf32>
    %cst_109 = arith.constant dense<0.000000e+00> : vector<96x128xf32>
    %181 = tpu.matmul %179, %180, %cst_109 {dimension_numbers = #tpu.dot_dimension_numbers<[1], [0], [0], [1], [0, 0, 1, 1], [], []>} : vector<96x192xf32>, vector<192x128xf32>, vector<96x128xf32> -> vector<96x128xf32>
    %c0_110 = arith.constant 0 : index
    %c0_111 = arith.constant 0 : index
    %182 = vector.load %arg4[%c0_110, %c0_111] : memref<1x128xf32, #tpu.memory_space<vmem>>, vector<1x128xf32>
    %183 = vector.broadcast %182 : vector<1x128xf32> to vector<96x128xf32>
    %184 = arith.addf %181, %183 : vector<96x128xf32>
    %cst_112 = arith.constant 0.000000e+00 : f32
    %185 = vector.broadcast %cst_112 : f32 to vector<96x128xf32>
    %186 = arith.maximumf %184, %185 : vector<96x128xf32>
    %187 = vector.shape_cast %186 : vector<96x128xf32> to vector<1x2x48x128xf32>
    %188 = vector.extract_strided_slice %187 {offsets = [0, 0, 0, 0], sizes = [1, 1, 48, 128], strides = [1, 1, 1, 1]} : vector<1x2x48x128xf32> to vector<1x1x48x128xf32>
    %189 = vector.shape_cast %188 : vector<1x1x48x128xf32> to vector<1x48x128xf32>
    %190 = vector.extract_strided_slice %187 {offsets = [0, 1, 0, 0], sizes = [1, 1, 48, 128], strides = [1, 1, 1, 1]} : vector<1x2x48x128xf32> to vector<1x1x48x128xf32>
    %191 = vector.shape_cast %190 : vector<1x1x48x128xf32> to vector<1x48x128xf32>
    %192 = arith.addf %189, %191 : vector<1x48x128xf32>
    %193 = vector.extract_strided_slice %192 {offsets = [0, 0, 0], sizes = [1, 48, 64], strides = [1, 1, 1]} : vector<1x48x128xf32> to vector<1x48x64xf32>
    %194 = vector.extract_strided_slice %192 {offsets = [0, 0, 64], sizes = [1, 48, 64], strides = [1, 1, 1]} : vector<1x48x128xf32> to vector<1x48x64xf32>
    %195 = arith.addf %193, %194 : vector<1x48x64xf32>
    %cst_113 = arith.constant 2.500000e-01 : f32
    %196 = vector.broadcast %cst_113 : f32 to vector<1x48x64xf32>
    %197 = arith.mulf %196, %195 : vector<1x48x64xf32>
    %c1_114 = arith.constant 1 : index
    %c0_115 = arith.constant 0 : index
    %c0_116 = arith.constant 0 : index
    %198 = vector.load %arg14[%c1_114, %c0_115, %c0_116] : memref<6x48x64xf32, #tpu.memory_space<vmem>>, vector<1x48x64xf32>
    tpu.vector_store %arg14[%c1_114, %c0_115, %c0_116], %197 {strides = array<i32>} : memref<6x48x64xf32, #tpu.memory_space<vmem>>, vector<1x48x64xf32>,
    %c2_117 = arith.constant 2 : index
    %c0_118 = arith.constant 0 : index
    %c0_119 = arith.constant 0 : index
    %199 = vector.load %arg13[%c2_117, %c0_118, %c0_119] : memref<10x48x64xf32, #tpu.memory_space<vmem>>, vector<4x48x64xf32>
    %200 = vector.extract_strided_slice %199 {offsets = [0, 0, 0], sizes = [2, 48, 64], strides = [1, 1, 1]} : vector<4x48x64xf32> to vector<2x48x64xf32>
    %201 = vector.extract_strided_slice %199 {offsets = [1, 0, 0], sizes = [2, 48, 64], strides = [1, 1, 1]} : vector<4x48x64xf32> to vector<2x48x64xf32>
    %202 = vector.extract_strided_slice %199 {offsets = [2, 0, 0], sizes = [2, 48, 64], strides = [1, 1, 1]} : vector<4x48x64xf32> to vector<2x48x64xf32>
    %203 = tpu.concatenate %200, %201, %202 in 2 : vector<2x48x64xf32>, vector<2x48x64xf32>, vector<2x48x64xf32> -> vector<2x48x192xf32>
    %204 = vector.shape_cast %203 : vector<2x48x192xf32> to vector<96x192xf32>
    %c0_120 = arith.constant 0 : index
    %c0_121 = arith.constant 0 : index
    %205 = vector.load %arg3[%c0_120, %c0_121] : memref<192x128xf32, #tpu.memory_space<vmem>>, vector<192x128xf32>
    %cst_122 = arith.constant dense<0.000000e+00> : vector<96x128xf32>
    %206 = tpu.matmul %204, %205, %cst_122 {dimension_numbers = #tpu.dot_dimension_numbers<[1], [0], [0], [1], [0, 0, 1, 1], [], []>} : vector<96x192xf32>, vector<192x128xf32>, vector<96x128xf32> -> vector<96x128xf32>
    %c0_123 = arith.constant 0 : index
    %c0_124 = arith.constant 0 : index
    %207 = vector.load %arg4[%c0_123, %c0_124] : memref<1x128xf32, #tpu.memory_space<vmem>>, vector<1x128xf32>
    %208 = vector.broadcast %207 : vector<1x128xf32> to vector<96x128xf32>
    %209 = arith.addf %206, %208 : vector<96x128xf32>
    %cst_125 = arith.constant 0.000000e+00 : f32
    %210 = vector.broadcast %cst_125 : f32 to vector<96x128xf32>
    %211 = arith.maximumf %209, %210 : vector<96x128xf32>
    %212 = vector.shape_cast %211 : vector<96x128xf32> to vector<1x2x48x128xf32>
    %213 = vector.extract_strided_slice %212 {offsets = [0, 0, 0, 0], sizes = [1, 1, 48, 128], strides = [1, 1, 1, 1]} : vector<1x2x48x128xf32> to vector<1x1x48x128xf32>
    %214 = vector.shape_cast %213 : vector<1x1x48x128xf32> to vector<1x48x128xf32>
    %215 = vector.extract_strided_slice %212 {offsets = [0, 1, 0, 0], sizes = [1, 1, 48, 128], strides = [1, 1, 1, 1]} : vector<1x2x48x128xf32> to vector<1x1x48x128xf32>
    %216 = vector.shape_cast %215 : vector<1x1x48x128xf32> to vector<1x48x128xf32>
    %217 = arith.addf %214, %216 : vector<1x48x128xf32>
    %218 = vector.extract_strided_slice %217 {offsets = [0, 0, 0], sizes = [1, 48, 64], strides = [1, 1, 1]} : vector<1x48x128xf32> to vector<1x48x64xf32>
    %219 = vector.extract_strided_slice %217 {offsets = [0, 0, 64], sizes = [1, 48, 64], strides = [1, 1, 1]} : vector<1x48x128xf32> to vector<1x48x64xf32>
    %220 = arith.addf %218, %219 : vector<1x48x64xf32>
    %cst_126 = arith.constant 2.500000e-01 : f32
    %221 = vector.broadcast %cst_126 : f32 to vector<1x48x64xf32>
    %222 = arith.mulf %221, %220 : vector<1x48x64xf32>
    %c2_127 = arith.constant 2 : index
    %c0_128 = arith.constant 0 : index
    %c0_129 = arith.constant 0 : index
    %223 = vector.load %arg14[%c2_127, %c0_128, %c0_129] : memref<6x48x64xf32, #tpu.memory_space<vmem>>, vector<1x48x64xf32>
    tpu.vector_store %arg14[%c2_127, %c0_128, %c0_129], %222 {strides = array<i32>} : memref<6x48x64xf32, #tpu.memory_space<vmem>>, vector<1x48x64xf32>,
    %c4_130 = arith.constant 4 : index
    %c0_131 = arith.constant 0 : index
    %c0_132 = arith.constant 0 : index
    %224 = vector.load %arg13[%c4_130, %c0_131, %c0_132] : memref<10x48x64xf32, #tpu.memory_space<vmem>>, vector<4x48x64xf32>
    %225 = vector.extract_strided_slice %224 {offsets = [0, 0, 0], sizes = [2, 48, 64], strides = [1, 1, 1]} : vector<4x48x64xf32> to vector<2x48x64xf32>
    %226 = vector.extract_strided_slice %224 {offsets = [1, 0, 0], sizes = [2, 48, 64], strides = [1, 1, 1]} : vector<4x48x64xf32> to vector<2x48x64xf32>
    %227 = vector.extract_strided_slice %224 {offsets = [2, 0, 0], sizes = [2, 48, 64], strides = [1, 1, 1]} : vector<4x48x64xf32> to vector<2x48x64xf32>
    %228 = tpu.concatenate %225, %226, %227 in 2 : vector<2x48x64xf32>, vector<2x48x64xf32>, vector<2x48x64xf32> -> vector<2x48x192xf32>
    %229 = vector.shape_cast %228 : vector<2x48x192xf32> to vector<96x192xf32>
    %c0_133 = arith.constant 0 : index
    %c0_134 = arith.constant 0 : index
    %230 = vector.load %arg3[%c0_133, %c0_134] : memref<192x128xf32, #tpu.memory_space<vmem>>, vector<192x128xf32>
    %cst_135 = arith.constant dense<0.000000e+00> : vector<96x128xf32>
    %231 = tpu.matmul %229, %230, %cst_135 {dimension_numbers = #tpu.dot_dimension_numbers<[1], [0], [0], [1], [0, 0, 1, 1], [], []>} : vector<96x192xf32>, vector<192x128xf32>, vector<96x128xf32> -> vector<96x128xf32>
    %c0_136 = arith.constant 0 : index
    %c0_137 = arith.constant 0 : index
    %232 = vector.load %arg4[%c0_136, %c0_137] : memref<1x128xf32, #tpu.memory_space<vmem>>, vector<1x128xf32>
    %233 = vector.broadcast %232 : vector<1x128xf32> to vector<96x128xf32>
    %234 = arith.addf %231, %233 : vector<96x128xf32>
    %cst_138 = arith.constant 0.000000e+00 : f32
    %235 = vector.broadcast %cst_138 : f32 to vector<96x128xf32>
    %236 = arith.maximumf %234, %235 : vector<96x128xf32>
    %237 = vector.shape_cast %236 : vector<96x128xf32> to vector<1x2x48x128xf32>
    %238 = vector.extract_strided_slice %237 {offsets = [0, 0, 0, 0], sizes = [1, 1, 48, 128], strides = [1, 1, 1, 1]} : vector<1x2x48x128xf32> to vector<1x1x48x128xf32>
    %239 = vector.shape_cast %238 : vector<1x1x48x128xf32> to vector<1x48x128xf32>
    %240 = vector.extract_strided_slice %237 {offsets = [0, 1, 0, 0], sizes = [1, 1, 48, 128], strides = [1, 1, 1, 1]} : vector<1x2x48x128xf32> to vector<1x1x48x128xf32>
    %241 = vector.shape_cast %240 : vector<1x1x48x128xf32> to vector<1x48x128xf32>
    %242 = arith.addf %239, %241 : vector<1x48x128xf32>
    %243 = vector.extract_strided_slice %242 {offsets = [0, 0, 0], sizes = [1, 48, 64], strides = [1, 1, 1]} : vector<1x48x128xf32> to vector<1x48x64xf32>
    %244 = vector.extract_strided_slice %242 {offsets = [0, 0, 64], sizes = [1, 48, 64], strides = [1, 1, 1]} : vector<1x48x128xf32> to vector<1x48x64xf32>
    %245 = arith.addf %243, %244 : vector<1x48x64xf32>
    %cst_139 = arith.constant 2.500000e-01 : f32
    %246 = vector.broadcast %cst_139 : f32 to vector<1x48x64xf32>
    %247 = arith.mulf %246, %245 : vector<1x48x64xf32>
    %c3_140 = arith.constant 3 : index
    %c0_141 = arith.constant 0 : index
    %c0_142 = arith.constant 0 : index
    %248 = vector.load %arg14[%c3_140, %c0_141, %c0_142] : memref<6x48x64xf32, #tpu.memory_space<vmem>>, vector<1x48x64xf32>
    tpu.vector_store %arg14[%c3_140, %c0_141, %c0_142], %247 {strides = array<i32>} : memref<6x48x64xf32, #tpu.memory_space<vmem>>, vector<1x48x64xf32>,
    %c6_143 = arith.constant 6 : index
    %c0_144 = arith.constant 0 : index
    %c0_145 = arith.constant 0 : index
    %249 = vector.load %arg13[%c6_143, %c0_144, %c0_145] : memref<10x48x64xf32, #tpu.memory_space<vmem>>, vector<4x48x64xf32>
    %250 = vector.extract_strided_slice %249 {offsets = [0, 0, 0], sizes = [2, 48, 64], strides = [1, 1, 1]} : vector<4x48x64xf32> to vector<2x48x64xf32>
    %251 = vector.extract_strided_slice %249 {offsets = [1, 0, 0], sizes = [2, 48, 64], strides = [1, 1, 1]} : vector<4x48x64xf32> to vector<2x48x64xf32>
    %252 = vector.extract_strided_slice %249 {offsets = [2, 0, 0], sizes = [2, 48, 64], strides = [1, 1, 1]} : vector<4x48x64xf32> to vector<2x48x64xf32>
    %253 = tpu.concatenate %250, %251, %252 in 2 : vector<2x48x64xf32>, vector<2x48x64xf32>, vector<2x48x64xf32> -> vector<2x48x192xf32>
    %254 = vector.shape_cast %253 : vector<2x48x192xf32> to vector<96x192xf32>
    %c0_146 = arith.constant 0 : index
    %c0_147 = arith.constant 0 : index
    %255 = vector.load %arg3[%c0_146, %c0_147] : memref<192x128xf32, #tpu.memory_space<vmem>>, vector<192x128xf32>
    %cst_148 = arith.constant dense<0.000000e+00> : vector<96x128xf32>
    %256 = tpu.matmul %254, %255, %cst_148 {dimension_numbers = #tpu.dot_dimension_numbers<[1], [0], [0], [1], [0, 0, 1, 1], [], []>} : vector<96x192xf32>, vector<192x128xf32>, vector<96x128xf32> -> vector<96x128xf32>
    %c0_149 = arith.constant 0 : index
    %c0_150 = arith.constant 0 : index
    %257 = vector.load %arg4[%c0_149, %c0_150] : memref<1x128xf32, #tpu.memory_space<vmem>>, vector<1x128xf32>
    %258 = vector.broadcast %257 : vector<1x128xf32> to vector<96x128xf32>
    %259 = arith.addf %256, %258 : vector<96x128xf32>
    %cst_151 = arith.constant 0.000000e+00 : f32
    %260 = vector.broadcast %cst_151 : f32 to vector<96x128xf32>
    %261 = arith.maximumf %259, %260 : vector<96x128xf32>
    %262 = vector.shape_cast %261 : vector<96x128xf32> to vector<1x2x48x128xf32>
    %263 = vector.extract_strided_slice %262 {offsets = [0, 0, 0, 0], sizes = [1, 1, 48, 128], strides = [1, 1, 1, 1]} : vector<1x2x48x128xf32> to vector<1x1x48x128xf32>
    %264 = vector.shape_cast %263 : vector<1x1x48x128xf32> to vector<1x48x128xf32>
    %265 = vector.extract_strided_slice %262 {offsets = [0, 1, 0, 0], sizes = [1, 1, 48, 128], strides = [1, 1, 1, 1]} : vector<1x2x48x128xf32> to vector<1x1x48x128xf32>
    %266 = vector.shape_cast %265 : vector<1x1x48x128xf32> to vector<1x48x128xf32>
    %267 = arith.addf %264, %266 : vector<1x48x128xf32>
    %268 = vector.extract_strided_slice %267 {offsets = [0, 0, 0], sizes = [1, 48, 64], strides = [1, 1, 1]} : vector<1x48x128xf32> to vector<1x48x64xf32>
    %269 = vector.extract_strided_slice %267 {offsets = [0, 0, 64], sizes = [1, 48, 64], strides = [1, 1, 1]} : vector<1x48x128xf32> to vector<1x48x64xf32>
    %270 = arith.addf %268, %269 : vector<1x48x64xf32>
    %cst_152 = arith.constant 2.500000e-01 : f32
    %271 = vector.broadcast %cst_152 : f32 to vector<1x48x64xf32>
    %272 = arith.mulf %271, %270 : vector<1x48x64xf32>
    %c4_153 = arith.constant 4 : index
    %c0_154 = arith.constant 0 : index
    %c0_155 = arith.constant 0 : index
    %273 = vector.load %arg14[%c4_153, %c0_154, %c0_155] : memref<6x48x64xf32, #tpu.memory_space<vmem>>, vector<1x48x64xf32>
    tpu.vector_store %arg14[%c4_153, %c0_154, %c0_155], %272 {strides = array<i32>} : memref<6x48x64xf32, #tpu.memory_space<vmem>>, vector<1x48x64xf32>,
    %c0_156 = arith.constant 0 : index
    %c0_157 = arith.constant 0 : index
    %c0_158 = arith.constant 0 : index
    %274 = vector.load %arg14[%c0_156, %c0_157, %c0_158] : memref<6x48x64xf32, #tpu.memory_space<vmem>>, vector<4x48x64xf32>
    %275 = vector.extract_strided_slice %274 {offsets = [0, 0, 0], sizes = [2, 48, 64], strides = [1, 1, 1]} : vector<4x48x64xf32> to vector<2x48x64xf32>
    %276 = vector.extract_strided_slice %274 {offsets = [1, 0, 0], sizes = [2, 48, 64], strides = [1, 1, 1]} : vector<4x48x64xf32> to vector<2x48x64xf32>
    %277 = vector.extract_strided_slice %274 {offsets = [2, 0, 0], sizes = [2, 48, 64], strides = [1, 1, 1]} : vector<4x48x64xf32> to vector<2x48x64xf32>
    %278 = tpu.concatenate %275, %276, %277 in 2 : vector<2x48x64xf32>, vector<2x48x64xf32>, vector<2x48x64xf32> -> vector<2x48x192xf32>
    %279 = vector.shape_cast %278 : vector<2x48x192xf32> to vector<96x192xf32>
    %c0_159 = arith.constant 0 : index
    %c0_160 = arith.constant 0 : index
    %280 = vector.load %arg5[%c0_159, %c0_160] : memref<192x128xf32, #tpu.memory_space<vmem>>, vector<192x128xf32>
    %cst_161 = arith.constant dense<0.000000e+00> : vector<96x128xf32>
    %281 = tpu.matmul %279, %280, %cst_161 {dimension_numbers = #tpu.dot_dimension_numbers<[1], [0], [0], [1], [0, 0, 1, 1], [], []>} : vector<96x192xf32>, vector<192x128xf32>, vector<96x128xf32> -> vector<96x128xf32>
    %c0_162 = arith.constant 0 : index
    %c0_163 = arith.constant 0 : index
    %282 = vector.load %arg6[%c0_162, %c0_163] : memref<1x128xf32, #tpu.memory_space<vmem>>, vector<1x128xf32>
    %283 = vector.broadcast %282 : vector<1x128xf32> to vector<96x128xf32>
    %284 = arith.addf %281, %283 : vector<96x128xf32>
    %cst_164 = arith.constant 0.000000e+00 : f32
    %285 = vector.broadcast %cst_164 : f32 to vector<96x128xf32>
    %286 = arith.maximumf %284, %285 : vector<96x128xf32>
    %287 = vector.shape_cast %286 : vector<96x128xf32> to vector<1x2x48x128xf32>
    %288 = vector.extract_strided_slice %287 {offsets = [0, 0, 0, 0], sizes = [1, 1, 48, 128], strides = [1, 1, 1, 1]} : vector<1x2x48x128xf32> to vector<1x1x48x128xf32>
    %289 = vector.shape_cast %288 : vector<1x1x48x128xf32> to vector<1x48x128xf32>
    %290 = vector.extract_strided_slice %287 {offsets = [0, 1, 0, 0], sizes = [1, 1, 48, 128], strides = [1, 1, 1, 1]} : vector<1x2x48x128xf32> to vector<1x1x48x128xf32>
    %291 = vector.shape_cast %290 : vector<1x1x48x128xf32> to vector<1x48x128xf32>
    %292 = arith.addf %289, %291 : vector<1x48x128xf32>
    %293 = vector.extract_strided_slice %292 {offsets = [0, 0, 0], sizes = [1, 48, 64], strides = [1, 1, 1]} : vector<1x48x128xf32> to vector<1x48x64xf32>
    %294 = vector.extract_strided_slice %292 {offsets = [0, 0, 64], sizes = [1, 48, 64], strides = [1, 1, 1]} : vector<1x48x128xf32> to vector<1x48x64xf32>
    %295 = arith.addf %293, %294 : vector<1x48x64xf32>
    %cst_165 = arith.constant 2.500000e-01 : f32
    %296 = vector.broadcast %cst_165 : f32 to vector<1x48x64xf32>
    %297 = arith.mulf %296, %295 : vector<1x48x64xf32>
    %298 = vector.shape_cast %297 : vector<1x48x64xf32> to vector<48x64xf32>
    %c2_166 = arith.constant 2 : index
    %c0_167 = arith.constant 0 : index
    %c0_168 = arith.constant 0 : index
    %299 = vector.load %arg14[%c2_166, %c0_167, %c0_168] : memref<6x48x64xf32, #tpu.memory_space<vmem>>, vector<4x48x64xf32>
    %300 = vector.extract_strided_slice %299 {offsets = [0, 0, 0], sizes = [2, 48, 64], strides = [1, 1, 1]} : vector<4x48x64xf32> to vector<2x48x64xf32>
    %301 = vector.extract_strided_slice %299 {offsets = [1, 0, 0], sizes = [2, 48, 64], strides = [1, 1, 1]} : vector<4x48x64xf32> to vector<2x48x64xf32>
    %302 = vector.extract_strided_slice %299 {offsets = [2, 0, 0], sizes = [2, 48, 64], strides = [1, 1, 1]} : vector<4x48x64xf32> to vector<2x48x64xf32>
    %303 = tpu.concatenate %300, %301, %302 in 2 : vector<2x48x64xf32>, vector<2x48x64xf32>, vector<2x48x64xf32> -> vector<2x48x192xf32>
    %304 = vector.shape_cast %303 : vector<2x48x192xf32> to vector<96x192xf32>
    %c0_169 = arith.constant 0 : index
    %c0_170 = arith.constant 0 : index
    %305 = vector.load %arg5[%c0_169, %c0_170] : memref<192x128xf32, #tpu.memory_space<vmem>>, vector<192x128xf32>
    %cst_171 = arith.constant dense<0.000000e+00> : vector<96x128xf32>
    %306 = tpu.matmul %304, %305, %cst_171 {dimension_numbers = #tpu.dot_dimension_numbers<[1], [0], [0], [1], [0, 0, 1, 1], [], []>} : vector<96x192xf32>, vector<192x128xf32>, vector<96x128xf32> -> vector<96x128xf32>
    %c0_172 = arith.constant 0 : index
    %c0_173 = arith.constant 0 : index
    %307 = vector.load %arg6[%c0_172, %c0_173] : memref<1x128xf32, #tpu.memory_space<vmem>>, vector<1x128xf32>
    %308 = vector.broadcast %307 : vector<1x128xf32> to vector<96x128xf32>
    %309 = arith.addf %306, %308 : vector<96x128xf32>
    %cst_174 = arith.constant 0.000000e+00 : f32
    %310 = vector.broadcast %cst_174 : f32 to vector<96x128xf32>
    %311 = arith.maximumf %309, %310 : vector<96x128xf32>
    %312 = vector.shape_cast %311 : vector<96x128xf32> to vector<1x2x48x128xf32>
    %313 = vector.extract_strided_slice %312 {offsets = [0, 0, 0, 0], sizes = [1, 1, 48, 128], strides = [1, 1, 1, 1]} : vector<1x2x48x128xf32> to vector<1x1x48x128xf32>
    %314 = vector.shape_cast %313 : vector<1x1x48x128xf32> to vector<1x48x128xf32>
    %315 = vector.extract_strided_slice %312 {offsets = [0, 1, 0, 0], sizes = [1, 1, 48, 128], strides = [1, 1, 1, 1]} : vector<1x2x48x128xf32> to vector<1x1x48x128xf32>
    %316 = vector.shape_cast %315 : vector<1x1x48x128xf32> to vector<1x48x128xf32>
    %317 = arith.addf %314, %316 : vector<1x48x128xf32>
    %318 = vector.extract_strided_slice %317 {offsets = [0, 0, 0], sizes = [1, 48, 64], strides = [1, 1, 1]} : vector<1x48x128xf32> to vector<1x48x64xf32>
    %319 = vector.extract_strided_slice %317 {offsets = [0, 0, 64], sizes = [1, 48, 64], strides = [1, 1, 1]} : vector<1x48x128xf32> to vector<1x48x64xf32>
    %320 = arith.addf %318, %319 : vector<1x48x64xf32>
    %cst_175 = arith.constant 2.500000e-01 : f32
    %321 = vector.broadcast %cst_175 : f32 to vector<1x48x64xf32>
    %322 = arith.mulf %321, %320 : vector<1x48x64xf32>
    %323 = vector.shape_cast %322 : vector<1x48x64xf32> to vector<48x64xf32>
    %324 = vector.extract_strided_slice %298 {offsets = [0, 0], sizes = [8, 64], strides = [1, 1]} : vector<48x64xf32> to vector<8x64xf32>
    %325 = vector.extract_strided_slice %298 {offsets = [8, 0], sizes = [8, 64], strides = [1, 1]} : vector<48x64xf32> to vector<8x64xf32>
    %326 = vector.extract_strided_slice %298 {offsets = [16, 0], sizes = [8, 64], strides = [1, 1]} : vector<48x64xf32> to vector<8x64xf32>
    %327 = vector.extract_strided_slice %298 {offsets = [24, 0], sizes = [8, 64], strides = [1, 1]} : vector<48x64xf32> to vector<8x64xf32>
    %328 = vector.extract_strided_slice %298 {offsets = [32, 0], sizes = [8, 64], strides = [1, 1]} : vector<48x64xf32> to vector<8x64xf32>
    %329 = vector.extract_strided_slice %298 {offsets = [40, 0], sizes = [8, 64], strides = [1, 1]} : vector<48x64xf32> to vector<8x64xf32>
    %330 = vector.extract_strided_slice %323 {offsets = [0, 0], sizes = [8, 64], strides = [1, 1]} : vector<48x64xf32> to vector<8x64xf32>
    %331 = vector.extract_strided_slice %323 {offsets = [8, 0], sizes = [8, 64], strides = [1, 1]} : vector<48x64xf32> to vector<8x64xf32>
    %332 = vector.extract_strided_slice %323 {offsets = [16, 0], sizes = [8, 64], strides = [1, 1]} : vector<48x64xf32> to vector<8x64xf32>
    %333 = vector.extract_strided_slice %323 {offsets = [24, 0], sizes = [8, 64], strides = [1, 1]} : vector<48x64xf32> to vector<8x64xf32>
    %334 = vector.extract_strided_slice %323 {offsets = [32, 0], sizes = [8, 64], strides = [1, 1]} : vector<48x64xf32> to vector<8x64xf32>
    %335 = vector.extract_strided_slice %323 {offsets = [40, 0], sizes = [8, 64], strides = [1, 1]} : vector<48x64xf32> to vector<8x64xf32>
    %336 = tpu.concatenate %324, %325 in 1 : vector<8x64xf32>, vector<8x64xf32> -> vector<8x128xf32>
    %337 = tpu.concatenate %326, %327 in 1 : vector<8x64xf32>, vector<8x64xf32> -> vector<8x128xf32>
    %338 = tpu.concatenate %328, %329 in 1 : vector<8x64xf32>, vector<8x64xf32> -> vector<8x128xf32>
    %339 = tpu.concatenate %330, %331 in 1 : vector<8x64xf32>, vector<8x64xf32> -> vector<8x128xf32>
    %340 = tpu.concatenate %332, %333 in 1 : vector<8x64xf32>, vector<8x64xf32> -> vector<8x128xf32>
    %341 = tpu.concatenate %334, %335 in 1 : vector<8x64xf32>, vector<8x64xf32> -> vector<8x128xf32>
    %342 = tpu.concatenate %336, %337, %338, %339, %340, %341 in 1 : vector<8x128xf32>, vector<8x128xf32>, vector<8x128xf32>, vector<8x128xf32>, vector<8x128xf32>, vector<8x128xf32> -> vector<8x768xf32>
    %c0_176 = arith.constant 0 : index
    %c0_177 = arith.constant 0 : index
    %343 = vector.load %arg11[%c0_176, %c0_177] : memref<8x768xf32, #tpu.memory_space<vmem>>, vector<8x768xf32>
    tpu.vector_store %arg11[%c0_176, %c0_177], %342 {strides = array<i32>} : memref<8x768xf32, #tpu.memory_space<vmem>>, vector<8x768xf32>,
    %c0_178 = arith.constant 0 : index
    %c0_179 = arith.constant 0 : index
    %344 = vector.load %arg7[%c0_178, %c0_179] : memref<768x192xf32, #tpu.memory_space<vmem>>, vector<768x192xf32>
    %cst_180 = arith.constant dense<0.000000e+00> : vector<8x192xf32>
    %345 = tpu.matmul %342, %344, %cst_180 {dimension_numbers = #tpu.dot_dimension_numbers<[1], [0], [0], [1], [0, 0, 1, 1], [], []>} : vector<8x768xf32>, vector<768x192xf32>, vector<8x192xf32> -> vector<8x192xf32>
    %c0_181 = arith.constant 0 : index
    %c0_182 = arith.constant 0 : index
    %346 = vector.load %arg8[%c0_181, %c0_182] : memref<1x192xf32, #tpu.memory_space<vmem>>, vector<1x192xf32>
    %347 = vector.broadcast %346 : vector<1x192xf32> to vector<8x192xf32>
    %348 = arith.addf %345, %347 : vector<8x192xf32>
    %c0_183 = arith.constant 0 : index
    %c0_184 = arith.constant 0 : index
    %349 = vector.load %arg9[%c0_183, %c0_184] : memref<192x2xf32, #tpu.memory_space<vmem>>, vector<192x2xf32>
    %cst_185 = arith.constant dense<0.000000e+00> : vector<8x2xf32>
    %350 = tpu.matmul %348, %349, %cst_185 {dimension_numbers = #tpu.dot_dimension_numbers<[1], [0], [0], [1], [0, 0, 1, 1], [], []>} : vector<8x192xf32>, vector<192x2xf32>, vector<8x2xf32> -> vector<8x2xf32>
    %c0_186 = arith.constant 0 : index
    %c0_187 = arith.constant 0 : index
    %351 = vector.load %arg10[%c0_186, %c0_187] : memref<1x2xf32, #tpu.memory_space<vmem>>, vector<1x2xf32>
    %352 = vector.broadcast %351 : vector<1x2xf32> to vector<8x2xf32>
    %353 = arith.addf %350, %352 : vector<8x2xf32>
    %c0_188 = arith.constant 0 : index
    %c0_189 = arith.constant 0 : index
    %354 = vector.load %arg12[%c0_188, %c0_189] : memref<8x2xf32, #tpu.memory_space<vmem>>, vector<8x2xf32>
    tpu.vector_store %arg12[%c0_188, %c0_189], %353 {strides = array<i32>} : memref<8x2xf32, #tpu.memory_space<vmem>>, vector<8x2xf32>,
    return
  }
}

</mosaic_0001>

<llo_original>
// kernel: forward.1
$region0: #{forward.1}
  #allocation0 [shape = 'u32[]', space=smem, size = 0x4, offset = 0x4, fixed_abs, tag = 'smem constant byte address 0x4 - core index']
  #allocation1 [shape = 'u32[72,128]{1,0:T(1,128)}', space=vmem, size = 0x9000, scoped, tag = 'internal scratch']
  #allocation2 [shape = 'f32[10,48,64]{2,1,0:T(8,128)}', space=vmem, size = 0x3c000, scoped, tag = 'scratch operand']
  #allocation3 [shape = 'f32[6,48,64]{2,1,0:T(8,128)}', space=vmem, size = 0x24000, scoped, tag = 'scratch operand']
  %s0 = inlined_call_operand.vmem [shape: f32[16,48,48], index: 0, kind: input, shape index: {}]
  %s1 = inlined_call_operand.vmem [shape: f32[48,128], index: 1, kind: input, shape index: {}]
  %s2 = inlined_call_operand.vmem [shape: f32[1,128], index: 2, kind: input, shape index: {}]
  %s3 = inlined_call_operand.vmem [shape: f32[192,128], index: 3, kind: input, shape index: {}]
  %s4 = inlined_call_operand.vmem [shape: f32[1,128], index: 4, kind: input, shape index: {}]
  %s5 = inlined_call_operand.vmem [shape: f32[192,128], index: 5, kind: input, shape index: {}]
  %s6 = inlined_call_operand.vmem [shape: f32[1,128], index: 6, kind: input, shape index: {}]
  %s7 = inlined_call_operand.vmem [shape: f32[768,192], index: 7, kind: input, shape index: {}]
  %s8 = inlined_call_operand.vmem [shape: f32[1,192], index: 8, kind: input, shape index: {}]
  %s9 = inlined_call_operand.vmem [shape: f32[192,2], index: 9, kind: input, shape index: {}]
  %s10 = inlined_call_operand.vmem [shape: f32[1,2], index: 10, kind: input, shape index: {}]
  %s11 = inlined_call_operand.vmem [shape: f32[8,768], index: 11, kind: output, shape index: {0}]
  %s12 = inlined_call_operand.vmem [shape: f32[8,2], index: 12, kind: output, shape index: {1}]
  %13 = xla_tuple %s11, %s12
  %s14 = sld [smem:[#allocation0]]
  $region62: #{forward.1} parent=0
    _
  %s16 = ssub.s32 1, %s14
  %s17 = scalar_select 0, %s16, %s14
  // Predicated region
  $region2: #{forward.1} parent=0 // pred_check
    _
  $region3: #{forward.1} parent=0 // pred_check_branch
    %19 = sbr.rel (0) target = $region5
  $region4: #{forward.1} parent=0 // pred_region
    _
  $region5: #{forward.1} parent=0 // pred_fallthru
    _
  // Predicated region
  $region6: #{forward.1} parent=0 // pred_check
    _
  $region7: #{forward.1} parent=0 // pred_check_branch
    %21 = sbr.rel (0) target = $region9
  $region8: #{forward.1} parent=0 // pred_region
    _
  $region9: #{forward.1} parent=0 // pred_fallthru
    _
  // Predicated region
  $region10: #{forward.1} parent=0 // pred_check
    _
  $region11: #{forward.1} parent=0 // pred_check_branch
    %23 = sbr.rel (0) target = $region13
  $region12: #{forward.1} parent=0 // pred_region
    _
  $region13: #{forward.1} parent=0 // pred_fallthru
    _
  // Predicated region
  $region14: #{forward.1} parent=0 // pred_check
    _
  $region15: #{forward.1} parent=0 // pred_check_branch
    %25 = sbr.rel (0) target = $region17
  $region16: #{forward.1} parent=0 // pred_region
    _
  $region17: #{forward.1} parent=0 // pred_fallthru
    _
  // Predicated region
  $region18: #{forward.1} parent=0 // pred_check
    _
  $region19: #{forward.1} parent=0 // pred_check_branch
    %27 = sbr.rel (0) target = $region21
  $region20: #{forward.1} parent=0 // pred_region
    _
  $region21: #{forward.1} parent=0 // pred_fallthru
    _
  // Predicated region
  $region22: #{forward.1} parent=0 // pred_check
    _
  $region23: #{forward.1} parent=0 // pred_check_branch
    %29 = sbr.rel (0) target = $region25
  $region24: #{forward.1} parent=0 // pred_region
    _
  $region25: #{forward.1} parent=0 // pred_fallthru
    _
  // Predicated region
  $region26: #{forward.1} parent=0 // pred_check
    _
  $region27: #{forward.1} parent=0 // pred_check_branch
    %31 = sbr.rel (0) target = $region29
  $region28: #{forward.1} parent=0 // pred_region
    _
  $region29: #{forward.1} parent=0 // pred_fallthru
    _
  // Predicated region
  $region30: #{forward.1} parent=0 // pred_check
    _
  $region31: #{forward.1} parent=0 // pred_check_branch
    %33 = sbr.rel (0) target = $region33
  $region32: #{forward.1} parent=0 // pred_region
    _
  $region33: #{forward.1} parent=0 // pred_fallthru
    _
  // Predicated region
  $region34: #{forward.1} parent=0 // pred_check
    _
  $region35: #{forward.1} parent=0 // pred_check_branch
    %35 = sbr.rel (0) target = $region37
  $region36: #{forward.1} parent=0 // pred_region
    _
  $region37: #{forward.1} parent=0 // pred_fallthru
    _
  // Predicated region
  $region38: #{forward.1} parent=0 // pred_check
    _
  $region39: #{forward.1} parent=0 // pred_check_branch
    %37 = sbr.rel (0) target = $region41
  $region40: #{forward.1} parent=0 // pred_region
    _
  $region41: #{forward.1} parent=0 // pred_fallthru
    _
  // Predicated region
  $region42: #{forward.1} parent=0 // pred_check
    _
  $region43: #{forward.1} parent=0 // pred_check_branch
    %39 = sbr.rel (0) target = $region45
  $region44: #{forward.1} parent=0 // pred_region
    _
  $region45: #{forward.1} parent=0 // pred_fallthru
    _
  %vm40 = vcmask 523264
  %41 = vst.msk [vmem:[#allocation2] sm:$0xff] %vm40, 0.0
  %42 = vst.msk [vmem:[#allocation2 + $0x8] sm:$0xff] %vm40, 0.0
  %43 = vst.msk [vmem:[#allocation2 + $0x10] sm:$0xff] %vm40, 0.0
  %44 = vst.msk [vmem:[#allocation2 + $0x18] sm:$0xff] %vm40, 0.0
  %45 = vst.msk [vmem:[#allocation2 + $0x20] sm:$0xff] %vm40, 0.0
  %46 = vst.msk [vmem:[#allocation2 + $0x28] sm:$0xff] %vm40, 0.0
  %s47 = scalar_lea.vmem [#allocation2], 432
  %48 = vst.msk [vmem:[%s47] sm:$0xff] %vm40, 0.0
  %49 = vst.msk [vmem:[%s47 + $0x8] sm:$0xff] %vm40, 0.0
  %50 = vst.msk [vmem:[%s47 + $0x10] sm:$0xff] %vm40, 0.0
  %51 = vst.msk [vmem:[%s47 + $0x18] sm:$0xff] %vm40, 0.0
  %52 = vst.msk [vmem:[%s47 + $0x20] sm:$0xff] %vm40, 0.0
  %53 = vst.msk [vmem:[%s47 + $0x28] sm:$0xff] %vm40, 0.0
  %54 = vst.msk [vmem:[#allocation3] sm:$0xff] %vm40, 0.0
  %55 = vst.msk [vmem:[#allocation3 + $0x8] sm:$0xff] %vm40, 0.0
  %56 = vst.msk [vmem:[#allocation3 + $0x10] sm:$0xff] %vm40, 0.0
  %57 = vst.msk [vmem:[#allocation3 + $0x18] sm:$0xff] %vm40, 0.0
  %58 = vst.msk [vmem:[#allocation3 + $0x20] sm:$0xff] %vm40, 0.0
  %59 = vst.msk [vmem:[#allocation3 + $0x28] sm:$0xff] %vm40, 0.0
  %s60 = scalar_lea.vmem [#allocation3], 240
  %61 = vst.msk [vmem:[%s60] sm:$0xff] %vm40, 0.0
  %62 = vst.msk [vmem:[%s60 + $0x8] sm:$0xff] %vm40, 0.0
  %63 = vst.msk [vmem:[%s60 + $0x10] sm:$0xff] %vm40, 0.0
  %64 = vst.msk [vmem:[%s60 + $0x18] sm:$0xff] %vm40, 0.0
  %65 = vst.msk [vmem:[%s60 + $0x20] sm:$0xff] %vm40, 0.0
  %66 = vst.msk [vmem:[%s60 + $0x28] sm:$0xff] %vm40, 0.0
  %v67 = vld [vmem:[%s0] sm:$0xff]
  %v68 = vld [vmem:[%s0 + $0x8] sm:$0xff]
  %v69 = vld [vmem:[%s0 + $0x10] sm:$0xff]
  %v70 = vld [vmem:[%s0 + $0x18] sm:$0xff]
  %v71 = vld [vmem:[%s0 + $0x20] sm:$0xff]
  %v72 = vld [vmem:[%s0 + $0x28] sm:$0xff]
  %v73 = vld [vmem:[%s0 + $0x30] sm:$0xff]
  %v74 = vld [vmem:[%s0 + $0x38] sm:$0xff]
  %v75 = vld [vmem:[%s0 + $0x40] sm:$0xff]
  %v76 = vld [vmem:[%s0 + $0x48] sm:$0xff]
  %v77 = vld [vmem:[%s0 + $0x50] sm:$0xff]
  %v78 = vld [vmem:[%s0 + $0x58] sm:$0xff]
  %v79 = vld [vmem:[%s1] sm:$0xff]
  %v80 = vld [vmem:[%s1 + $0x8] sm:$0xff]
  %v81 = vld [vmem:[%s1 + $0x10] sm:$0xff]
  %v82 = vld [vmem:[%s1 + $0x18] sm:$0xff]
  %v83 = vld [vmem:[%s1 + $0x20] sm:$0xff]
  %v84 = vld [vmem:[%s1 + $0x28] sm:$0xff]
  %v85 = vld [vmem:[%s2] sm:$0x1]
  %v87 = vperm.slane %v85, 0
  %vm89 = vcmask 392192
  %v91 = vsel %vm89, %v67, 0
  %v94 = vsel %vm89, %v68, 0
  %v97 = vsel %vm89, %v69, 0
  %v100 = vsel %vm89, %v70, 0
  %v103 = vsel %vm89, %v71, 0
  %v106 = vsel %vm89, %v72, 0
  %v109 = vsel %vm89, %v73, 0
  %v112 = vsel %vm89, %v74, 0
  %v115 = vsel %vm89, %v75, 0
  %v118 = vsel %vm89, %v76, 0
  %v121 = vsel %vm89, %v77, 0
  %v124 = vsel %vm89, %v78, 0
  %126 = vmatpush.msra.mxu0 0.0
  %127 = vmatpush.msra.mxu0 0.0
  %128 = vmatpush.msra.mxu0 0.0
  %129 = vmatpush.msra.mxu0 0.0
  %130 = vmatpush.msra.mxu0 0.0
  %131 = vmatpush.msra.mxu0 0.0
  %132 = vmatpush.msra.mxu0 0.0
  %133 = vmatpush.msra.mxu0 0.0
  %134 = vmatpush.msra.mxu0 0.0
  %135 = vmatpush.msra.mxu0 0.0
  %136 = vmatpush.msra.mxu0 %v84
  %137 = vmatpush.msra.mxu0 %v83
  %138 = vmatpush.msra.mxu0 %v82
  %139 = vmatpush.msra.mxu0 %v81
  %140 = vmatpush.msra.mxu0 %v80
  %141 = vmatpush.msra.mxu0 %v79
  %142 = vmatmul.f32.gmra.mxu0 %v91
  %v143 = vpop.f32.mrf.mxu0
  %v144 = vadd.f32 %v87, %v143
  %145 = vmatmul.f32.gmra.mxu0 %v94
  %v146 = vpop.f32.mrf.mxu0
  %v147 = vadd.f32 %v87, %v146
  %148 = vmatmul.f32.gmra.mxu0 %v97
  %v149 = vpop.f32.mrf.mxu0
  %v150 = vadd.f32 %v87, %v149
  %151 = vmatmul.f32.gmra.mxu0 %v100
  %v152 = vpop.f32.mrf.mxu0
  %v153 = vadd.f32 %v87, %v152
  %154 = vmatmul.f32.gmra.mxu0 %v103
  %v155 = vpop.f32.mrf.mxu0
  %v156 = vadd.f32 %v87, %v155
  %157 = vmatmul.f32.gmra.mxu0 %v106
  %v158 = vpop.f32.mrf.mxu0
  %v159 = vadd.f32 %v87, %v158
  %160 = vmatmul.f32.gmra.mxu0 %v109
  %v161 = vpop.f32.mrf.mxu0
  %v162 = vadd.f32 %v87, %v161
  %163 = vmatmul.f32.gmra.mxu0 %v112
  %v164 = vpop.f32.mrf.mxu0
  %v165 = vadd.f32 %v87, %v164
  %166 = vmatmul.f32.gmra.mxu0 %v115
  %v167 = vpop.f32.mrf.mxu0
  %v168 = vadd.f32 %v87, %v167
  %169 = vmatmul.f32.gmra.mxu0 %v118
  %v170 = vpop.f32.mrf.mxu0
  %v171 = vadd.f32 %v87, %v170
  %172 = vmatmul.f32.gmra.mxu0 %v121
  %v173 = vpop.f32.mrf.mxu0
  %v174 = vadd.f32 %v87, %v173
  %175 = vmatmul.f32.gmra.mxu0 %v124
  %v176 = vpop.f32.mrf.mxu0
  %v177 = vadd.f32 %v87, %v176
  %178 = vdwg.mxu0
  %v179 = vmax.f32 %v144, 0.0
  %v180 = vmax.f32 %v147, 0.0
  %v181 = vmax.f32 %v150, 0.0
  %v182 = vmax.f32 %v153, 0.0
  %v183 = vmax.f32 %v156, 0.0
  %v184 = vmax.f32 %v159, 0.0
  %v185 = vmax.f32 %v162, 0.0
  %v186 = vmax.f32 %v165, 0.0
  %v187 = vmax.f32 %v168, 0.0
  %v188 = vmax.f32 %v171, 0.0
  %v189 = vmax.f32 %v174, 0.0
  %v190 = vmax.f32 %v177, 0.0
  %v191 = vadd.f32 %v179, %v185
  %v192 = vadd.f32 %v180, %v186
  %v193 = vadd.f32 %v181, %v187
  %v194 = vadd.f32 %v182, %v188
  %v195 = vadd.f32 %v183, %v189
  %v196 = vadd.f32 %v184, %v190
  %203 = vrot.lane.b32.xlu0 %v191, 64
  %v204 = vpop.permute.xlu0 %203
  %205 = vrot.lane.b32.xlu0 %v192, 64
  %v206 = vpop.permute.xlu0 %205
  %207 = vrot.lane.b32.xlu0 %v193, 64
  %v208 = vpop.permute.xlu0 %207
  %209 = vrot.lane.b32.xlu0 %v194, 64
  %v210 = vpop.permute.xlu0 %209
  %211 = vrot.lane.b32.xlu0 %v195, 64
  %v212 = vpop.permute.xlu0 %211
  %213 = vrot.lane.b32.xlu0 %v196, 64
  %v214 = vpop.permute.xlu0 %213
  %v221 = vadd.f32 %v191, %v204
  %v222 = vadd.f32 %v192, %v206
  %v223 = vadd.f32 %v193, %v208
  %v224 = vadd.f32 %v194, %v210
  %v225 = vadd.f32 %v195, %v212
  %v226 = vadd.f32 %v196, %v214
  %v227 = vmul.f32 %v221, 0.25
  %v228 = vmul.f32 %v222, 0.25
  %v229 = vmul.f32 %v223, 0.25
  %v230 = vmul.f32 %v224, 0.25
  %v231 = vmul.f32 %v225, 0.25
  %v232 = vmul.f32 %v226, 0.25
  %s233 = scalar_lea.vmem [#allocation2], 48
  %234 = vst.msk [vmem:[%s233] sm:$0xff] %vm40, %v227
  %235 = vst.msk [vmem:[%s233 + $0x8] sm:$0xff] %vm40, %v228
  %236 = vst.msk [vmem:[%s233 + $0x10] sm:$0xff] %vm40, %v229
  %237 = vst.msk [vmem:[%s233 + $0x18] sm:$0xff] %vm40, %v230
  %238 = vst.msk [vmem:[%s233 + $0x20] sm:$0xff] %vm40, %v231
  %239 = vst.msk [vmem:[%s233 + $0x28] sm:$0xff] %vm40, %v232
  %s240 = scalar_lea.vmem %s0, 96
  %v241 = vld [vmem:[%s240] sm:$0xff]
  %v242 = vld [vmem:[%s240 + $0x8] sm:$0xff]
  %v243 = vld [vmem:[%s240 + $0x10] sm:$0xff]
  %v244 = vld [vmem:[%s240 + $0x18] sm:$0xff]
  %v245 = vld [vmem:[%s240 + $0x20] sm:$0xff]
  %v246 = vld [vmem:[%s240 + $0x28] sm:$0xff]
  %v247 = vld [vmem:[%s240 + $0x30] sm:$0xff]
  %v248 = vld [vmem:[%s240 + $0x38] sm:$0xff]
  %v249 = vld [vmem:[%s240 + $0x40] sm:$0xff]
  %v250 = vld [vmem:[%s240 + $0x48] sm:$0xff]
  %v251 = vld [vmem:[%s240 + $0x50] sm:$0xff]
  %v252 = vld [vmem:[%s240 + $0x58] sm:$0xff]
  %v253 = vld [vmem:[%s1] sm:$0xff]
  %v254 = vld [vmem:[%s1 + $0x8] sm:$0xff]
  %v255 = vld [vmem:[%s1 + $0x10] sm:$0xff]
  %v256 = vld [vmem:[%s1 + $0x18] sm:$0xff]
  %v257 = vld [vmem:[%s1 + $0x20] sm:$0xff]
  %v258 = vld [vmem:[%s1 + $0x28] sm:$0xff]
  %v259 = vld [vmem:[%s2] sm:$0x1]
  %v261 = vperm.slane %v259, 0
  %v264 = vsel %vm89, %v241, 0
  %v267 = vsel %vm89, %v242, 0
  %v270 = vsel %vm89, %v243, 0
  %v273 = vsel %vm89, %v244, 0
  %v276 = vsel %vm89, %v245, 0
  %v279 = vsel %vm89, %v246, 0
  %v282 = vsel %vm89, %v247, 0
  %v285 = vsel %vm89, %v248, 0
  %v288 = vsel %vm89, %v249, 0
  %v291 = vsel %vm89, %v250, 0
  %v294 = vsel %vm89, %v251, 0
  %v297 = vsel %vm89, %v252, 0
  %299 = vmatpush.msra.mxu0 0.0
  %300 = vmatpush.msra.mxu0 0.0
  %301 = vmatpush.msra.mxu0 0.0
  %302 = vmatpush.msra.mxu0 0.0
  %303 = vmatpush.msra.mxu0 0.0
  %304 = vmatpush.msra.mxu0 0.0
  %305 = vmatpush.msra.mxu0 0.0
  %306 = vmatpush.msra.mxu0 0.0
  %307 = vmatpush.msra.mxu0 0.0
  %308 = vmatpush.msra.mxu0 0.0
  %309 = vmatpush.msra.mxu0 %v258
  %310 = vmatpush.msra.mxu0 %v257
  %311 = vmatpush.msra.mxu0 %v256
  %312 = vmatpush.msra.mxu0 %v255
  %313 = vmatpush.msra.mxu0 %v254
  %314 = vmatpush.msra.mxu0 %v253
  %315 = vmatmul.f32.gmra.mxu0 %v264
  %v316 = vpop.f32.mrf.mxu0
  %v317 = vadd.f32 %v261, %v316
  %318 = vmatmul.f32.gmra.mxu0 %v267
  %v319 = vpop.f32.mrf.mxu0
  %v320 = vadd.f32 %v261, %v319
  %321 = vmatmul.f32.gmra.mxu0 %v270
  %v322 = vpop.f32.mrf.mxu0
  %v323 = vadd.f32 %v261, %v322
  %324 = vmatmul.f32.gmra.mxu0 %v273
  %v325 = vpop.f32.mrf.mxu0
  %v326 = vadd.f32 %v261, %v325
  %327 = vmatmul.f32.gmra.mxu0 %v276
  %v328 = vpop.f32.mrf.mxu0
  %v329 = vadd.f32 %v261, %v328
  %330 = vmatmul.f32.gmra.mxu0 %v279
  %v331 = vpop.f32.mrf.mxu0
  %v332 = vadd.f32 %v261, %v331
  %333 = vmatmul.f32.gmra.mxu0 %v282
  %v334 = vpop.f32.mrf.mxu0
  %v335 = vadd.f32 %v261, %v334
  %336 = vmatmul.f32.gmra.mxu0 %v285
  %v337 = vpop.f32.mrf.mxu0
  %v338 = vadd.f32 %v261, %v337
  %339 = vmatmul.f32.gmra.mxu0 %v288
  %v340 = vpop.f32.mrf.mxu0
  %v341 = vadd.f32 %v261, %v340
  %342 = vmatmul.f32.gmra.mxu0 %v291
  %v343 = vpop.f32.mrf.mxu0
  %v344 = vadd.f32 %v261, %v343
  %345 = vmatmul.f32.gmra.mxu0 %v294
  %v346 = vpop.f32.mrf.mxu0
  %v347 = vadd.f32 %v261, %v346
  %348 = vmatmul.f32.gmra.mxu0 %v297
  %v349 = vpop.f32.mrf.mxu0
  %v350 = vadd.f32 %v261, %v349
  %351 = vdwg.mxu0
  %v352 = vmax.f32 %v317, 0.0
  %v353 = vmax.f32 %v320, 0.0
  %v354 = vmax.f32 %v323, 0.0
  %v355 = vmax.f32 %v326, 0.0
  %v356 = vmax.f32 %v329, 0.0
  %v357 = vmax.f32 %v332, 0.0
  %v358 = vmax.f32 %v335, 0.0
  %v359 = vmax.f32 %v338, 0.0
  %v360 = vmax.f32 %v341, 0.0
  %v361 = vmax.f32 %v344, 0.0
  %v362 = vmax.f32 %v347, 0.0
  %v363 = vmax.f32 %v350, 0.0
  %v364 = vadd.f32 %v352, %v358
  %v365 = vadd.f32 %v353, %v359
  %v366 = vadd.f32 %v354, %v360
  %v367 = vadd.f32 %v355, %v361
  %v368 = vadd.f32 %v356, %v362
  %v369 = vadd.f32 %v357, %v363
  %376 = vrot.lane.b32.xlu0 %v364, 64
  %v377 = vpop.permute.xlu0 %376
  %378 = vrot.lane.b32.xlu0 %v365, 64
  %v379 = vpop.permute.xlu0 %378
  %380 = vrot.lane.b32.xlu0 %v366, 64
  %v381 = vpop.permute.xlu0 %380
  %382 = vrot.lane.b32.xlu0 %v367, 64
  %v383 = vpop.permute.xlu0 %382
  %384 = vrot.lane.b32.xlu0 %v368, 64
  %v385 = vpop.permute.xlu0 %384
  %386 = vrot.lane.b32.xlu0 %v369, 64
  %v387 = vpop.permute.xlu0 %386
  %v394 = vadd.f32 %v364, %v377
  %v395 = vadd.f32 %v365, %v379
  %v396 = vadd.f32 %v366, %v381
  %v397 = vadd.f32 %v367, %v383
  %v398 = vadd.f32 %v368, %v385
  %v399 = vadd.f32 %v369, %v387
  %v400 = vmul.f32 %v394, 0.25
  %v401 = vmul.f32 %v395, 0.25
  %v402 = vmul.f32 %v396, 0.25
  %v403 = vmul.f32 %v397, 0.25
  %v404 = vmul.f32 %v398, 0.25
  %v405 = vmul.f32 %v399, 0.25
  %s406 = scalar_lea.vmem [#allocation2], 96
  %407 = vst.msk [vmem:[%s406] sm:$0xff] %vm40, %v400
  %408 = vst.msk [vmem:[%s406 + $0x8] sm:$0xff] %vm40, %v401
  %409 = vst.msk [vmem:[%s406 + $0x10] sm:$0xff] %vm40, %v402
  %410 = vst.msk [vmem:[%s406 + $0x18] sm:$0xff] %vm40, %v403
  %411 = vst.msk [vmem:[%s406 + $0x20] sm:$0xff] %vm40, %v404
  %412 = vst.msk [vmem:[%s406 + $0x28] sm:$0xff] %vm40, %v405
  %s413 = scalar_lea.vmem %s0, 192
  %v414 = vld [vmem:[%s413] sm:$0xff]
  %v415 = vld [vmem:[%s413 + $0x8] sm:$0xff]
  %v416 = vld [vmem:[%s413 + $0x10] sm:$0xff]
  %v417 = vld [vmem:[%s413 + $0x18] sm:$0xff]
  %v418 = vld [vmem:[%s413 + $0x20] sm:$0xff]
  %v419 = vld [vmem:[%s413 + $0x28] sm:$0xff]
  %v420 = vld [vmem:[%s413 + $0x30] sm:$0xff]
  %v421 = vld [vmem:[%s413 + $0x38] sm:$0xff]
  %v422 = vld [vmem:[%s413 + $0x40] sm:$0xff]
  %v423 = vld [vmem:[%s413 + $0x48] sm:$0xff]
  %v424 = vld [vmem:[%s413 + $0x50] sm:$0xff]
  %v425 = vld [vmem:[%s413 + $0x58] sm:$0xff]
  %v426 = vld [vmem:[%s1] sm:$0xff]
  %v427 = vld [vmem:[%s1 + $0x8] sm:$0xff]
  %v428 = vld [vmem:[%s1 + $0x10] sm:$0xff]
  %v429 = vld [vmem:[%s1 + $0x18] sm:$0xff]
  %v430 = vld [vmem:[%s1 + $0x20] sm:$0xff]
  %v431 = vld [vmem:[%s1 + $0x28] sm:$0xff]
  %v432 = vld [vmem:[%s2] sm:$0x1]
  %v434 = vperm.slane %v432, 0
  %v437 = vsel %vm89, %v414, 0
  %v440 = vsel %vm89, %v415, 0
  %v443 = vsel %vm89, %v416, 0
  %v446 = vsel %vm89, %v417, 0
  %v449 = vsel %vm89, %v418, 0
  %v452 = vsel %vm89, %v419, 0
  %v455 = vsel %vm89, %v420, 0
  %v458 = vsel %vm89, %v421, 0
  %v461 = vsel %vm89, %v422, 0
  %v464 = vsel %vm89, %v423, 0
  %v467 = vsel %vm89, %v424, 0
  %v470 = vsel %vm89, %v425, 0
  %472 = vmatpush.msra.mxu0 0.0
  %473 = vmatpush.msra.mxu0 0.0
  %474 = vmatpush.msra.mxu0 0.0
  %475 = vmatpush.msra.mxu0 0.0
  %476 = vmatpush.msra.mxu0 0.0
  %477 = vmatpush.msra.mxu0 0.0
  %478 = vmatpush.msra.mxu0 0.0
  %479 = vmatpush.msra.mxu0 0.0
  %480 = vmatpush.msra.mxu0 0.0
  %481 = vmatpush.msra.mxu0 0.0
  %482 = vmatpush.msra.mxu0 %v431
  %483 = vmatpush.msra.mxu0 %v430
  %484 = vmatpush.msra.mxu0 %v429
  %485 = vmatpush.msra.mxu0 %v428
  %486 = vmatpush.msra.mxu0 %v427
  %487 = vmatpush.msra.mxu0 %v426
  %488 = vmatmul.f32.gmra.mxu0 %v437
  %v489 = vpop.f32.mrf.mxu0
  %v490 = vadd.f32 %v434, %v489
  %491 = vmatmul.f32.gmra.mxu0 %v440
  %v492 = vpop.f32.mrf.mxu0
  %v493 = vadd.f32 %v434, %v492
  %494 = vmatmul.f32.gmra.mxu0 %v443
  %v495 = vpop.f32.mrf.mxu0
  %v496 = vadd.f32 %v434, %v495
  %497 = vmatmul.f32.gmra.mxu0 %v446
  %v498 = vpop.f32.mrf.mxu0
  %v499 = vadd.f32 %v434, %v498
  %500 = vmatmul.f32.gmra.mxu0 %v449
  %v501 = vpop.f32.mrf.mxu0
  %v502 = vadd.f32 %v434, %v501
  %503 = vmatmul.f32.gmra.mxu0 %v452
  %v504 = vpop.f32.mrf.mxu0
  %v505 = vadd.f32 %v434, %v504
  %506 = vmatmul.f32.gmra.mxu0 %v455
  %v507 = vpop.f32.mrf.mxu0
  %v508 = vadd.f32 %v434, %v507
  %509 = vmatmul.f32.gmra.mxu0 %v458
  %v510 = vpop.f32.mrf.mxu0
  %v511 = vadd.f32 %v434, %v510
  %512 = vmatmul.f32.gmra.mxu0 %v461
  %v513 = vpop.f32.mrf.mxu0
  %v514 = vadd.f32 %v434, %v513
  %515 = vmatmul.f32.gmra.mxu0 %v464
  %v516 = vpop.f32.mrf.mxu0
  %v517 = vadd.f32 %v434, %v516
  %518 = vmatmul.f32.gmra.mxu0 %v467
  %v519 = vpop.f32.mrf.mxu0
  %v520 = vadd.f32 %v434, %v519
  %521 = vmatmul.f32.gmra.mxu0 %v470
  %v522 = vpop.f32.mrf.mxu0
  %v523 = vadd.f32 %v434, %v522
  %524 = vdwg.mxu0
  %v525 = vmax.f32 %v490, 0.0
  %v526 = vmax.f32 %v493, 0.0
  %v527 = vmax.f32 %v496, 0.0
  %v528 = vmax.f32 %v499, 0.0
  %v529 = vmax.f32 %v502, 0.0
  %v530 = vmax.f32 %v505, 0.0
  %v531 = vmax.f32 %v508, 0.0
  %v532 = vmax.f32 %v511, 0.0
  %v533 = vmax.f32 %v514, 0.0
  %v534 = vmax.f32 %v517, 0.0
  %v535 = vmax.f32 %v520, 0.0
  %v536 = vmax.f32 %v523, 0.0
  %v537 = vadd.f32 %v525, %v531
  %v538 = vadd.f32 %v526, %v532
  %v539 = vadd.f32 %v527, %v533
  %v540 = vadd.f32 %v528, %v534
  %v541 = vadd.f32 %v529, %v535
  %v542 = vadd.f32 %v530, %v536
  %549 = vrot.lane.b32.xlu0 %v537, 64
  %v550 = vpop.permute.xlu0 %549
  %551 = vrot.lane.b32.xlu0 %v538, 64
  %v552 = vpop.permute.xlu0 %551
  %553 = vrot.lane.b32.xlu0 %v539, 64
  %v554 = vpop.permute.xlu0 %553
  %555 = vrot.lane.b32.xlu0 %v540, 64
  %v556 = vpop.permute.xlu0 %555
  %557 = vrot.lane.b32.xlu0 %v541, 64
  %v558 = vpop.permute.xlu0 %557
  %559 = vrot.lane.b32.xlu0 %v542, 64
  %v560 = vpop.permute.xlu0 %559
  %v567 = vadd.f32 %v537, %v550
  %v568 = vadd.f32 %v538, %v552
  %v569 = vadd.f32 %v539, %v554
  %v570 = vadd.f32 %v540, %v556
  %v571 = vadd.f32 %v541, %v558
  %v572 = vadd.f32 %v542, %v560
  %v573 = vmul.f32 %v567, 0.25
  %v574 = vmul.f32 %v568, 0.25
  %v575 = vmul.f32 %v569, 0.25
  %v576 = vmul.f32 %v570, 0.25
  %v577 = vmul.f32 %v571, 0.25
  %v578 = vmul.f32 %v572, 0.25
  %s579 = scalar_lea.vmem [#allocation2], 144
  %580 = vst.msk [vmem:[%s579] sm:$0xff] %vm40, %v573
  %581 = vst.msk [vmem:[%s579 + $0x8] sm:$0xff] %vm40, %v574
  %582 = vst.msk [vmem:[%s579 + $0x10] sm:$0xff] %vm40, %v575
  %583 = vst.msk [vmem:[%s579 + $0x18] sm:$0xff] %vm40, %v576
  %584 = vst.msk [vmem:[%s579 + $0x20] sm:$0xff] %vm40, %v577
  %585 = vst.msk [vmem:[%s579 + $0x28] sm:$0xff] %vm40, %v578
  %s586 = scalar_lea.vmem %s0, 288
  %v587 = vld [vmem:[%s586] sm:$0xff]
  %v588 = vld [vmem:[%s586 + $0x8] sm:$0xff]
  %v589 = vld [vmem:[%s586 + $0x10] sm:$0xff]
  %v590 = vld [vmem:[%s586 + $0x18] sm:$0xff]
  %v591 = vld [vmem:[%s586 + $0x20] sm:$0xff]
  %v592 = vld [vmem:[%s586 + $0x28] sm:$0xff]
  %v593 = vld [vmem:[%s586 + $0x30] sm:$0xff]
  %v594 = vld [vmem:[%s586 + $0x38] sm:$0xff]
  %v595 = vld [vmem:[%s586 + $0x40] sm:$0xff]
  %v596 = vld [vmem:[%s586 + $0x48] sm:$0xff]
  %v597 = vld [vmem:[%s586 + $0x50] sm:$0xff]
  %v598 = vld [vmem:[%s586 + $0x58] sm:$0xff]
  %v599 = vld [vmem:[%s1] sm:$0xff]
  %v600 = vld [vmem:[%s1 + $0x8] sm:$0xff]
  %v601 = vld [vmem:[%s1 + $0x10] sm:$0xff]
  %v602 = vld [vmem:[%s1 + $0x18] sm:$0xff]
  %v603 = vld [vmem:[%s1 + $0x20] sm:$0xff]
  %v604 = vld [vmem:[%s1 + $0x28] sm:$0xff]
  %v605 = vld [vmem:[%s2] sm:$0x1]
  %v607 = vperm.slane %v605, 0
  %v610 = vsel %vm89, %v587, 0
  %v613 = vsel %vm89, %v588, 0
  %v616 = vsel %vm89, %v589, 0
  %v619 = vsel %vm89, %v590, 0
  %v622 = vsel %vm89, %v591, 0
  %v625 = vsel %vm89, %v592, 0
  %v628 = vsel %vm89, %v593, 0
  %v631 = vsel %vm89, %v594, 0
  %v634 = vsel %vm89, %v595, 0
  %v637 = vsel %vm89, %v596, 0
  %v640 = vsel %vm89, %v597, 0
  %v643 = vsel %vm89, %v598, 0
  %645 = vmatpush.msra.mxu0 0.0
  %646 = vmatpush.msra.mxu0 0.0
  %647 = vmatpush.msra.mxu0 0.0
  %648 = vmatpush.msra.mxu0 0.0
  %649 = vmatpush.msra.mxu0 0.0
  %650 = vmatpush.msra.mxu0 0.0
  %651 = vmatpush.msra.mxu0 0.0
  %652 = vmatpush.msra.mxu0 0.0
  %653 = vmatpush.msra.mxu0 0.0
  %654 = vmatpush.msra.mxu0 0.0
  %655 = vmatpush.msra.mxu0 %v604
  %656 = vmatpush.msra.mxu0 %v603
  %657 = vmatpush.msra.mxu0 %v602
  %658 = vmatpush.msra.mxu0 %v601
  %659 = vmatpush.msra.mxu0 %v600
  %660 = vmatpush.msra.mxu0 %v599
  %661 = vmatmul.f32.gmra.mxu0 %v610
  %v662 = vpop.f32.mrf.mxu0
  %v663 = vadd.f32 %v607, %v662
  %664 = vmatmul.f32.gmra.mxu0 %v613
  %v665 = vpop.f32.mrf.mxu0
  %v666 = vadd.f32 %v607, %v665
  %667 = vmatmul.f32.gmra.mxu0 %v616
  %v668 = vpop.f32.mrf.mxu0
  %v669 = vadd.f32 %v607, %v668
  %670 = vmatmul.f32.gmra.mxu0 %v619
  %v671 = vpop.f32.mrf.mxu0
  %v672 = vadd.f32 %v607, %v671
  %673 = vmatmul.f32.gmra.mxu0 %v622
  %v674 = vpop.f32.mrf.mxu0
  %v675 = vadd.f32 %v607, %v674
  %676 = vmatmul.f32.gmra.mxu0 %v625
  %v677 = vpop.f32.mrf.mxu0
  %v678 = vadd.f32 %v607, %v677
  %679 = vmatmul.f32.gmra.mxu0 %v628
  %v680 = vpop.f32.mrf.mxu0
  %v681 = vadd.f32 %v607, %v680
  %682 = vmatmul.f32.gmra.mxu0 %v631
  %v683 = vpop.f32.mrf.mxu0
  %v684 = vadd.f32 %v607, %v683
  %685 = vmatmul.f32.gmra.mxu0 %v634
  %v686 = vpop.f32.mrf.mxu0
  %v687 = vadd.f32 %v607, %v686
  %688 = vmatmul.f32.gmra.mxu0 %v637
  %v689 = vpop.f32.mrf.mxu0
  %v690 = vadd.f32 %v607, %v689
  %691 = vmatmul.f32.gmra.mxu0 %v640
  %v692 = vpop.f32.mrf.mxu0
  %v693 = vadd.f32 %v607, %v692
  %694 = vmatmul.f32.gmra.mxu0 %v643
  %v695 = vpop.f32.mrf.mxu0
  %v696 = vadd.f32 %v607, %v695
  %697 = vdwg.mxu0
  %v698 = vmax.f32 %v663, 0.0
  %v699 = vmax.f32 %v666, 0.0
  %v700 = vmax.f32 %v669, 0.0
  %v701 = vmax.f32 %v672, 0.0
  %v702 = vmax.f32 %v675, 0.0
  %v703 = vmax.f32 %v678, 0.0
  %v704 = vmax.f32 %v681, 0.0
  %v705 = vmax.f32 %v684, 0.0
  %v706 = vmax.f32 %v687, 0.0
  %v707 = vmax.f32 %v690, 0.0
  %v708 = vmax.f32 %v693, 0.0
  %v709 = vmax.f32 %v696, 0.0
  %v710 = vadd.f32 %v698, %v704
  %v711 = vadd.f32 %v699, %v705
  %v712 = vadd.f32 %v700, %v706
  %v713 = vadd.f32 %v701, %v707
  %v714 = vadd.f32 %v702, %v708
  %v715 = vadd.f32 %v703, %v709
  %722 = vrot.lane.b32.xlu0 %v710, 64
  %v723 = vpop.permute.xlu0 %722
  %724 = vrot.lane.b32.xlu0 %v711, 64
  %v725 = vpop.permute.xlu0 %724
  %726 = vrot.lane.b32.xlu0 %v712, 64
  %v727 = vpop.permute.xlu0 %726
  %728 = vrot.lane.b32.xlu0 %v713, 64
  %v729 = vpop.permute.xlu0 %728
  %730 = vrot.lane.b32.xlu0 %v714, 64
  %v731 = vpop.permute.xlu0 %730
  %732 = vrot.lane.b32.xlu0 %v715, 64
  %v733 = vpop.permute.xlu0 %732
  %v740 = vadd.f32 %v710, %v723
  %v741 = vadd.f32 %v711, %v725
  %v742 = vadd.f32 %v712, %v727
  %v743 = vadd.f32 %v713, %v729
  %v744 = vadd.f32 %v714, %v731
  %v745 = vadd.f32 %v715, %v733
  %v746 = vmul.f32 %v740, 0.25
  %v747 = vmul.f32 %v741, 0.25
  %v748 = vmul.f32 %v742, 0.25
  %v749 = vmul.f32 %v743, 0.25
  %v750 = vmul.f32 %v744, 0.25
  %v751 = vmul.f32 %v745, 0.25
  %s752 = scalar_lea.vmem [#allocation2], 192
  %753 = vst.msk [vmem:[%s752] sm:$0xff] %vm40, %v746
  %754 = vst.msk [vmem:[%s752 + $0x8] sm:$0xff] %vm40, %v747
  %755 = vst.msk [vmem:[%s752 + $0x10] sm:$0xff] %vm40, %v748
  %756 = vst.msk [vmem:[%s752 + $0x18] sm:$0xff] %vm40, %v749
  %757 = vst.msk [vmem:[%s752 + $0x20] sm:$0xff] %vm40, %v750
  %758 = vst.msk [vmem:[%s752 + $0x28] sm:$0xff] %vm40, %v751
  %s759 = scalar_lea.vmem %s0, 384
  %v760 = vld [vmem:[%s759] sm:$0xff]
  %v761 = vld [vmem:[%s759 + $0x8] sm:$0xff]
  %v762 = vld [vmem:[%s759 + $0x10] sm:$0xff]
  %v763 = vld [vmem:[%s759 + $0x18] sm:$0xff]
  %v764 = vld [vmem:[%s759 + $0x20] sm:$0xff]
  %v765 = vld [vmem:[%s759 + $0x28] sm:$0xff]
  %v766 = vld [vmem:[%s759 + $0x30] sm:$0xff]
  %v767 = vld [vmem:[%s759 + $0x38] sm:$0xff]
  %v768 = vld [vmem:[%s759 + $0x40] sm:$0xff]
  %v769 = vld [vmem:[%s759 + $0x48] sm:$0xff]
  %v770 = vld [vmem:[%s759 + $0x50] sm:$0xff]
  %v771 = vld [vmem:[%s759 + $0x58] sm:$0xff]
  %v772 = vld [vmem:[%s1] sm:$0xff]
  %v773 = vld [vmem:[%s1 + $0x8] sm:$0xff]
  %v774 = vld [vmem:[%s1 + $0x10] sm:$0xff]
  %v775 = vld [vmem:[%s1 + $0x18] sm:$0xff]
  %v776 = vld [vmem:[%s1 + $0x20] sm:$0xff]
  %v777 = vld [vmem:[%s1 + $0x28] sm:$0xff]
  %v778 = vld [vmem:[%s2] sm:$0x1]
  %v780 = vperm.slane %v778, 0
  %v783 = vsel %vm89, %v760, 0
  %v786 = vsel %vm89, %v761, 0
  %v789 = vsel %vm89, %v762, 0
  %v792 = vsel %vm89, %v763, 0
  %v795 = vsel %vm89, %v764, 0
  %v798 = vsel %vm89, %v765, 0
  %v801 = vsel %vm89, %v766, 0
  %v804 = vsel %vm89, %v767, 0
  %v807 = vsel %vm89, %v768, 0
  %v810 = vsel %vm89, %v769, 0
  %v813 = vsel %vm89, %v770, 0
  %v816 = vsel %vm89, %v771, 0
  %818 = vmatpush.msra.mxu0 0.0
  %819 = vmatpush.msra.mxu0 0.0
  %820 = vmatpush.msra.mxu0 0.0
  %821 = vmatpush.msra.mxu0 0.0
  %822 = vmatpush.msra.mxu0 0.0
  %823 = vmatpush.msra.mxu0 0.0
  %824 = vmatpush.msra.mxu0 0.0
  %825 = vmatpush.msra.mxu0 0.0
  %826 = vmatpush.msra.mxu0 0.0
  %827 = vmatpush.msra.mxu0 0.0
  %828 = vmatpush.msra.mxu0 %v777
  %829 = vmatpush.msra.mxu0 %v776
  %830 = vmatpush.msra.mxu0 %v775
  %831 = vmatpush.msra.mxu0 %v774
  %832 = vmatpush.msra.mxu0 %v773
  %833 = vmatpush.msra.mxu0 %v772
  %834 = vmatmul.f32.gmra.mxu0 %v783
  %v835 = vpop.f32.mrf.mxu0
  %v836 = vadd.f32 %v780, %v835
  %837 = vmatmul.f32.gmra.mxu0 %v786
  %v838 = vpop.f32.mrf.mxu0
  %v839 = vadd.f32 %v780, %v838
  %840 = vmatmul.f32.gmra.mxu0 %v789
  %v841 = vpop.f32.mrf.mxu0
  %v842 = vadd.f32 %v780, %v841
  %843 = vmatmul.f32.gmra.mxu0 %v792
  %v844 = vpop.f32.mrf.mxu0
  %v845 = vadd.f32 %v780, %v844
  %846 = vmatmul.f32.gmra.mxu0 %v795
  %v847 = vpop.f32.mrf.mxu0
  %v848 = vadd.f32 %v780, %v847
  %849 = vmatmul.f32.gmra.mxu0 %v798
  %v850 = vpop.f32.mrf.mxu0
  %v851 = vadd.f32 %v780, %v850
  %852 = vmatmul.f32.gmra.mxu0 %v801
  %v853 = vpop.f32.mrf.mxu0
  %v854 = vadd.f32 %v780, %v853
  %855 = vmatmul.f32.gmra.mxu0 %v804
  %v856 = vpop.f32.mrf.mxu0
  %v857 = vadd.f32 %v780, %v856
  %858 = vmatmul.f32.gmra.mxu0 %v807
  %v859 = vpop.f32.mrf.mxu0
  %v860 = vadd.f32 %v780, %v859
  %861 = vmatmul.f32.gmra.mxu0 %v810
  %v862 = vpop.f32.mrf.mxu0
  %v863 = vadd.f32 %v780, %v862
  %864 = vmatmul.f32.gmra.mxu0 %v813
  %v865 = vpop.f32.mrf.mxu0
  %v866 = vadd.f32 %v780, %v865
  %867 = vmatmul.f32.gmra.mxu0 %v816
  %v868 = vpop.f32.mrf.mxu0
  %v869 = vadd.f32 %v780, %v868
  %870 = vdwg.mxu0
  %v871 = vmax.f32 %v836, 0.0
  %v872 = vmax.f32 %v839, 0.0
  %v873 = vmax.f32 %v842, 0.0
  %v874 = vmax.f32 %v845, 0.0
  %v875 = vmax.f32 %v848, 0.0
  %v876 = vmax.f32 %v851, 0.0
  %v877 = vmax.f32 %v854, 0.0
  %v878 = vmax.f32 %v857, 0.0
  %v879 = vmax.f32 %v860, 0.0
  %v880 = vmax.f32 %v863, 0.0
  %v881 = vmax.f32 %v866, 0.0
  %v882 = vmax.f32 %v869, 0.0
  %v883 = vadd.f32 %v871, %v877
  %v884 = vadd.f32 %v872, %v878
  %v885 = vadd.f32 %v873, %v879
  %v886 = vadd.f32 %v874, %v880
  %v887 = vadd.f32 %v875, %v881
  %v888 = vadd.f32 %v876, %v882
  %895 = vrot.lane.b32.xlu0 %v883, 64
  %v896 = vpop.permute.xlu0 %895
  %897 = vrot.lane.b32.xlu0 %v884, 64
  %v898 = vpop.permute.xlu0 %897
  %899 = vrot.lane.b32.xlu0 %v885, 64
  %v900 = vpop.permute.xlu0 %899
  %901 = vrot.lane.b32.xlu0 %v886, 64
  %v902 = vpop.permute.xlu0 %901
  %903 = vrot.lane.b32.xlu0 %v887, 64
  %v904 = vpop.permute.xlu0 %903
  %905 = vrot.lane.b32.xlu0 %v888, 64
  %v906 = vpop.permute.xlu0 %905
  %v913 = vadd.f32 %v883, %v896
  %v914 = vadd.f32 %v884, %v898
  %v915 = vadd.f32 %v885, %v900
  %v916 = vadd.f32 %v886, %v902
  %v917 = vadd.f32 %v887, %v904
  %v918 = vadd.f32 %v888, %v906
  %v919 = vmul.f32 %v913, 0.25
  %v920 = vmul.f32 %v914, 0.25
  %v921 = vmul.f32 %v915, 0.25
  %v922 = vmul.f32 %v916, 0.25
  %v923 = vmul.f32 %v917, 0.25
  %v924 = vmul.f32 %v918, 0.25
  %s925 = scalar_lea.vmem [#allocation2], 240
  %926 = vst.msk [vmem:[%s925] sm:$0xff] %vm40, %v919
  %927 = vst.msk [vmem:[%s925 + $0x8] sm:$0xff] %vm40, %v920
  %928 = vst.msk [vmem:[%s925 + $0x10] sm:$0xff] %vm40, %v921
  %929 = vst.msk [vmem:[%s925 + $0x18] sm:$0xff] %vm40, %v922
  %930 = vst.msk [vmem:[%s925 + $0x20] sm:$0xff] %vm40, %v923
  %931 = vst.msk [vmem:[%s925 + $0x28] sm:$0xff] %vm40, %v924
  %s932 = scalar_lea.vmem %s0, 480
  %v933 = vld [vmem:[%s932] sm:$0xff]
  %v934 = vld [vmem:[%s932 + $0x8] sm:$0xff]
  %v935 = vld [vmem:[%s932 + $0x10] sm:$0xff]
  %v936 = vld [vmem:[%s932 + $0x18] sm:$0xff]
  %v937 = vld [vmem:[%s932 + $0x20] sm:$0xff]
  %v938 = vld [vmem:[%s932 + $0x28] sm:$0xff]
  %v939 = vld [vmem:[%s932 + $0x30] sm:$0xff]
  %v940 = vld [vmem:[%s932 + $0x38] sm:$0xff]
  %v941 = vld [vmem:[%s932 + $0x40] sm:$0xff]
  %v942 = vld [vmem:[%s932 + $0x48] sm:$0xff]
  %v943 = vld [vmem:[%s932 + $0x50] sm:$0xff]
  %v944 = vld [vmem:[%s932 + $0x58] sm:$0xff]
  %v945 = vld [vmem:[%s1] sm:$0xff]
  %v946 = vld [vmem:[%s1 + $0x8] sm:$0xff]
  %v947 = vld [vmem:[%s1 + $0x10] sm:$0xff]
  %v948 = vld [vmem:[%s1 + $0x18] sm:$0xff]
  %v949 = vld [vmem:[%s1 + $0x20] sm:$0xff]
  %v950 = vld [vmem:[%s1 + $0x28] sm:$0xff]
  %v951 = vld [vmem:[%s2] sm:$0x1]
  %v953 = vperm.slane %v951, 0
  %v956 = vsel %vm89, %v933, 0
  %v959 = vsel %vm89, %v934, 0
  %v962 = vsel %vm89, %v935, 0
  %v965 = vsel %vm89, %v936, 0
  %v968 = vsel %vm89, %v937, 0
  %v971 = vsel %vm89, %v938, 0
  %v974 = vsel %vm89, %v939, 0
  %v977 = vsel %vm89, %v940, 0
  %v980 = vsel %vm89, %v941, 0
  %v983 = vsel %vm89, %v942, 0
  %v986 = vsel %vm89, %v943, 0
  %v989 = vsel %vm89, %v944, 0
  %991 = vmatpush.msra.mxu0 0.0
  %992 = vmatpush.msra.mxu0 0.0
  %993 = vmatpush.msra.mxu0 0.0
  %994 = vmatpush.msra.mxu0 0.0
  %995 = vmatpush.msra.mxu0 0.0
  %996 = vmatpush.msra.mxu0 0.0
  %997 = vmatpush.msra.mxu0 0.0
  %998 = vmatpush.msra.mxu0 0.0
  %999 = vmatpush.msra.mxu0 0.0
  %1000 = vmatpush.msra.mxu0 0.0
  %1001 = vmatpush.msra.mxu0 %v950
  %1002 = vmatpush.msra.mxu0 %v949
  %1003 = vmatpush.msra.mxu0 %v948
  %1004 = vmatpush.msra.mxu0 %v947
  %1005 = vmatpush.msra.mxu0 %v946
  %1006 = vmatpush.msra.mxu0 %v945
  %1007 = vmatmul.f32.gmra.mxu0 %v956
  %v1008 = vpop.f32.mrf.mxu0
  %v1009 = vadd.f32 %v953, %v1008
  %1010 = vmatmul.f32.gmra.mxu0 %v959
  %v1011 = vpop.f32.mrf.mxu0
  %v1012 = vadd.f32 %v953, %v1011
  %1013 = vmatmul.f32.gmra.mxu0 %v962
  %v1014 = vpop.f32.mrf.mxu0
  %v1015 = vadd.f32 %v953, %v1014
  %1016 = vmatmul.f32.gmra.mxu0 %v965
  %v1017 = vpop.f32.mrf.mxu0
  %v1018 = vadd.f32 %v953, %v1017
  %1019 = vmatmul.f32.gmra.mxu0 %v968
  %v1020 = vpop.f32.mrf.mxu0
  %v1021 = vadd.f32 %v953, %v1020
  %1022 = vmatmul.f32.gmra.mxu0 %v971
  %v1023 = vpop.f32.mrf.mxu0
  %v1024 = vadd.f32 %v953, %v1023
  %1025 = vmatmul.f32.gmra.mxu0 %v974
  %v1026 = vpop.f32.mrf.mxu0
  %v1027 = vadd.f32 %v953, %v1026
  %1028 = vmatmul.f32.gmra.mxu0 %v977
  %v1029 = vpop.f32.mrf.mxu0
  %v1030 = vadd.f32 %v953, %v1029
  %1031 = vmatmul.f32.gmra.mxu0 %v980
  %v1032 = vpop.f32.mrf.mxu0
  %v1033 = vadd.f32 %v953, %v1032
  %1034 = vmatmul.f32.gmra.mxu0 %v983
  %v1035 = vpop.f32.mrf.mxu0
  %v1036 = vadd.f32 %v953, %v1035
  %1037 = vmatmul.f32.gmra.mxu0 %v986
  %v1038 = vpop.f32.mrf.mxu0
  %v1039 = vadd.f32 %v953, %v1038
  %1040 = vmatmul.f32.gmra.mxu0 %v989
  %v1041 = vpop.f32.mrf.mxu0
  %v1042 = vadd.f32 %v953, %v1041
  %1043 = vdwg.mxu0
  %v1044 = vmax.f32 %v1009, 0.0
  %v1045 = vmax.f32 %v1012, 0.0
  %v1046 = vmax.f32 %v1015, 0.0
  %v1047 = vmax.f32 %v1018, 0.0
  %v1048 = vmax.f32 %v1021, 0.0
  %v1049 = vmax.f32 %v1024, 0.0
  %v1050 = vmax.f32 %v1027, 0.0
  %v1051 = vmax.f32 %v1030, 0.0
  %v1052 = vmax.f32 %v1033, 0.0
  %v1053 = vmax.f32 %v1036, 0.0
  %v1054 = vmax.f32 %v1039, 0.0
  %v1055 = vmax.f32 %v1042, 0.0
  %v1056 = vadd.f32 %v1044, %v1050
  %v1057 = vadd.f32 %v1045, %v1051
  %v1058 = vadd.f32 %v1046, %v1052
  %v1059 = vadd.f32 %v1047, %v1053
  %v1060 = vadd.f32 %v1048, %v1054
  %v1061 = vadd.f32 %v1049, %v1055
  %1068 = vrot.lane.b32.xlu0 %v1056, 64
  %v1069 = vpop.permute.xlu0 %1068
  %1070 = vrot.lane.b32.xlu0 %v1057, 64
  %v1071 = vpop.permute.xlu0 %1070
  %1072 = vrot.lane.b32.xlu0 %v1058, 64
  %v1073 = vpop.permute.xlu0 %1072
  %1074 = vrot.lane.b32.xlu0 %v1059, 64
  %v1075 = vpop.permute.xlu0 %1074
  %1076 = vrot.lane.b32.xlu0 %v1060, 64
  %v1077 = vpop.permute.xlu0 %1076
  %1078 = vrot.lane.b32.xlu0 %v1061, 64
  %v1079 = vpop.permute.xlu0 %1078
  %v1086 = vadd.f32 %v1056, %v1069
  %v1087 = vadd.f32 %v1057, %v1071
  %v1088 = vadd.f32 %v1058, %v1073
  %v1089 = vadd.f32 %v1059, %v1075
  %v1090 = vadd.f32 %v1060, %v1077
  %v1091 = vadd.f32 %v1061, %v1079
  %v1092 = vmul.f32 %v1086, 0.25
  %v1093 = vmul.f32 %v1087, 0.25
  %v1094 = vmul.f32 %v1088, 0.25
  %v1095 = vmul.f32 %v1089, 0.25
  %v1096 = vmul.f32 %v1090, 0.25
  %v1097 = vmul.f32 %v1091, 0.25
  %s1098 = scalar_lea.vmem [#allocation2], 288
  %1099 = vst.msk [vmem:[%s1098] sm:$0xff] %vm40, %v1092
  %1100 = vst.msk [vmem:[%s1098 + $0x8] sm:$0xff] %vm40, %v1093
  %1101 = vst.msk [vmem:[%s1098 + $0x10] sm:$0xff] %vm40, %v1094
  %1102 = vst.msk [vmem:[%s1098 + $0x18] sm:$0xff] %vm40, %v1095
  %1103 = vst.msk [vmem:[%s1098 + $0x20] sm:$0xff] %vm40, %v1096
  %1104 = vst.msk [vmem:[%s1098 + $0x28] sm:$0xff] %vm40, %v1097
  %s1105 = scalar_lea.vmem %s0, 576
  %v1106 = vld [vmem:[%s1105] sm:$0xff]
  %v1107 = vld [vmem:[%s1105 + $0x8] sm:$0xff]
  %v1108 = vld [vmem:[%s1105 + $0x10] sm:$0xff]
  %v1109 = vld [vmem:[%s1105 + $0x18] sm:$0xff]
  %v1110 = vld [vmem:[%s1105 + $0x20] sm:$0xff]
  %v1111 = vld [vmem:[%s1105 + $0x28] sm:$0xff]
  %v1112 = vld [vmem:[%s1105 + $0x30] sm:$0xff]
  %v1113 = vld [vmem:[%s1105 + $0x38] sm:$0xff]
  %v1114 = vld [vmem:[%s1105 + $0x40] sm:$0xff]
  %v1115 = vld [vmem:[%s1105 + $0x48] sm:$0xff]
  %v1116 = vld [vmem:[%s1105 + $0x50] sm:$0xff]
  %v1117 = vld [vmem:[%s1105 + $0x58] sm:$0xff]
  %v1118 = vld [vmem:[%s1] sm:$0xff]
  %v1119 = vld [vmem:[%s1 + $0x8] sm:$0xff]
  %v1120 = vld [vmem:[%s1 + $0x10] sm:$0xff]
  %v1121 = vld [vmem:[%s1 + $0x18] sm:$0xff]
  %v1122 = vld [vmem:[%s1 + $0x20] sm:$0xff]
  %v1123 = vld [vmem:[%s1 + $0x28] sm:$0xff]
  %v1124 = vld [vmem:[%s2] sm:$0x1]
  %v1126 = vperm.slane %v1124, 0
  %v1129 = vsel %vm89, %v1106, 0
  %v1132 = vsel %vm89, %v1107, 0
  %v1135 = vsel %vm89, %v1108, 0
  %v1138 = vsel %vm89, %v1109, 0
  %v1141 = vsel %vm89, %v1110, 0
  %v1144 = vsel %vm89, %v1111, 0
  %v1147 = vsel %vm89, %v1112, 0
  %v1150 = vsel %vm89, %v1113, 0
  %v1153 = vsel %vm89, %v1114, 0
  %v1156 = vsel %vm89, %v1115, 0
  %v1159 = vsel %vm89, %v1116, 0
  %v1162 = vsel %vm89, %v1117, 0
  %1164 = vmatpush.msra.mxu0 0.0
  %1165 = vmatpush.msra.mxu0 0.0
  %1166 = vmatpush.msra.mxu0 0.0
  %1167 = vmatpush.msra.mxu0 0.0
  %1168 = vmatpush.msra.mxu0 0.0
  %1169 = vmatpush.msra.mxu0 0.0
  %1170 = vmatpush.msra.mxu0 0.0
  %1171 = vmatpush.msra.mxu0 0.0
  %1172 = vmatpush.msra.mxu0 0.0
  %1173 = vmatpush.msra.mxu0 0.0
  %1174 = vmatpush.msra.mxu0 %v1123
  %1175 = vmatpush.msra.mxu0 %v1122
  %1176 = vmatpush.msra.mxu0 %v1121
  %1177 = vmatpush.msra.mxu0 %v1120
  %1178 = vmatpush.msra.mxu0 %v1119
  %1179 = vmatpush.msra.mxu0 %v1118
  %1180 = vmatmul.f32.gmra.mxu0 %v1129
  %v1181 = vpop.f32.mrf.mxu0
  %v1182 = vadd.f32 %v1126, %v1181
  %1183 = vmatmul.f32.gmra.mxu0 %v1132
  %v1184 = vpop.f32.mrf.mxu0
  %v1185 = vadd.f32 %v1126, %v1184
  %1186 = vmatmul.f32.gmra.mxu0 %v1135
  %v1187 = vpop.f32.mrf.mxu0
  %v1188 = vadd.f32 %v1126, %v1187
  %1189 = vmatmul.f32.gmra.mxu0 %v1138
  %v1190 = vpop.f32.mrf.mxu0
  %v1191 = vadd.f32 %v1126, %v1190
  %1192 = vmatmul.f32.gmra.mxu0 %v1141
  %v1193 = vpop.f32.mrf.mxu0
  %v1194 = vadd.f32 %v1126, %v1193
  %1195 = vmatmul.f32.gmra.mxu0 %v1144
  %v1196 = vpop.f32.mrf.mxu0
  %v1197 = vadd.f32 %v1126, %v1196
  %1198 = vmatmul.f32.gmra.mxu0 %v1147
  %v1199 = vpop.f32.mrf.mxu0
  %v1200 = vadd.f32 %v1126, %v1199
  %1201 = vmatmul.f32.gmra.mxu0 %v1150
  %v1202 = vpop.f32.mrf.mxu0
  %v1203 = vadd.f32 %v1126, %v1202
  %1204 = vmatmul.f32.gmra.mxu0 %v1153
  %v1205 = vpop.f32.mrf.mxu0
  %v1206 = vadd.f32 %v1126, %v1205
  %1207 = vmatmul.f32.gmra.mxu0 %v1156
  %v1208 = vpop.f32.mrf.mxu0
  %v1209 = vadd.f32 %v1126, %v1208
  %1210 = vmatmul.f32.gmra.mxu0 %v1159
  %v1211 = vpop.f32.mrf.mxu0
  %v1212 = vadd.f32 %v1126, %v1211
  %1213 = vmatmul.f32.gmra.mxu0 %v1162
  %v1214 = vpop.f32.mrf.mxu0
  %v1215 = vadd.f32 %v1126, %v1214
  %1216 = vdwg.mxu0
  %v1217 = vmax.f32 %v1182, 0.0
  %v1218 = vmax.f32 %v1185, 0.0
  %v1219 = vmax.f32 %v1188, 0.0
  %v1220 = vmax.f32 %v1191, 0.0
  %v1221 = vmax.f32 %v1194, 0.0
  %v1222 = vmax.f32 %v1197, 0.0
  %v1223 = vmax.f32 %v1200, 0.0
  %v1224 = vmax.f32 %v1203, 0.0
  %v1225 = vmax.f32 %v1206, 0.0
  %v1226 = vmax.f32 %v1209, 0.0
  %v1227 = vmax.f32 %v1212, 0.0
  %v1228 = vmax.f32 %v1215, 0.0
  %v1229 = vadd.f32 %v1217, %v1223
  %v1230 = vadd.f32 %v1218, %v1224
  %v1231 = vadd.f32 %v1219, %v1225
  %v1232 = vadd.f32 %v1220, %v1226
  %v1233 = vadd.f32 %v1221, %v1227
  %v1234 = vadd.f32 %v1222, %v1228
  %1241 = vrot.lane.b32.xlu0 %v1229, 64
  %v1242 = vpop.permute.xlu0 %1241
  %1243 = vrot.lane.b32.xlu0 %v1230, 64
  %v1244 = vpop.permute.xlu0 %1243
  %1245 = vrot.lane.b32.xlu0 %v1231, 64
  %v1246 = vpop.permute.xlu0 %1245
  %1247 = vrot.lane.b32.xlu0 %v1232, 64
  %v1248 = vpop.permute.xlu0 %1247
  %1249 = vrot.lane.b32.xlu0 %v1233, 64
  %v1250 = vpop.permute.xlu0 %1249
  %1251 = vrot.lane.b32.xlu0 %v1234, 64
  %v1252 = vpop.permute.xlu0 %1251
  %v1259 = vadd.f32 %v1229, %v1242
  %v1260 = vadd.f32 %v1230, %v1244
  %v1261 = vadd.f32 %v1231, %v1246
  %v1262 = vadd.f32 %v1232, %v1248
  %v1263 = vadd.f32 %v1233, %v1250
  %v1264 = vadd.f32 %v1234, %v1252
  %v1265 = vmul.f32 %v1259, 0.25
  %v1266 = vmul.f32 %v1260, 0.25
  %v1267 = vmul.f32 %v1261, 0.25
  %v1268 = vmul.f32 %v1262, 0.25
  %v1269 = vmul.f32 %v1263, 0.25
  %v1270 = vmul.f32 %v1264, 0.25
  %s1271 = scalar_lea.vmem [#allocation2], 336
  %1272 = vst.msk [vmem:[%s1271] sm:$0xff] %vm40, %v1265
  %1273 = vst.msk [vmem:[%s1271 + $0x8] sm:$0xff] %vm40, %v1266
  %1274 = vst.msk [vmem:[%s1271 + $0x10] sm:$0xff] %vm40, %v1267
  %1275 = vst.msk [vmem:[%s1271 + $0x18] sm:$0xff] %vm40, %v1268
  %1276 = vst.msk [vmem:[%s1271 + $0x20] sm:$0xff] %vm40, %v1269
  %1277 = vst.msk [vmem:[%s1271 + $0x28] sm:$0xff] %vm40, %v1270
  %s1278 = scalar_lea.vmem %s0, 672
  %v1279 = vld [vmem:[%s1278] sm:$0xff]
  %v1280 = vld [vmem:[%s1278 + $0x8] sm:$0xff]
  %v1281 = vld [vmem:[%s1278 + $0x10] sm:$0xff]
  %v1282 = vld [vmem:[%s1278 + $0x18] sm:$0xff]
  %v1283 = vld [vmem:[%s1278 + $0x20] sm:$0xff]
  %v1284 = vld [vmem:[%s1278 + $0x28] sm:$0xff]
  %v1285 = vld [vmem:[%s1278 + $0x30] sm:$0xff]
  %v1286 = vld [vmem:[%s1278 + $0x38] sm:$0xff]
  %v1287 = vld [vmem:[%s1278 + $0x40] sm:$0xff]
  %v1288 = vld [vmem:[%s1278 + $0x48] sm:$0xff]
  %v1289 = vld [vmem:[%s1278 + $0x50] sm:$0xff]
  %v1290 = vld [vmem:[%s1278 + $0x58] sm:$0xff]
  %v1291 = vld [vmem:[%s1] sm:$0xff]
  %v1292 = vld [vmem:[%s1 + $0x8] sm:$0xff]
  %v1293 = vld [vmem:[%s1 + $0x10] sm:$0xff]
  %v1294 = vld [vmem:[%s1 + $0x18] sm:$0xff]
  %v1295 = vld [vmem:[%s1 + $0x20] sm:$0xff]
  %v1296 = vld [vmem:[%s1 + $0x28] sm:$0xff]
  %v1297 = vld [vmem:[%s2] sm:$0x1]
  %v1299 = vperm.slane %v1297, 0
  %v1302 = vsel %vm89, %v1279, 0
  %v1305 = vsel %vm89, %v1280, 0
  %v1308 = vsel %vm89, %v1281, 0
  %v1311 = vsel %vm89, %v1282, 0
  %v1314 = vsel %vm89, %v1283, 0
  %v1317 = vsel %vm89, %v1284, 0
  %v1320 = vsel %vm89, %v1285, 0
  %v1323 = vsel %vm89, %v1286, 0
  %v1326 = vsel %vm89, %v1287, 0
  %v1329 = vsel %vm89, %v1288, 0
  %v1332 = vsel %vm89, %v1289, 0
  %v1335 = vsel %vm89, %v1290, 0
  %1337 = vmatpush.msra.mxu0 0.0
  %1338 = vmatpush.msra.mxu0 0.0
  %1339 = vmatpush.msra.mxu0 0.0
  %1340 = vmatpush.msra.mxu0 0.0
  %1341 = vmatpush.msra.mxu0 0.0
  %1342 = vmatpush.msra.mxu0 0.0
  %1343 = vmatpush.msra.mxu0 0.0
  %1344 = vmatpush.msra.mxu0 0.0
  %1345 = vmatpush.msra.mxu0 0.0
  %1346 = vmatpush.msra.mxu0 0.0
  %1347 = vmatpush.msra.mxu0 %v1296
  %1348 = vmatpush.msra.mxu0 %v1295
  %1349 = vmatpush.msra.mxu0 %v1294
  %1350 = vmatpush.msra.mxu0 %v1293
  %1351 = vmatpush.msra.mxu0 %v1292
  %1352 = vmatpush.msra.mxu0 %v1291
  %1353 = vmatmul.f32.gmra.mxu0 %v1302
  %v1354 = vpop.f32.mrf.mxu0
  %v1355 = vadd.f32 %v1299, %v1354
  %1356 = vmatmul.f32.gmra.mxu0 %v1305
  %v1357 = vpop.f32.mrf.mxu0
  %v1358 = vadd.f32 %v1299, %v1357
  %1359 = vmatmul.f32.gmra.mxu0 %v1308
  %v1360 = vpop.f32.mrf.mxu0
  %v1361 = vadd.f32 %v1299, %v1360
  %1362 = vmatmul.f32.gmra.mxu0 %v1311
  %v1363 = vpop.f32.mrf.mxu0
  %v1364 = vadd.f32 %v1299, %v1363
  %1365 = vmatmul.f32.gmra.mxu0 %v1314
  %v1366 = vpop.f32.mrf.mxu0
  %v1367 = vadd.f32 %v1299, %v1366
  %1368 = vmatmul.f32.gmra.mxu0 %v1317
  %v1369 = vpop.f32.mrf.mxu0
  %v1370 = vadd.f32 %v1299, %v1369
  %1371 = vmatmul.f32.gmra.mxu0 %v1320
  %v1372 = vpop.f32.mrf.mxu0
  %v1373 = vadd.f32 %v1299, %v1372
  %1374 = vmatmul.f32.gmra.mxu0 %v1323
  %v1375 = vpop.f32.mrf.mxu0
  %v1376 = vadd.f32 %v1299, %v1375
  %1377 = vmatmul.f32.gmra.mxu0 %v1326
  %v1378 = vpop.f32.mrf.mxu0
  %v1379 = vadd.f32 %v1299, %v1378
  %1380 = vmatmul.f32.gmra.mxu0 %v1329
  %v1381 = vpop.f32.mrf.mxu0
  %v1382 = vadd.f32 %v1299, %v1381
  %1383 = vmatmul.f32.gmra.mxu0 %v1332
  %v1384 = vpop.f32.mrf.mxu0
  %v1385 = vadd.f32 %v1299, %v1384
  %1386 = vmatmul.f32.gmra.mxu0 %v1335
  %v1387 = vpop.f32.mrf.mxu0
  %v1388 = vadd.f32 %v1299, %v1387
  %1389 = vdwg.mxu0
  %v1390 = vmax.f32 %v1355, 0.0
  %v1391 = vmax.f32 %v1358, 0.0
  %v1392 = vmax.f32 %v1361, 0.0
  %v1393 = vmax.f32 %v1364, 0.0
  %v1394 = vmax.f32 %v1367, 0.0
  %v1395 = vmax.f32 %v1370, 0.0
  %v1396 = vmax.f32 %v1373, 0.0
  %v1397 = vmax.f32 %v1376, 0.0
  %v1398 = vmax.f32 %v1379, 0.0
  %v1399 = vmax.f32 %v1382, 0.0
  %v1400 = vmax.f32 %v1385, 0.0
  %v1401 = vmax.f32 %v1388, 0.0
  %v1402 = vadd.f32 %v1390, %v1396
  %v1403 = vadd.f32 %v1391, %v1397
  %v1404 = vadd.f32 %v1392, %v1398
  %v1405 = vadd.f32 %v1393, %v1399
  %v1406 = vadd.f32 %v1394, %v1400
  %v1407 = vadd.f32 %v1395, %v1401
  %1414 = vrot.lane.b32.xlu0 %v1402, 64
  %v1415 = vpop.permute.xlu0 %1414
  %1416 = vrot.lane.b32.xlu0 %v1403, 64
  %v1417 = vpop.permute.xlu0 %1416
  %1418 = vrot.lane.b32.xlu0 %v1404, 64
  %v1419 = vpop.permute.xlu0 %1418
  %1420 = vrot.lane.b32.xlu0 %v1405, 64
  %v1421 = vpop.permute.xlu0 %1420
  %1422 = vrot.lane.b32.xlu0 %v1406, 64
  %v1423 = vpop.permute.xlu0 %1422
  %1424 = vrot.lane.b32.xlu0 %v1407, 64
  %v1425 = vpop.permute.xlu0 %1424
  %v1432 = vadd.f32 %v1402, %v1415
  %v1433 = vadd.f32 %v1403, %v1417
  %v1434 = vadd.f32 %v1404, %v1419
  %v1435 = vadd.f32 %v1405, %v1421
  %v1436 = vadd.f32 %v1406, %v1423
  %v1437 = vadd.f32 %v1407, %v1425
  %v1438 = vmul.f32 %v1432, 0.25
  %v1439 = vmul.f32 %v1433, 0.25
  %v1440 = vmul.f32 %v1434, 0.25
  %v1441 = vmul.f32 %v1435, 0.25
  %v1442 = vmul.f32 %v1436, 0.25
  %v1443 = vmul.f32 %v1437, 0.25
  %s1444 = scalar_lea.vmem [#allocation2], 384
  %1445 = vst.msk [vmem:[%s1444] sm:$0xff] %vm40, %v1438
  %1446 = vst.msk [vmem:[%s1444 + $0x8] sm:$0xff] %vm40, %v1439
  %1447 = vst.msk [vmem:[%s1444 + $0x10] sm:$0xff] %vm40, %v1440
  %1448 = vst.msk [vmem:[%s1444 + $0x18] sm:$0xff] %vm40, %v1441
  %1449 = vst.msk [vmem:[%s1444 + $0x20] sm:$0xff] %vm40, %v1442
  %1450 = vst.msk [vmem:[%s1444 + $0x28] sm:$0xff] %vm40, %v1443
  %v1451 = vld [vmem:[#allocation2] sm:$0xff]
  %v1452 = vld [vmem:[#allocation2 + $0x8] sm:$0xff]
  %v1453 = vld [vmem:[#allocation2 + $0x10] sm:$0xff]
  %v1454 = vld [vmem:[#allocation2 + $0x18] sm:$0xff]
  %v1455 = vld [vmem:[#allocation2 + $0x20] sm:$0xff]
  %v1456 = vld [vmem:[#allocation2 + $0x28] sm:$0xff]
  %v1457 = vld [vmem:[#allocation2 + $0x30] sm:$0xff]
  %v1458 = vld [vmem:[#allocation2 + $0x38] sm:$0xff]
  %v1459 = vld [vmem:[#allocation2 + $0x40] sm:$0xff]
  %v1460 = vld [vmem:[#allocation2 + $0x48] sm:$0xff]
  %v1461 = vld [vmem:[#allocation2 + $0x50] sm:$0xff]
  %v1462 = vld [vmem:[#allocation2 + $0x58] sm:$0xff]
  %v1463 = vld [vmem:[#allocation2 + $0x60] sm:$0xff]
  %v1464 = vld [vmem:[#allocation2 + $0x68] sm:$0xff]
  %v1465 = vld [vmem:[#allocation2 + $0x70] sm:$0xff]
  %v1466 = vld [vmem:[#allocation2 + $0x78] sm:$0xff]
  %v1467 = vld [vmem:[#allocation2 + $0x80] sm:$0xff]
  %v1468 = vld [vmem:[#allocation2 + $0x88] sm:$0xff]
  %v1469 = vld [vmem:[#allocation2 + $0x90] sm:$0xff]
  %v1470 = vld [vmem:[#allocation2 + $0x98] sm:$0xff]
  %v1471 = vld [vmem:[#allocation2 + $0xa0] sm:$0xff]
  %v1472 = vld [vmem:[#allocation2 + $0xa8] sm:$0xff]
  %v1473 = vld [vmem:[#allocation2 + $0xb0] sm:$0xff]
  %v1474 = vld [vmem:[#allocation2 + $0xb8] sm:$0xff]
  %1487 = vrot.lane.b32.xlu0 %v1457, 64
  %v1488 = vpop.permute.xlu0 %1487
  %1489 = vrot.lane.b32.xlu0 %v1458, 64
  %v1490 = vpop.permute.xlu0 %1489
  %1491 = vrot.lane.b32.xlu0 %v1459, 64
  %v1492 = vpop.permute.xlu0 %1491
  %1493 = vrot.lane.b32.xlu0 %v1460, 64
  %v1494 = vpop.permute.xlu0 %1493
  %1495 = vrot.lane.b32.xlu0 %v1461, 64
  %v1496 = vpop.permute.xlu0 %1495
  %1497 = vrot.lane.b32.xlu0 %v1462, 64
  %v1498 = vpop.permute.xlu0 %1497
  %1499 = vrot.lane.b32.xlu0 %v1463, 64
  %v1500 = vpop.permute.xlu0 %1499
  %1501 = vrot.lane.b32.xlu0 %v1464, 64
  %v1502 = vpop.permute.xlu0 %1501
  %1503 = vrot.lane.b32.xlu0 %v1465, 64
  %v1504 = vpop.permute.xlu0 %1503
  %1505 = vrot.lane.b32.xlu0 %v1466, 64
  %v1506 = vpop.permute.xlu0 %1505
  %1507 = vrot.lane.b32.xlu0 %v1467, 64
  %v1508 = vpop.permute.xlu0 %1507
  %1509 = vrot.lane.b32.xlu0 %v1468, 64
  %v1510 = vpop.permute.xlu0 %1509
  %v1523 = vsel %vm40, %v1451, %v1488
  %v1524 = vsel %vm40, %v1452, %v1490
  %v1525 = vsel %vm40, %v1453, %v1492
  %v1526 = vsel %vm40, %v1454, %v1494
  %v1527 = vsel %vm40, %v1455, %v1496
  %v1528 = vsel %vm40, %v1456, %v1498
  %v1529 = vsel %vm40, %v1457, %v1500
  %v1530 = vsel %vm40, %v1458, %v1502
  %v1531 = vsel %vm40, %v1459, %v1504
  %v1532 = vsel %vm40, %v1460, %v1506
  %v1533 = vsel %vm40, %v1461, %v1508
  %v1534 = vsel %vm40, %v1462, %v1510
  %v1535 = vld [vmem:[%s3] sm:$0xff]
  %v1536 = vld [vmem:[%s3 + $0x8] sm:$0xff]
  %v1537 = vld [vmem:[%s3 + $0x10] sm:$0xff]
  %v1538 = vld [vmem:[%s3 + $0x18] sm:$0xff]
  %v1539 = vld [vmem:[%s3 + $0x20] sm:$0xff]
  %v1540 = vld [vmem:[%s3 + $0x28] sm:$0xff]
  %v1541 = vld [vmem:[%s3 + $0x30] sm:$0xff]
  %v1542 = vld [vmem:[%s3 + $0x38] sm:$0xff]
  %v1543 = vld [vmem:[%s3 + $0x40] sm:$0xff]
  %v1544 = vld [vmem:[%s3 + $0x48] sm:$0xff]
  %v1545 = vld [vmem:[%s3 + $0x50] sm:$0xff]
  %v1546 = vld [vmem:[%s3 + $0x58] sm:$0xff]
  %v1547 = vld [vmem:[%s3 + $0x60] sm:$0xff]
  %v1548 = vld [vmem:[%s3 + $0x68] sm:$0xff]
  %v1549 = vld [vmem:[%s3 + $0x70] sm:$0xff]
  %v1550 = vld [vmem:[%s3 + $0x78] sm:$0xff]
  %v1551 = vld [vmem:[%s3 + $0x80] sm:$0xff]
  %v1552 = vld [vmem:[%s3 + $0x88] sm:$0xff]
  %v1553 = vld [vmem:[%s3 + $0x90] sm:$0xff]
  %v1554 = vld [vmem:[%s3 + $0x98] sm:$0xff]
  %v1555 = vld [vmem:[%s3 + $0xa0] sm:$0xff]
  %v1556 = vld [vmem:[%s3 + $0xa8] sm:$0xff]
  %v1557 = vld [vmem:[%s3 + $0xb0] sm:$0xff]
  %v1558 = vld [vmem:[%s3 + $0xb8] sm:$0xff]
  %v1559 = vld [vmem:[%s4] sm:$0x1]
  %v1561 = vperm.slane %v1559, 0
  %v1563 = vsel %vm40, %v1463, 0
  %v1565 = vsel %vm40, %v1464, 0
  %v1567 = vsel %vm40, %v1465, 0
  %v1569 = vsel %vm40, %v1466, 0
  %v1571 = vsel %vm40, %v1467, 0
  %v1573 = vsel %vm40, %v1468, 0
  %v1576 = vsel %vm40, %v1469, 0
  %v1579 = vsel %vm40, %v1470, 0
  %v1582 = vsel %vm40, %v1471, 0
  %v1585 = vsel %vm40, %v1472, 0
  %v1588 = vsel %vm40, %v1473, 0
  %v1591 = vsel %vm40, %v1474, 0
  %1593 = vmatpush.msra.mxu0 %v1550
  %1594 = vmatpush.msra.mxu0 %v1549
  %1595 = vmatpush.msra.mxu0 %v1548
  %1596 = vmatpush.msra.mxu0 %v1547
  %1597 = vmatpush.msra.mxu0 %v1546
  %1598 = vmatpush.msra.mxu0 %v1545
  %1599 = vmatpush.msra.mxu0 %v1544
  %1600 = vmatpush.msra.mxu0 %v1543
  %1601 = vmatpush.msra.mxu0 %v1542
  %1602 = vmatpush.msra.mxu0 %v1541
  %1603 = vmatpush.msra.mxu0 %v1540
  %1604 = vmatpush.msra.mxu0 %v1539
  %1605 = vmatpush.msra.mxu0 %v1538
  %1606 = vmatpush.msra.mxu0 %v1537
  %1607 = vmatpush.msra.mxu0 %v1536
  %1608 = vmatpush.msra.mxu0 %v1535
  %1609 = vmatmul.f32.gmra.mxu0 %v1523
  %v1610 = vpop.f32.mrf.mxu0
  %v1611 = vadd.f32 %v1561, %v1610
  %1612 = vmatmul.f32.gmra.mxu0 %v1524
  %v1613 = vpop.f32.mrf.mxu0
  %v1614 = vadd.f32 %v1561, %v1613
  %1615 = vmatmul.f32.gmra.mxu0 %v1525
  %v1616 = vpop.f32.mrf.mxu0
  %v1617 = vadd.f32 %v1561, %v1616
  %1618 = vmatmul.f32.gmra.mxu0 %v1526
  %v1619 = vpop.f32.mrf.mxu0
  %v1620 = vadd.f32 %v1561, %v1619
  %1621 = vmatmul.f32.gmra.mxu0 %v1527
  %v1622 = vpop.f32.mrf.mxu0
  %v1623 = vadd.f32 %v1561, %v1622
  %1624 = vmatmul.f32.gmra.mxu0 %v1528
  %v1625 = vpop.f32.mrf.mxu0
  %v1626 = vadd.f32 %v1561, %v1625
  %1627 = vmatmul.f32.gmra.mxu0 %v1529
  %v1628 = vpop.f32.mrf.mxu0
  %v1629 = vadd.f32 %v1561, %v1628
  %1630 = vmatmul.f32.gmra.mxu0 %v1530
  %v1631 = vpop.f32.mrf.mxu0
  %v1632 = vadd.f32 %v1561, %v1631
  %1633 = vmatmul.f32.gmra.mxu0 %v1531
  %v1634 = vpop.f32.mrf.mxu0
  %v1635 = vadd.f32 %v1561, %v1634
  %1636 = vmatmul.f32.gmra.mxu0 %v1532
  %v1637 = vpop.f32.mrf.mxu0
  %v1638 = vadd.f32 %v1561, %v1637
  %1639 = vmatmul.f32.gmra.mxu0 %v1533
  %v1640 = vpop.f32.mrf.mxu0
  %v1641 = vadd.f32 %v1561, %v1640
  %1642 = vmatmul.f32.gmra.mxu0 %v1534
  %v1643 = vpop.f32.mrf.mxu0
  %v1644 = vadd.f32 %v1561, %v1643
  %1645 = vdwg.mxu0
  %1646 = vmatpush.msra.mxu0 0.0
  %1647 = vmatpush.msra.mxu0 0.0
  %1648 = vmatpush.msra.mxu0 0.0
  %1649 = vmatpush.msra.mxu0 0.0
  %1650 = vmatpush.msra.mxu0 0.0
  %1651 = vmatpush.msra.mxu0 0.0
  %1652 = vmatpush.msra.mxu0 0.0
  %1653 = vmatpush.msra.mxu0 0.0
  %1654 = vmatpush.msra.mxu0 %v1558
  %1655 = vmatpush.msra.mxu0 %v1557
  %1656 = vmatpush.msra.mxu0 %v1556
  %1657 = vmatpush.msra.mxu0 %v1555
  %1658 = vmatpush.msra.mxu0 %v1554
  %1659 = vmatpush.msra.mxu0 %v1553
  %1660 = vmatpush.msra.mxu0 %v1552
  %1661 = vmatpush.msra.mxu0 %v1551
  %1662 = vmatmul.f32.gmra.mxu0 %v1563
  %v1663 = vpop.f32.mrf.mxu0
  %v1664 = vadd.f32 %v1611, %v1663
  %1665 = vmatmul.f32.gmra.mxu0 %v1565
  %v1666 = vpop.f32.mrf.mxu0
  %v1667 = vadd.f32 %v1614, %v1666
  %1668 = vmatmul.f32.gmra.mxu0 %v1567
  %v1669 = vpop.f32.mrf.mxu0
  %v1670 = vadd.f32 %v1617, %v1669
  %1671 = vmatmul.f32.gmra.mxu0 %v1569
  %v1672 = vpop.f32.mrf.mxu0
  %v1673 = vadd.f32 %v1620, %v1672
  %1674 = vmatmul.f32.gmra.mxu0 %v1571
  %v1675 = vpop.f32.mrf.mxu0
  %v1676 = vadd.f32 %v1623, %v1675
  %1677 = vmatmul.f32.gmra.mxu0 %v1573
  %v1678 = vpop.f32.mrf.mxu0
  %v1679 = vadd.f32 %v1626, %v1678
  %1680 = vmatmul.f32.gmra.mxu0 %v1576
  %v1681 = vpop.f32.mrf.mxu0
  %v1682 = vadd.f32 %v1629, %v1681
  %1683 = vmatmul.f32.gmra.mxu0 %v1579
  %v1684 = vpop.f32.mrf.mxu0
  %v1685 = vadd.f32 %v1632, %v1684
  %1686 = vmatmul.f32.gmra.mxu0 %v1582
  %v1687 = vpop.f32.mrf.mxu0
  %v1688 = vadd.f32 %v1635, %v1687
  %1689 = vmatmul.f32.gmra.mxu0 %v1585
  %v1690 = vpop.f32.mrf.mxu0
  %v1691 = vadd.f32 %v1638, %v1690
  %1692 = vmatmul.f32.gmra.mxu0 %v1588
  %v1693 = vpop.f32.mrf.mxu0
  %v1694 = vadd.f32 %v1641, %v1693
  %1695 = vmatmul.f32.gmra.mxu0 %v1591
  %v1696 = vpop.f32.mrf.mxu0
  %v1697 = vadd.f32 %v1644, %v1696
  %1698 = vdwg.mxu0
  %v1699 = vmax.f32 %v1664, 0.0
  %v1700 = vmax.f32 %v1667, 0.0
  %v1701 = vmax.f32 %v1670, 0.0
  %v1702 = vmax.f32 %v1673, 0.0
  %v1703 = vmax.f32 %v1676, 0.0
  %v1704 = vmax.f32 %v1679, 0.0
  %v1705 = vmax.f32 %v1682, 0.0
  %v1706 = vmax.f32 %v1685, 0.0
  %v1707 = vmax.f32 %v1688, 0.0
  %v1708 = vmax.f32 %v1691, 0.0
  %v1709 = vmax.f32 %v1694, 0.0
  %v1710 = vmax.f32 %v1697, 0.0
  %v1711 = vadd.f32 %v1699, %v1705
  %v1712 = vadd.f32 %v1700, %v1706
  %v1713 = vadd.f32 %v1701, %v1707
  %v1714 = vadd.f32 %v1702, %v1708
  %v1715 = vadd.f32 %v1703, %v1709
  %v1716 = vadd.f32 %v1704, %v1710
  %1723 = vrot.lane.b32.xlu0 %v1711, 64
  %v1724 = vpop.permute.xlu0 %1723
  %1725 = vrot.lane.b32.xlu0 %v1712, 64
  %v1726 = vpop.permute.xlu0 %1725
  %1727 = vrot.lane.b32.xlu0 %v1713, 64
  %v1728 = vpop.permute.xlu0 %1727
  %1729 = vrot.lane.b32.xlu0 %v1714, 64
  %v1730 = vpop.permute.xlu0 %1729
  %1731 = vrot.lane.b32.xlu0 %v1715, 64
  %v1732 = vpop.permute.xlu0 %1731
  %1733 = vrot.lane.b32.xlu0 %v1716, 64
  %v1734 = vpop.permute.xlu0 %1733
  %v1741 = vadd.f32 %v1711, %v1724
  %v1742 = vadd.f32 %v1712, %v1726
  %v1743 = vadd.f32 %v1713, %v1728
  %v1744 = vadd.f32 %v1714, %v1730
  %v1745 = vadd.f32 %v1715, %v1732
  %v1746 = vadd.f32 %v1716, %v1734
  %v1747 = vmul.f32 %v1741, 0.25
  %v1748 = vmul.f32 %v1742, 0.25
  %v1749 = vmul.f32 %v1743, 0.25
  %v1750 = vmul.f32 %v1744, 0.25
  %v1751 = vmul.f32 %v1745, 0.25
  %v1752 = vmul.f32 %v1746, 0.25
  %s1753 = scalar_lea.vmem [#allocation3], 48
  %1754 = vst.msk [vmem:[%s1753] sm:$0xff] %vm40, %v1747
  %1755 = vst.msk [vmem:[%s1753 + $0x8] sm:$0xff] %vm40, %v1748
  %1756 = vst.msk [vmem:[%s1753 + $0x10] sm:$0xff] %vm40, %v1749
  %1757 = vst.msk [vmem:[%s1753 + $0x18] sm:$0xff] %vm40, %v1750
  %1758 = vst.msk [vmem:[%s1753 + $0x20] sm:$0xff] %vm40, %v1751
  %1759 = vst.msk [vmem:[%s1753 + $0x28] sm:$0xff] %vm40, %v1752
  %v1760 = vld [vmem:[%s406] sm:$0xff]
  %v1761 = vld [vmem:[%s406 + $0x8] sm:$0xff]
  %v1762 = vld [vmem:[%s406 + $0x10] sm:$0xff]
  %v1763 = vld [vmem:[%s406 + $0x18] sm:$0xff]
  %v1764 = vld [vmem:[%s406 + $0x20] sm:$0xff]
  %v1765 = vld [vmem:[%s406 + $0x28] sm:$0xff]
  %v1766 = vld [vmem:[%s406 + $0x30] sm:$0xff]
  %v1767 = vld [vmem:[%s406 + $0x38] sm:$0xff]
  %v1768 = vld [vmem:[%s406 + $0x40] sm:$0xff]
  %v1769 = vld [vmem:[%s406 + $0x48] sm:$0xff]
  %v1770 = vld [vmem:[%s406 + $0x50] sm:$0xff]
  %v1771 = vld [vmem:[%s406 + $0x58] sm:$0xff]
  %v1772 = vld [vmem:[%s406 + $0x60] sm:$0xff]
  %v1773 = vld [vmem:[%s406 + $0x68] sm:$0xff]
  %v1774 = vld [vmem:[%s406 + $0x70] sm:$0xff]
  %v1775 = vld [vmem:[%s406 + $0x78] sm:$0xff]
  %v1776 = vld [vmem:[%s406 + $0x80] sm:$0xff]
  %v1777 = vld [vmem:[%s406 + $0x88] sm:$0xff]
  %v1778 = vld [vmem:[%s406 + $0x90] sm:$0xff]
  %v1779 = vld [vmem:[%s406 + $0x98] sm:$0xff]
  %v1780 = vld [vmem:[%s406 + $0xa0] sm:$0xff]
  %v1781 = vld [vmem:[%s406 + $0xa8] sm:$0xff]
  %v1782 = vld [vmem:[%s406 + $0xb0] sm:$0xff]
  %v1783 = vld [vmem:[%s406 + $0xb8] sm:$0xff]
  %1796 = vrot.lane.b32.xlu0 %v1766, 64
  %v1797 = vpop.permute.xlu0 %1796
  %1798 = vrot.lane.b32.xlu0 %v1767, 64
  %v1799 = vpop.permute.xlu0 %1798
  %1800 = vrot.lane.b32.xlu0 %v1768, 64
  %v1801 = vpop.permute.xlu0 %1800
  %1802 = vrot.lane.b32.xlu0 %v1769, 64
  %v1803 = vpop.permute.xlu0 %1802
  %1804 = vrot.lane.b32.xlu0 %v1770, 64
  %v1805 = vpop.permute.xlu0 %1804
  %1806 = vrot.lane.b32.xlu0 %v1771, 64
  %v1807 = vpop.permute.xlu0 %1806
  %1808 = vrot.lane.b32.xlu0 %v1772, 64
  %v1809 = vpop.permute.xlu0 %1808
  %1810 = vrot.lane.b32.xlu0 %v1773, 64
  %v1811 = vpop.permute.xlu0 %1810
  %1812 = vrot.lane.b32.xlu0 %v1774, 64
  %v1813 = vpop.permute.xlu0 %1812
  %1814 = vrot.lane.b32.xlu0 %v1775, 64
  %v1815 = vpop.permute.xlu0 %1814
  %1816 = vrot.lane.b32.xlu0 %v1776, 64
  %v1817 = vpop.permute.xlu0 %1816
  %1818 = vrot.lane.b32.xlu0 %v1777, 64
  %v1819 = vpop.permute.xlu0 %1818
  %v1832 = vsel %vm40, %v1760, %v1797
  %v1833 = vsel %vm40, %v1761, %v1799
  %v1834 = vsel %vm40, %v1762, %v1801
  %v1835 = vsel %vm40, %v1763, %v1803
  %v1836 = vsel %vm40, %v1764, %v1805
  %v1837 = vsel %vm40, %v1765, %v1807
  %v1838 = vsel %vm40, %v1766, %v1809
  %v1839 = vsel %vm40, %v1767, %v1811
  %v1840 = vsel %vm40, %v1768, %v1813
  %v1841 = vsel %vm40, %v1769, %v1815
  %v1842 = vsel %vm40, %v1770, %v1817
  %v1843 = vsel %vm40, %v1771, %v1819
  %v1844 = vld [vmem:[%s3] sm:$0xff]
  %v1845 = vld [vmem:[%s3 + $0x8] sm:$0xff]
  %v1846 = vld [vmem:[%s3 + $0x10] sm:$0xff]
  %v1847 = vld [vmem:[%s3 + $0x18] sm:$0xff]
  %v1848 = vld [vmem:[%s3 + $0x20] sm:$0xff]
  %v1849 = vld [vmem:[%s3 + $0x28] sm:$0xff]
  %v1850 = vld [vmem:[%s3 + $0x30] sm:$0xff]
  %v1851 = vld [vmem:[%s3 + $0x38] sm:$0xff]
  %v1852 = vld [vmem:[%s3 + $0x40] sm:$0xff]
  %v1853 = vld [vmem:[%s3 + $0x48] sm:$0xff]
  %v1854 = vld [vmem:[%s3 + $0x50] sm:$0xff]
  %v1855 = vld [vmem:[%s3 + $0x58] sm:$0xff]
  %v1856 = vld [vmem:[%s3 + $0x60] sm:$0xff]
  %v1857 = vld [vmem:[%s3 + $0x68] sm:$0xff]
  %v1858 = vld [vmem:[%s3 + $0x70] sm:$0xff]
  %v1859 = vld [vmem:[%s3 + $0x78] sm:$0xff]
  %v1860 = vld [vmem:[%s3 + $0x80] sm:$0xff]
  %v1861 = vld [vmem:[%s3 + $0x88] sm:$0xff]
  %v1862 = vld [vmem:[%s3 + $0x90] sm:$0xff]
  %v1863 = vld [vmem:[%s3 + $0x98] sm:$0xff]
  %v1864 = vld [vmem:[%s3 + $0xa0] sm:$0xff]
  %v1865 = vld [vmem:[%s3 + $0xa8] sm:$0xff]
  %v1866 = vld [vmem:[%s3 + $0xb0] sm:$0xff]
  %v1867 = vld [vmem:[%s3 + $0xb8] sm:$0xff]
  %v1868 = vld [vmem:[%s4] sm:$0x1]
  %v1870 = vperm.slane %v1868, 0
  %v1872 = vsel %vm40, %v1772, 0
  %v1874 = vsel %vm40, %v1773, 0
  %v1876 = vsel %vm40, %v1774, 0
  %v1878 = vsel %vm40, %v1775, 0
  %v1880 = vsel %vm40, %v1776, 0
  %v1882 = vsel %vm40, %v1777, 0
  %v1885 = vsel %vm40, %v1778, 0
  %v1888 = vsel %vm40, %v1779, 0
  %v1891 = vsel %vm40, %v1780, 0
  %v1894 = vsel %vm40, %v1781, 0
  %v1897 = vsel %vm40, %v1782, 0
  %v1900 = vsel %vm40, %v1783, 0
  %1902 = vmatpush.msra.mxu0 %v1859
  %1903 = vmatpush.msra.mxu0 %v1858
  %1904 = vmatpush.msra.mxu0 %v1857
  %1905 = vmatpush.msra.mxu0 %v1856
  %1906 = vmatpush.msra.mxu0 %v1855
  %1907 = vmatpush.msra.mxu0 %v1854
  %1908 = vmatpush.msra.mxu0 %v1853
  %1909 = vmatpush.msra.mxu0 %v1852
  %1910 = vmatpush.msra.mxu0 %v1851
  %1911 = vmatpush.msra.mxu0 %v1850
  %1912 = vmatpush.msra.mxu0 %v1849
  %1913 = vmatpush.msra.mxu0 %v1848
  %1914 = vmatpush.msra.mxu0 %v1847
  %1915 = vmatpush.msra.mxu0 %v1846
  %1916 = vmatpush.msra.mxu0 %v1845
  %1917 = vmatpush.msra.mxu0 %v1844
  %1918 = vmatmul.f32.gmra.mxu0 %v1832
  %v1919 = vpop.f32.mrf.mxu0
  %v1920 = vadd.f32 %v1870, %v1919
  %1921 = vmatmul.f32.gmra.mxu0 %v1833
  %v1922 = vpop.f32.mrf.mxu0
  %v1923 = vadd.f32 %v1870, %v1922
  %1924 = vmatmul.f32.gmra.mxu0 %v1834
  %v1925 = vpop.f32.mrf.mxu0
  %v1926 = vadd.f32 %v1870, %v1925
  %1927 = vmatmul.f32.gmra.mxu0 %v1835
  %v1928 = vpop.f32.mrf.mxu0
  %v1929 = vadd.f32 %v1870, %v1928
  %1930 = vmatmul.f32.gmra.mxu0 %v1836
  %v1931 = vpop.f32.mrf.mxu0
  %v1932 = vadd.f32 %v1870, %v1931
  %1933 = vmatmul.f32.gmra.mxu0 %v1837
  %v1934 = vpop.f32.mrf.mxu0
  %v1935 = vadd.f32 %v1870, %v1934
  %1936 = vmatmul.f32.gmra.mxu0 %v1838
  %v1937 = vpop.f32.mrf.mxu0
  %v1938 = vadd.f32 %v1870, %v1937
  %1939 = vmatmul.f32.gmra.mxu0 %v1839
  %v1940 = vpop.f32.mrf.mxu0
  %v1941 = vadd.f32 %v1870, %v1940
  %1942 = vmatmul.f32.gmra.mxu0 %v1840
  %v1943 = vpop.f32.mrf.mxu0
  %v1944 = vadd.f32 %v1870, %v1943
  %1945 = vmatmul.f32.gmra.mxu0 %v1841
  %v1946 = vpop.f32.mrf.mxu0
  %v1947 = vadd.f32 %v1870, %v1946
  %1948 = vmatmul.f32.gmra.mxu0 %v1842
  %v1949 = vpop.f32.mrf.mxu0
  %v1950 = vadd.f32 %v1870, %v1949
  %1951 = vmatmul.f32.gmra.mxu0 %v1843
  %v1952 = vpop.f32.mrf.mxu0
  %v1953 = vadd.f32 %v1870, %v1952
  %1954 = vdwg.mxu0
  %1955 = vmatpush.msra.mxu0 0.0
  %1956 = vmatpush.msra.mxu0 0.0
  %1957 = vmatpush.msra.mxu0 0.0
  %1958 = vmatpush.msra.mxu0 0.0
  %1959 = vmatpush.msra.mxu0 0.0
  %1960 = vmatpush.msra.mxu0 0.0
  %1961 = vmatpush.msra.mxu0 0.0
  %1962 = vmatpush.msra.mxu0 0.0
  %1963 = vmatpush.msra.mxu0 %v1867
  %1964 = vmatpush.msra.mxu0 %v1866
  %1965 = vmatpush.msra.mxu0 %v1865
  %1966 = vmatpush.msra.mxu0 %v1864
  %1967 = vmatpush.msra.mxu0 %v1863
  %1968 = vmatpush.msra.mxu0 %v1862
  %1969 = vmatpush.msra.mxu0 %v1861
  %1970 = vmatpush.msra.mxu0 %v1860
  %1971 = vmatmul.f32.gmra.mxu0 %v1872
  %v1972 = vpop.f32.mrf.mxu0
  %v1973 = vadd.f32 %v1920, %v1972
  %1974 = vmatmul.f32.gmra.mxu0 %v1874
  %v1975 = vpop.f32.mrf.mxu0
  %v1976 = vadd.f32 %v1923, %v1975
  %1977 = vmatmul.f32.gmra.mxu0 %v1876
  %v1978 = vpop.f32.mrf.mxu0
  %v1979 = vadd.f32 %v1926, %v1978
  %1980 = vmatmul.f32.gmra.mxu0 %v1878
  %v1981 = vpop.f32.mrf.mxu0
  %v1982 = vadd.f32 %v1929, %v1981
  %1983 = vmatmul.f32.gmra.mxu0 %v1880
  %v1984 = vpop.f32.mrf.mxu0
  %v1985 = vadd.f32 %v1932, %v1984
  %1986 = vmatmul.f32.gmra.mxu0 %v1882
  %v1987 = vpop.f32.mrf.mxu0
  %v1988 = vadd.f32 %v1935, %v1987
  %1989 = vmatmul.f32.gmra.mxu0 %v1885
  %v1990 = vpop.f32.mrf.mxu0
  %v1991 = vadd.f32 %v1938, %v1990
  %1992 = vmatmul.f32.gmra.mxu0 %v1888
  %v1993 = vpop.f32.mrf.mxu0
  %v1994 = vadd.f32 %v1941, %v1993
  %1995 = vmatmul.f32.gmra.mxu0 %v1891
  %v1996 = vpop.f32.mrf.mxu0
  %v1997 = vadd.f32 %v1944, %v1996
  %1998 = vmatmul.f32.gmra.mxu0 %v1894
  %v1999 = vpop.f32.mrf.mxu0
  %v2000 = vadd.f32 %v1947, %v1999
  %2001 = vmatmul.f32.gmra.mxu0 %v1897
  %v2002 = vpop.f32.mrf.mxu0
  %v2003 = vadd.f32 %v1950, %v2002
  %2004 = vmatmul.f32.gmra.mxu0 %v1900
  %v2005 = vpop.f32.mrf.mxu0
  %v2006 = vadd.f32 %v1953, %v2005
  %2007 = vdwg.mxu0
  %v2008 = vmax.f32 %v1973, 0.0
  %v2009 = vmax.f32 %v1976, 0.0
  %v2010 = vmax.f32 %v1979, 0.0
  %v2011 = vmax.f32 %v1982, 0.0
  %v2012 = vmax.f32 %v1985, 0.0
  %v2013 = vmax.f32 %v1988, 0.0
  %v2014 = vmax.f32 %v1991, 0.0
  %v2015 = vmax.f32 %v1994, 0.0
  %v2016 = vmax.f32 %v1997, 0.0
  %v2017 = vmax.f32 %v2000, 0.0
  %v2018 = vmax.f32 %v2003, 0.0
  %v2019 = vmax.f32 %v2006, 0.0
  %v2020 = vadd.f32 %v2008, %v2014
  %v2021 = vadd.f32 %v2009, %v2015
  %v2022 = vadd.f32 %v2010, %v2016
  %v2023 = vadd.f32 %v2011, %v2017
  %v2024 = vadd.f32 %v2012, %v2018
  %v2025 = vadd.f32 %v2013, %v2019
  %2032 = vrot.lane.b32.xlu0 %v2020, 64
  %v2033 = vpop.permute.xlu0 %2032
  %2034 = vrot.lane.b32.xlu0 %v2021, 64
  %v2035 = vpop.permute.xlu0 %2034
  %2036 = vrot.lane.b32.xlu0 %v2022, 64
  %v2037 = vpop.permute.xlu0 %2036
  %2038 = vrot.lane.b32.xlu0 %v2023, 64
  %v2039 = vpop.permute.xlu0 %2038
  %2040 = vrot.lane.b32.xlu0 %v2024, 64
  %v2041 = vpop.permute.xlu0 %2040
  %2042 = vrot.lane.b32.xlu0 %v2025, 64
  %v2043 = vpop.permute.xlu0 %2042
  %v2050 = vadd.f32 %v2020, %v2033
  %v2051 = vadd.f32 %v2021, %v2035
  %v2052 = vadd.f32 %v2022, %v2037
  %v2053 = vadd.f32 %v2023, %v2039
  %v2054 = vadd.f32 %v2024, %v2041
  %v2055 = vadd.f32 %v2025, %v2043
  %v2056 = vmul.f32 %v2050, 0.25
  %v2057 = vmul.f32 %v2051, 0.25
  %v2058 = vmul.f32 %v2052, 0.25
  %v2059 = vmul.f32 %v2053, 0.25
  %v2060 = vmul.f32 %v2054, 0.25
  %v2061 = vmul.f32 %v2055, 0.25
  %s2062 = scalar_lea.vmem [#allocation3], 96
  %2063 = vst.msk [vmem:[%s2062] sm:$0xff] %vm40, %v2056
  %2064 = vst.msk [vmem:[%s2062 + $0x8] sm:$0xff] %vm40, %v2057
  %2065 = vst.msk [vmem:[%s2062 + $0x10] sm:$0xff] %vm40, %v2058
  %2066 = vst.msk [vmem:[%s2062 + $0x18] sm:$0xff] %vm40, %v2059
  %2067 = vst.msk [vmem:[%s2062 + $0x20] sm:$0xff] %vm40, %v2060
  %2068 = vst.msk [vmem:[%s2062 + $0x28] sm:$0xff] %vm40, %v2061
  %v2069 = vld [vmem:[%s752] sm:$0xff]
  %v2070 = vld [vmem:[%s752 + $0x8] sm:$0xff]
  %v2071 = vld [vmem:[%s752 + $0x10] sm:$0xff]
  %v2072 = vld [vmem:[%s752 + $0x18] sm:$0xff]
  %v2073 = vld [vmem:[%s752 + $0x20] sm:$0xff]
  %v2074 = vld [vmem:[%s752 + $0x28] sm:$0xff]
  %v2075 = vld [vmem:[%s752 + $0x30] sm:$0xff]
  %v2076 = vld [vmem:[%s752 + $0x38] sm:$0xff]
  %v2077 = vld [vmem:[%s752 + $0x40] sm:$0xff]
  %v2078 = vld [vmem:[%s752 + $0x48] sm:$0xff]
  %v2079 = vld [vmem:[%s752 + $0x50] sm:$0xff]
  %v2080 = vld [vmem:[%s752 + $0x58] sm:$0xff]
  %v2081 = vld [vmem:[%s752 + $0x60] sm:$0xff]
  %v2082 = vld [vmem:[%s752 + $0x68] sm:$0xff]
  %v2083 = vld [vmem:[%s752 + $0x70] sm:$0xff]
  %v2084 = vld [vmem:[%s752 + $0x78] sm:$0xff]
  %v2085 = vld [vmem:[%s752 + $0x80] sm:$0xff]
  %v2086 = vld [vmem:[%s752 + $0x88] sm:$0xff]
  %v2087 = vld [vmem:[%s752 + $0x90] sm:$0xff]
  %v2088 = vld [vmem:[%s752 + $0x98] sm:$0xff]
  %v2089 = vld [vmem:[%s752 + $0xa0] sm:$0xff]
  %v2090 = vld [vmem:[%s752 + $0xa8] sm:$0xff]
  %v2091 = vld [vmem:[%s752 + $0xb0] sm:$0xff]
  %v2092 = vld [vmem:[%s752 + $0xb8] sm:$0xff]
  %2105 = vrot.lane.b32.xlu0 %v2075, 64
  %v2106 = vpop.permute.xlu0 %2105
  %2107 = vrot.lane.b32.xlu0 %v2076, 64
  %v2108 = vpop.permute.xlu0 %2107
  %2109 = vrot.lane.b32.xlu0 %v2077, 64
  %v2110 = vpop.permute.xlu0 %2109
  %2111 = vrot.lane.b32.xlu0 %v2078, 64
  %v2112 = vpop.permute.xlu0 %2111
  %2113 = vrot.lane.b32.xlu0 %v2079, 64
  %v2114 = vpop.permute.xlu0 %2113
  %2115 = vrot.lane.b32.xlu0 %v2080, 64
  %v2116 = vpop.permute.xlu0 %2115
  %2117 = vrot.lane.b32.xlu0 %v2081, 64
  %v2118 = vpop.permute.xlu0 %2117
  %2119 = vrot.lane.b32.xlu0 %v2082, 64
  %v2120 = vpop.permute.xlu0 %2119
  %2121 = vrot.lane.b32.xlu0 %v2083, 64
  %v2122 = vpop.permute.xlu0 %2121
  %2123 = vrot.lane.b32.xlu0 %v2084, 64
  %v2124 = vpop.permute.xlu0 %2123
  %2125 = vrot.lane.b32.xlu0 %v2085, 64
  %v2126 = vpop.permute.xlu0 %2125
  %2127 = vrot.lane.b32.xlu0 %v2086, 64
  %v2128 = vpop.permute.xlu0 %2127
  %v2141 = vsel %vm40, %v2069, %v2106
  %v2142 = vsel %vm40, %v2070, %v2108
  %v2143 = vsel %vm40, %v2071, %v2110
  %v2144 = vsel %vm40, %v2072, %v2112
  %v2145 = vsel %vm40, %v2073, %v2114
  %v2146 = vsel %vm40, %v2074, %v2116
  %v2147 = vsel %vm40, %v2075, %v2118
  %v2148 = vsel %vm40, %v2076, %v2120
  %v2149 = vsel %vm40, %v2077, %v2122
  %v2150 = vsel %vm40, %v2078, %v2124
  %v2151 = vsel %vm40, %v2079, %v2126
  %v2152 = vsel %vm40, %v2080, %v2128
  %v2153 = vld [vmem:[%s3] sm:$0xff]
  %v2154 = vld [vmem:[%s3 + $0x8] sm:$0xff]
  %v2155 = vld [vmem:[%s3 + $0x10] sm:$0xff]
  %v2156 = vld [vmem:[%s3 + $0x18] sm:$0xff]
  %v2157 = vld [vmem:[%s3 + $0x20] sm:$0xff]
  %v2158 = vld [vmem:[%s3 + $0x28] sm:$0xff]
  %v2159 = vld [vmem:[%s3 + $0x30] sm:$0xff]
  %v2160 = vld [vmem:[%s3 + $0x38] sm:$0xff]
  %v2161 = vld [vmem:[%s3 + $0x40] sm:$0xff]
  %v2162 = vld [vmem:[%s3 + $0x48] sm:$0xff]
  %v2163 = vld [vmem:[%s3 + $0x50] sm:$0xff]
  %v2164 = vld [vmem:[%s3 + $0x58] sm:$0xff]
  %v2165 = vld [vmem:[%s3 + $0x60] sm:$0xff]
  %v2166 = vld [vmem:[%s3 + $0x68] sm:$0xff]
  %v2167 = vld [vmem:[%s3 + $0x70] sm:$0xff]
  %v2168 = vld [vmem:[%s3 + $0x78] sm:$0xff]
  %v2169 = vld [vmem:[%s3 + $0x80] sm:$0xff]
  %v2170 = vld [vmem:[%s3 + $0x88] sm:$0xff]
  %v2171 = vld [vmem:[%s3 + $0x90] sm:$0xff]
  %v2172 = vld [vmem:[%s3 + $0x98] sm:$0xff]
  %v2173 = vld [vmem:[%s3 + $0xa0] sm:$0xff]
  %v2174 = vld [vmem:[%s3 + $0xa8] sm:$0xff]
  %v2175 = vld [vmem:[%s3 + $0xb0] sm:$0xff]
  %v2176 = vld [vmem:[%s3 + $0xb8] sm:$0xff]
  %v2177 = vld [vmem:[%s4] sm:$0x1]
  %v2179 = vperm.slane %v2177, 0
  %v2181 = vsel %vm40, %v2081, 0
  %v2183 = vsel %vm40, %v2082, 0
  %v2185 = vsel %vm40, %v2083, 0
  %v2187 = vsel %vm40, %v2084, 0
  %v2189 = vsel %vm40, %v2085, 0
  %v2191 = vsel %vm40, %v2086, 0
  %v2194 = vsel %vm40, %v2087, 0
  %v2197 = vsel %vm40, %v2088, 0
  %v2200 = vsel %vm40, %v2089, 0
  %v2203 = vsel %vm40, %v2090, 0
  %v2206 = vsel %vm40, %v2091, 0
  %v2209 = vsel %vm40, %v2092, 0
  %2211 = vmatpush.msra.mxu0 %v2168
  %2212 = vmatpush.msra.mxu0 %v2167
  %2213 = vmatpush.msra.mxu0 %v2166
  %2214 = vmatpush.msra.mxu0 %v2165
  %2215 = vmatpush.msra.mxu0 %v2164
  %2216 = vmatpush.msra.mxu0 %v2163
  %2217 = vmatpush.msra.mxu0 %v2162
  %2218 = vmatpush.msra.mxu0 %v2161
  %2219 = vmatpush.msra.mxu0 %v2160
  %2220 = vmatpush.msra.mxu0 %v2159
  %2221 = vmatpush.msra.mxu0 %v2158
  %2222 = vmatpush.msra.mxu0 %v2157
  %2223 = vmatpush.msra.mxu0 %v2156
  %2224 = vmatpush.msra.mxu0 %v2155
  %2225 = vmatpush.msra.mxu0 %v2154
  %2226 = vmatpush.msra.mxu0 %v2153
  %2227 = vmatmul.f32.gmra.mxu0 %v2141
  %v2228 = vpop.f32.mrf.mxu0
  %v2229 = vadd.f32 %v2179, %v2228
  %2230 = vmatmul.f32.gmra.mxu0 %v2142
  %v2231 = vpop.f32.mrf.mxu0
  %v2232 = vadd.f32 %v2179, %v2231
  %2233 = vmatmul.f32.gmra.mxu0 %v2143
  %v2234 = vpop.f32.mrf.mxu0
  %v2235 = vadd.f32 %v2179, %v2234
  %2236 = vmatmul.f32.gmra.mxu0 %v2144
  %v2237 = vpop.f32.mrf.mxu0
  %v2238 = vadd.f32 %v2179, %v2237
  %2239 = vmatmul.f32.gmra.mxu0 %v2145
  %v2240 = vpop.f32.mrf.mxu0
  %v2241 = vadd.f32 %v2179, %v2240
  %2242 = vmatmul.f32.gmra.mxu0 %v2146
  %v2243 = vpop.f32.mrf.mxu0
  %v2244 = vadd.f32 %v2179, %v2243
  %2245 = vmatmul.f32.gmra.mxu0 %v2147
  %v2246 = vpop.f32.mrf.mxu0
  %v2247 = vadd.f32 %v2179, %v2246
  %2248 = vmatmul.f32.gmra.mxu0 %v2148
  %v2249 = vpop.f32.mrf.mxu0
  %v2250 = vadd.f32 %v2179, %v2249
  %2251 = vmatmul.f32.gmra.mxu0 %v2149
  %v2252 = vpop.f32.mrf.mxu0
  %v2253 = vadd.f32 %v2179, %v2252
  %2254 = vmatmul.f32.gmra.mxu0 %v2150
  %v2255 = vpop.f32.mrf.mxu0
  %v2256 = vadd.f32 %v2179, %v2255
  %2257 = vmatmul.f32.gmra.mxu0 %v2151
  %v2258 = vpop.f32.mrf.mxu0
  %v2259 = vadd.f32 %v2179, %v2258
  %2260 = vmatmul.f32.gmra.mxu0 %v2152
  %v2261 = vpop.f32.mrf.mxu0
  %v2262 = vadd.f32 %v2179, %v2261
  %2263 = vdwg.mxu0
  %2264 = vmatpush.msra.mxu0 0.0
  %2265 = vmatpush.msra.mxu0 0.0
  %2266 = vmatpush.msra.mxu0 0.0
  %2267 = vmatpush.msra.mxu0 0.0
  %2268 = vmatpush.msra.mxu0 0.0
  %2269 = vmatpush.msra.mxu0 0.0
  %2270 = vmatpush.msra.mxu0 0.0
  %2271 = vmatpush.msra.mxu0 0.0
  %2272 = vmatpush.msra.mxu0 %v2176
  %2273 = vmatpush.msra.mxu0 %v2175
  %2274 = vmatpush.msra.mxu0 %v2174
  %2275 = vmatpush.msra.mxu0 %v2173
  %2276 = vmatpush.msra.mxu0 %v2172
  %2277 = vmatpush.msra.mxu0 %v2171
  %2278 = vmatpush.msra.mxu0 %v2170
  %2279 = vmatpush.msra.mxu0 %v2169
  %2280 = vmatmul.f32.gmra.mxu0 %v2181
  %v2281 = vpop.f32.mrf.mxu0
  %v2282 = vadd.f32 %v2229, %v2281
  %2283 = vmatmul.f32.gmra.mxu0 %v2183
  %v2284 = vpop.f32.mrf.mxu0
  %v2285 = vadd.f32 %v2232, %v2284
  %2286 = vmatmul.f32.gmra.mxu0 %v2185
  %v2287 = vpop.f32.mrf.mxu0
  %v2288 = vadd.f32 %v2235, %v2287
  %2289 = vmatmul.f32.gmra.mxu0 %v2187
  %v2290 = vpop.f32.mrf.mxu0
  %v2291 = vadd.f32 %v2238, %v2290
  %2292 = vmatmul.f32.gmra.mxu0 %v2189
  %v2293 = vpop.f32.mrf.mxu0
  %v2294 = vadd.f32 %v2241, %v2293
  %2295 = vmatmul.f32.gmra.mxu0 %v2191
  %v2296 = vpop.f32.mrf.mxu0
  %v2297 = vadd.f32 %v2244, %v2296
  %2298 = vmatmul.f32.gmra.mxu0 %v2194
  %v2299 = vpop.f32.mrf.mxu0
  %v2300 = vadd.f32 %v2247, %v2299
  %2301 = vmatmul.f32.gmra.mxu0 %v2197
  %v2302 = vpop.f32.mrf.mxu0
  %v2303 = vadd.f32 %v2250, %v2302
  %2304 = vmatmul.f32.gmra.mxu0 %v2200
  %v2305 = vpop.f32.mrf.mxu0
  %v2306 = vadd.f32 %v2253, %v2305
  %2307 = vmatmul.f32.gmra.mxu0 %v2203
  %v2308 = vpop.f32.mrf.mxu0
  %v2309 = vadd.f32 %v2256, %v2308
  %2310 = vmatmul.f32.gmra.mxu0 %v2206
  %v2311 = vpop.f32.mrf.mxu0
  %v2312 = vadd.f32 %v2259, %v2311
  %2313 = vmatmul.f32.gmra.mxu0 %v2209
  %v2314 = vpop.f32.mrf.mxu0
  %v2315 = vadd.f32 %v2262, %v2314
  %2316 = vdwg.mxu0
  %v2317 = vmax.f32 %v2282, 0.0
  %v2318 = vmax.f32 %v2285, 0.0
  %v2319 = vmax.f32 %v2288, 0.0
  %v2320 = vmax.f32 %v2291, 0.0
  %v2321 = vmax.f32 %v2294, 0.0
  %v2322 = vmax.f32 %v2297, 0.0
  %v2323 = vmax.f32 %v2300, 0.0
  %v2324 = vmax.f32 %v2303, 0.0
  %v2325 = vmax.f32 %v2306, 0.0
  %v2326 = vmax.f32 %v2309, 0.0
  %v2327 = vmax.f32 %v2312, 0.0
  %v2328 = vmax.f32 %v2315, 0.0
  %v2329 = vadd.f32 %v2317, %v2323
  %v2330 = vadd.f32 %v2318, %v2324
  %v2331 = vadd.f32 %v2319, %v2325
  %v2332 = vadd.f32 %v2320, %v2326
  %v2333 = vadd.f32 %v2321, %v2327
  %v2334 = vadd.f32 %v2322, %v2328
  %2341 = vrot.lane.b32.xlu0 %v2329, 64
  %v2342 = vpop.permute.xlu0 %2341
  %2343 = vrot.lane.b32.xlu0 %v2330, 64
  %v2344 = vpop.permute.xlu0 %2343
  %2345 = vrot.lane.b32.xlu0 %v2331, 64
  %v2346 = vpop.permute.xlu0 %2345
  %2347 = vrot.lane.b32.xlu0 %v2332, 64
  %v2348 = vpop.permute.xlu0 %2347
  %2349 = vrot.lane.b32.xlu0 %v2333, 64
  %v2350 = vpop.permute.xlu0 %2349
  %2351 = vrot.lane.b32.xlu0 %v2334, 64
  %v2352 = vpop.permute.xlu0 %2351
  %v2359 = vadd.f32 %v2329, %v2342
  %v2360 = vadd.f32 %v2330, %v2344
  %v2361 = vadd.f32 %v2331, %v2346
  %v2362 = vadd.f32 %v2332, %v2348
  %v2363 = vadd.f32 %v2333, %v2350
  %v2364 = vadd.f32 %v2334, %v2352
  %v2365 = vmul.f32 %v2359, 0.25
  %v2366 = vmul.f32 %v2360, 0.25
  %v2367 = vmul.f32 %v2361, 0.25
  %v2368 = vmul.f32 %v2362, 0.25
  %v2369 = vmul.f32 %v2363, 0.25
  %v2370 = vmul.f32 %v2364, 0.25
  %s2371 = scalar_lea.vmem [#allocation3], 144
  %2372 = vst.msk [vmem:[%s2371] sm:$0xff] %vm40, %v2365
  %2373 = vst.msk [vmem:[%s2371 + $0x8] sm:$0xff] %vm40, %v2366
  %2374 = vst.msk [vmem:[%s2371 + $0x10] sm:$0xff] %vm40, %v2367
  %2375 = vst.msk [vmem:[%s2371 + $0x18] sm:$0xff] %vm40, %v2368
  %2376 = vst.msk [vmem:[%s2371 + $0x20] sm:$0xff] %vm40, %v2369
  %2377 = vst.msk [vmem:[%s2371 + $0x28] sm:$0xff] %vm40, %v2370
  %v2378 = vld [vmem:[%s1098] sm:$0xff]
  %v2379 = vld [vmem:[%s1098 + $0x8] sm:$0xff]
  %v2380 = vld [vmem:[%s1098 + $0x10] sm:$0xff]
  %v2381 = vld [vmem:[%s1098 + $0x18] sm:$0xff]
  %v2382 = vld [vmem:[%s1098 + $0x20] sm:$0xff]
  %v2383 = vld [vmem:[%s1098 + $0x28] sm:$0xff]
  %v2384 = vld [vmem:[%s1098 + $0x30] sm:$0xff]
  %v2385 = vld [vmem:[%s1098 + $0x38] sm:$0xff]
  %v2386 = vld [vmem:[%s1098 + $0x40] sm:$0xff]
  %v2387 = vld [vmem:[%s1098 + $0x48] sm:$0xff]
  %v2388 = vld [vmem:[%s1098 + $0x50] sm:$0xff]
  %v2389 = vld [vmem:[%s1098 + $0x58] sm:$0xff]
  %v2390 = vld [vmem:[%s1098 + $0x60] sm:$0xff]
  %v2391 = vld [vmem:[%s1098 + $0x68] sm:$0xff]
  %v2392 = vld [vmem:[%s1098 + $0x70] sm:$0xff]
  %v2393 = vld [vmem:[%s1098 + $0x78] sm:$0xff]
  %v2394 = vld [vmem:[%s1098 + $0x80] sm:$0xff]
  %v2395 = vld [vmem:[%s1098 + $0x88] sm:$0xff]
  %v2396 = vld [vmem:[%s1098 + $0x90] sm:$0xff]
  %v2397 = vld [vmem:[%s1098 + $0x98] sm:$0xff]
  %v2398 = vld [vmem:[%s1098 + $0xa0] sm:$0xff]
  %v2399 = vld [vmem:[%s1098 + $0xa8] sm:$0xff]
  %v2400 = vld [vmem:[%s1098 + $0xb0] sm:$0xff]
  %v2401 = vld [vmem:[%s1098 + $0xb8] sm:$0xff]
  %2414 = vrot.lane.b32.xlu0 %v2384, 64
  %v2415 = vpop.permute.xlu0 %2414
  %2416 = vrot.lane.b32.xlu0 %v2385, 64
  %v2417 = vpop.permute.xlu0 %2416
  %2418 = vrot.lane.b32.xlu0 %v2386, 64
  %v2419 = vpop.permute.xlu0 %2418
  %2420 = vrot.lane.b32.xlu0 %v2387, 64
  %v2421 = vpop.permute.xlu0 %2420
  %2422 = vrot.lane.b32.xlu0 %v2388, 64
  %v2423 = vpop.permute.xlu0 %2422
  %2424 = vrot.lane.b32.xlu0 %v2389, 64
  %v2425 = vpop.permute.xlu0 %2424
  %2426 = vrot.lane.b32.xlu0 %v2390, 64
  %v2427 = vpop.permute.xlu0 %2426
  %2428 = vrot.lane.b32.xlu0 %v2391, 64
  %v2429 = vpop.permute.xlu0 %2428
  %2430 = vrot.lane.b32.xlu0 %v2392, 64
  %v2431 = vpop.permute.xlu0 %2430
  %2432 = vrot.lane.b32.xlu0 %v2393, 64
  %v2433 = vpop.permute.xlu0 %2432
  %2434 = vrot.lane.b32.xlu0 %v2394, 64
  %v2435 = vpop.permute.xlu0 %2434
  %2436 = vrot.lane.b32.xlu0 %v2395, 64
  %v2437 = vpop.permute.xlu0 %2436
  %v2450 = vsel %vm40, %v2378, %v2415
  %v2451 = vsel %vm40, %v2379, %v2417
  %v2452 = vsel %vm40, %v2380, %v2419
  %v2453 = vsel %vm40, %v2381, %v2421
  %v2454 = vsel %vm40, %v2382, %v2423
  %v2455 = vsel %vm40, %v2383, %v2425
  %v2456 = vsel %vm40, %v2384, %v2427
  %v2457 = vsel %vm40, %v2385, %v2429
  %v2458 = vsel %vm40, %v2386, %v2431
  %v2459 = vsel %vm40, %v2387, %v2433
  %v2460 = vsel %vm40, %v2388, %v2435
  %v2461 = vsel %vm40, %v2389, %v2437
  %v2462 = vld [vmem:[%s3] sm:$0xff]
  %v2463 = vld [vmem:[%s3 + $0x8] sm:$0xff]
  %v2464 = vld [vmem:[%s3 + $0x10] sm:$0xff]
  %v2465 = vld [vmem:[%s3 + $0x18] sm:$0xff]
  %v2466 = vld [vmem:[%s3 + $0x20] sm:$0xff]
  %v2467 = vld [vmem:[%s3 + $0x28] sm:$0xff]
  %v2468 = vld [vmem:[%s3 + $0x30] sm:$0xff]
  %v2469 = vld [vmem:[%s3 + $0x38] sm:$0xff]
  %v2470 = vld [vmem:[%s3 + $0x40] sm:$0xff]
  %v2471 = vld [vmem:[%s3 + $0x48] sm:$0xff]
  %v2472 = vld [vmem:[%s3 + $0x50] sm:$0xff]
  %v2473 = vld [vmem:[%s3 + $0x58] sm:$0xff]
  %v2474 = vld [vmem:[%s3 + $0x60] sm:$0xff]
  %v2475 = vld [vmem:[%s3 + $0x68] sm:$0xff]
  %v2476 = vld [vmem:[%s3 + $0x70] sm:$0xff]
  %v2477 = vld [vmem:[%s3 + $0x78] sm:$0xff]
  %v2478 = vld [vmem:[%s3 + $0x80] sm:$0xff]
  %v2479 = vld [vmem:[%s3 + $0x88] sm:$0xff]
  %v2480 = vld [vmem:[%s3 + $0x90] sm:$0xff]
  %v2481 = vld [vmem:[%s3 + $0x98] sm:$0xff]
  %v2482 = vld [vmem:[%s3 + $0xa0] sm:$0xff]
  %v2483 = vld [vmem:[%s3 + $0xa8] sm:$0xff]
  %v2484 = vld [vmem:[%s3 + $0xb0] sm:$0xff]
  %v2485 = vld [vmem:[%s3 + $0xb8] sm:$0xff]
  %v2486 = vld [vmem:[%s4] sm:$0x1]
  %v2488 = vperm.slane %v2486, 0
  %v2490 = vsel %vm40, %v2390, 0
  %v2492 = vsel %vm40, %v2391, 0
  %v2494 = vsel %vm40, %v2392, 0
  %v2496 = vsel %vm40, %v2393, 0
  %v2498 = vsel %vm40, %v2394, 0
  %v2500 = vsel %vm40, %v2395, 0
  %v2503 = vsel %vm40, %v2396, 0
  %v2506 = vsel %vm40, %v2397, 0
  %v2509 = vsel %vm40, %v2398, 0
  %v2512 = vsel %vm40, %v2399, 0
  %v2515 = vsel %vm40, %v2400, 0
  %v2518 = vsel %vm40, %v2401, 0
  %2520 = vmatpush.msra.mxu0 %v2477
  %2521 = vmatpush.msra.mxu0 %v2476
  %2522 = vmatpush.msra.mxu0 %v2475
  %2523 = vmatpush.msra.mxu0 %v2474
  %2524 = vmatpush.msra.mxu0 %v2473
  %2525 = vmatpush.msra.mxu0 %v2472
  %2526 = vmatpush.msra.mxu0 %v2471
  %2527 = vmatpush.msra.mxu0 %v2470
  %2528 = vmatpush.msra.mxu0 %v2469
  %2529 = vmatpush.msra.mxu0 %v2468
  %2530 = vmatpush.msra.mxu0 %v2467
  %2531 = vmatpush.msra.mxu0 %v2466
  %2532 = vmatpush.msra.mxu0 %v2465
  %2533 = vmatpush.msra.mxu0 %v2464
  %2534 = vmatpush.msra.mxu0 %v2463
  %2535 = vmatpush.msra.mxu0 %v2462
  %2536 = vmatmul.f32.gmra.mxu0 %v2450
  %v2537 = vpop.f32.mrf.mxu0
  %v2538 = vadd.f32 %v2488, %v2537
  %2539 = vmatmul.f32.gmra.mxu0 %v2451
  %v2540 = vpop.f32.mrf.mxu0
  %v2541 = vadd.f32 %v2488, %v2540
  %2542 = vmatmul.f32.gmra.mxu0 %v2452
  %v2543 = vpop.f32.mrf.mxu0
  %v2544 = vadd.f32 %v2488, %v2543
  %2545 = vmatmul.f32.gmra.mxu0 %v2453
  %v2546 = vpop.f32.mrf.mxu0
  %v2547 = vadd.f32 %v2488, %v2546
  %2548 = vmatmul.f32.gmra.mxu0 %v2454
  %v2549 = vpop.f32.mrf.mxu0
  %v2550 = vadd.f32 %v2488, %v2549
  %2551 = vmatmul.f32.gmra.mxu0 %v2455
  %v2552 = vpop.f32.mrf.mxu0
  %v2553 = vadd.f32 %v2488, %v2552
  %2554 = vmatmul.f32.gmra.mxu0 %v2456
  %v2555 = vpop.f32.mrf.mxu0
  %v2556 = vadd.f32 %v2488, %v2555
  %2557 = vmatmul.f32.gmra.mxu0 %v2457
  %v2558 = vpop.f32.mrf.mxu0
  %v2559 = vadd.f32 %v2488, %v2558
  %2560 = vmatmul.f32.gmra.mxu0 %v2458
  %v2561 = vpop.f32.mrf.mxu0
  %v2562 = vadd.f32 %v2488, %v2561
  %2563 = vmatmul.f32.gmra.mxu0 %v2459
  %v2564 = vpop.f32.mrf.mxu0
  %v2565 = vadd.f32 %v2488, %v2564
  %2566 = vmatmul.f32.gmra.mxu0 %v2460
  %v2567 = vpop.f32.mrf.mxu0
  %v2568 = vadd.f32 %v2488, %v2567
  %2569 = vmatmul.f32.gmra.mxu0 %v2461
  %v2570 = vpop.f32.mrf.mxu0
  %v2571 = vadd.f32 %v2488, %v2570
  %2572 = vdwg.mxu0
  %2573 = vmatpush.msra.mxu0 0.0
  %2574 = vmatpush.msra.mxu0 0.0
  %2575 = vmatpush.msra.mxu0 0.0
  %2576 = vmatpush.msra.mxu0 0.0
  %2577 = vmatpush.msra.mxu0 0.0
  %2578 = vmatpush.msra.mxu0 0.0
  %2579 = vmatpush.msra.mxu0 0.0
  %2580 = vmatpush.msra.mxu0 0.0
  %2581 = vmatpush.msra.mxu0 %v2485
  %2582 = vmatpush.msra.mxu0 %v2484
  %2583 = vmatpush.msra.mxu0 %v2483
  %2584 = vmatpush.msra.mxu0 %v2482
  %2585 = vmatpush.msra.mxu0 %v2481
  %2586 = vmatpush.msra.mxu0 %v2480
  %2587 = vmatpush.msra.mxu0 %v2479
  %2588 = vmatpush.msra.mxu0 %v2478
  %2589 = vmatmul.f32.gmra.mxu0 %v2490
  %v2590 = vpop.f32.mrf.mxu0
  %v2591 = vadd.f32 %v2538, %v2590
  %2592 = vmatmul.f32.gmra.mxu0 %v2492
  %v2593 = vpop.f32.mrf.mxu0
  %v2594 = vadd.f32 %v2541, %v2593
  %2595 = vmatmul.f32.gmra.mxu0 %v2494
  %v2596 = vpop.f32.mrf.mxu0
  %v2597 = vadd.f32 %v2544, %v2596
  %2598 = vmatmul.f32.gmra.mxu0 %v2496
  %v2599 = vpop.f32.mrf.mxu0
  %v2600 = vadd.f32 %v2547, %v2599
  %2601 = vmatmul.f32.gmra.mxu0 %v2498
  %v2602 = vpop.f32.mrf.mxu0
  %v2603 = vadd.f32 %v2550, %v2602
  %2604 = vmatmul.f32.gmra.mxu0 %v2500
  %v2605 = vpop.f32.mrf.mxu0
  %v2606 = vadd.f32 %v2553, %v2605
  %2607 = vmatmul.f32.gmra.mxu0 %v2503
  %v2608 = vpop.f32.mrf.mxu0
  %v2609 = vadd.f32 %v2556, %v2608
  %2610 = vmatmul.f32.gmra.mxu0 %v2506
  %v2611 = vpop.f32.mrf.mxu0
  %v2612 = vadd.f32 %v2559, %v2611
  %2613 = vmatmul.f32.gmra.mxu0 %v2509
  %v2614 = vpop.f32.mrf.mxu0
  %v2615 = vadd.f32 %v2562, %v2614
  %2616 = vmatmul.f32.gmra.mxu0 %v2512
  %v2617 = vpop.f32.mrf.mxu0
  %v2618 = vadd.f32 %v2565, %v2617
  %2619 = vmatmul.f32.gmra.mxu0 %v2515
  %v2620 = vpop.f32.mrf.mxu0
  %v2621 = vadd.f32 %v2568, %v2620
  %2622 = vmatmul.f32.gmra.mxu0 %v2518
  %v2623 = vpop.f32.mrf.mxu0
  %v2624 = vadd.f32 %v2571, %v2623
  %2625 = vdwg.mxu0
  %v2626 = vmax.f32 %v2591, 0.0
  %v2627 = vmax.f32 %v2594, 0.0
  %v2628 = vmax.f32 %v2597, 0.0
  %v2629 = vmax.f32 %v2600, 0.0
  %v2630 = vmax.f32 %v2603, 0.0
  %v2631 = vmax.f32 %v2606, 0.0
  %v2632 = vmax.f32 %v2609, 0.0
  %v2633 = vmax.f32 %v2612, 0.0
  %v2634 = vmax.f32 %v2615, 0.0
  %v2635 = vmax.f32 %v2618, 0.0
  %v2636 = vmax.f32 %v2621, 0.0
  %v2637 = vmax.f32 %v2624, 0.0
  %v2638 = vadd.f32 %v2626, %v2632
  %v2639 = vadd.f32 %v2627, %v2633
  %v2640 = vadd.f32 %v2628, %v2634
  %v2641 = vadd.f32 %v2629, %v2635
  %v2642 = vadd.f32 %v2630, %v2636
  %v2643 = vadd.f32 %v2631, %v2637
  %2650 = vrot.lane.b32.xlu0 %v2638, 64
  %v2651 = vpop.permute.xlu0 %2650
  %2652 = vrot.lane.b32.xlu0 %v2639, 64
  %v2653 = vpop.permute.xlu0 %2652
  %2654 = vrot.lane.b32.xlu0 %v2640, 64
  %v2655 = vpop.permute.xlu0 %2654
  %2656 = vrot.lane.b32.xlu0 %v2641, 64
  %v2657 = vpop.permute.xlu0 %2656
  %2658 = vrot.lane.b32.xlu0 %v2642, 64
  %v2659 = vpop.permute.xlu0 %2658
  %2660 = vrot.lane.b32.xlu0 %v2643, 64
  %v2661 = vpop.permute.xlu0 %2660
  %v2668 = vadd.f32 %v2638, %v2651
  %v2669 = vadd.f32 %v2639, %v2653
  %v2670 = vadd.f32 %v2640, %v2655
  %v2671 = vadd.f32 %v2641, %v2657
  %v2672 = vadd.f32 %v2642, %v2659
  %v2673 = vadd.f32 %v2643, %v2661
  %v2674 = vmul.f32 %v2668, 0.25
  %v2675 = vmul.f32 %v2669, 0.25
  %v2676 = vmul.f32 %v2670, 0.25
  %v2677 = vmul.f32 %v2671, 0.25
  %v2678 = vmul.f32 %v2672, 0.25
  %v2679 = vmul.f32 %v2673, 0.25
  %s2680 = scalar_lea.vmem [#allocation3], 192
  %2681 = vst.msk [vmem:[%s2680] sm:$0xff] %vm40, %v2674
  %2682 = vst.msk [vmem:[%s2680 + $0x8] sm:$0xff] %vm40, %v2675
  %2683 = vst.msk [vmem:[%s2680 + $0x10] sm:$0xff] %vm40, %v2676
  %2684 = vst.msk [vmem:[%s2680 + $0x18] sm:$0xff] %vm40, %v2677
  %2685 = vst.msk [vmem:[%s2680 + $0x20] sm:$0xff] %vm40, %v2678
  %2686 = vst.msk [vmem:[%s2680 + $0x28] sm:$0xff] %vm40, %v2679
  %v2687 = vld [vmem:[#allocation3] sm:$0xff]
  %v2688 = vld [vmem:[#allocation3 + $0x8] sm:$0xff]
  %v2689 = vld [vmem:[#allocation3 + $0x10] sm:$0xff]
  %v2690 = vld [vmem:[#allocation3 + $0x18] sm:$0xff]
  %v2691 = vld [vmem:[#allocation3 + $0x20] sm:$0xff]
  %v2692 = vld [vmem:[#allocation3 + $0x28] sm:$0xff]
  %v2693 = vld [vmem:[#allocation3 + $0x30] sm:$0xff]
  %v2694 = vld [vmem:[#allocation3 + $0x38] sm:$0xff]
  %v2695 = vld [vmem:[#allocation3 + $0x40] sm:$0xff]
  %v2696 = vld [vmem:[#allocation3 + $0x48] sm:$0xff]
  %v2697 = vld [vmem:[#allocation3 + $0x50] sm:$0xff]
  %v2698 = vld [vmem:[#allocation3 + $0x58] sm:$0xff]
  %v2699 = vld [vmem:[#allocation3 + $0x60] sm:$0xff]
  %v2700 = vld [vmem:[#allocation3 + $0x68] sm:$0xff]
  %v2701 = vld [vmem:[#allocation3 + $0x70] sm:$0xff]
  %v2702 = vld [vmem:[#allocation3 + $0x78] sm:$0xff]
  %v2703 = vld [vmem:[#allocation3 + $0x80] sm:$0xff]
  %v2704 = vld [vmem:[#allocation3 + $0x88] sm:$0xff]
  %v2705 = vld [vmem:[#allocation3 + $0x90] sm:$0xff]
  %v2706 = vld [vmem:[#allocation3 + $0x98] sm:$0xff]
  %v2707 = vld [vmem:[#allocation3 + $0xa0] sm:$0xff]
  %v2708 = vld [vmem:[#allocation3 + $0xa8] sm:$0xff]
  %v2709 = vld [vmem:[#allocation3 + $0xb0] sm:$0xff]
  %v2710 = vld [vmem:[#allocation3 + $0xb8] sm:$0xff]
  %2723 = vrot.lane.b32.xlu0 %v2693, 64
  %v2724 = vpop.permute.xlu0 %2723
  %2725 = vrot.lane.b32.xlu0 %v2694, 64
  %v2726 = vpop.permute.xlu0 %2725
  %2727 = vrot.lane.b32.xlu0 %v2695, 64
  %v2728 = vpop.permute.xlu0 %2727
  %2729 = vrot.lane.b32.xlu0 %v2696, 64
  %v2730 = vpop.permute.xlu0 %2729
  %2731 = vrot.lane.b32.xlu0 %v2697, 64
  %v2732 = vpop.permute.xlu0 %2731
  %2733 = vrot.lane.b32.xlu0 %v2698, 64
  %v2734 = vpop.permute.xlu0 %2733
  %2735 = vrot.lane.b32.xlu0 %v2699, 64
  %v2736 = vpop.permute.xlu0 %2735
  %2737 = vrot.lane.b32.xlu0 %v2700, 64
  %v2738 = vpop.permute.xlu0 %2737
  %2739 = vrot.lane.b32.xlu0 %v2701, 64
  %v2740 = vpop.permute.xlu0 %2739
  %2741 = vrot.lane.b32.xlu0 %v2702, 64
  %v2742 = vpop.permute.xlu0 %2741
  %2743 = vrot.lane.b32.xlu0 %v2703, 64
  %v2744 = vpop.permute.xlu0 %2743
  %2745 = vrot.lane.b32.xlu0 %v2704, 64
  %v2746 = vpop.permute.xlu0 %2745
  %v2759 = vsel %vm40, %v2687, %v2724
  %v2760 = vsel %vm40, %v2688, %v2726
  %v2761 = vsel %vm40, %v2689, %v2728
  %v2762 = vsel %vm40, %v2690, %v2730
  %v2763 = vsel %vm40, %v2691, %v2732
  %v2764 = vsel %vm40, %v2692, %v2734
  %v2765 = vsel %vm40, %v2693, %v2736
  %v2766 = vsel %vm40, %v2694, %v2738
  %v2767 = vsel %vm40, %v2695, %v2740
  %v2768 = vsel %vm40, %v2696, %v2742
  %v2769 = vsel %vm40, %v2697, %v2744
  %v2770 = vsel %vm40, %v2698, %v2746
  %v2771 = vld [vmem:[%s5] sm:$0xff]
  %v2772 = vld [vmem:[%s5 + $0x8] sm:$0xff]
  %v2773 = vld [vmem:[%s5 + $0x10] sm:$0xff]
  %v2774 = vld [vmem:[%s5 + $0x18] sm:$0xff]
  %v2775 = vld [vmem:[%s5 + $0x20] sm:$0xff]
  %v2776 = vld [vmem:[%s5 + $0x28] sm:$0xff]
  %v2777 = vld [vmem:[%s5 + $0x30] sm:$0xff]
  %v2778 = vld [vmem:[%s5 + $0x38] sm:$0xff]
  %v2779 = vld [vmem:[%s5 + $0x40] sm:$0xff]
  %v2780 = vld [vmem:[%s5 + $0x48] sm:$0xff]
  %v2781 = vld [vmem:[%s5 + $0x50] sm:$0xff]
  %v2782 = vld [vmem:[%s5 + $0x58] sm:$0xff]
  %v2783 = vld [vmem:[%s5 + $0x60] sm:$0xff]
  %v2784 = vld [vmem:[%s5 + $0x68] sm:$0xff]
  %v2785 = vld [vmem:[%s5 + $0x70] sm:$0xff]
  %v2786 = vld [vmem:[%s5 + $0x78] sm:$0xff]
  %v2787 = vld [vmem:[%s5 + $0x80] sm:$0xff]
  %v2788 = vld [vmem:[%s5 + $0x88] sm:$0xff]
  %v2789 = vld [vmem:[%s5 + $0x90] sm:$0xff]
  %v2790 = vld [vmem:[%s5 + $0x98] sm:$0xff]
  %v2791 = vld [vmem:[%s5 + $0xa0] sm:$0xff]
  %v2792 = vld [vmem:[%s5 + $0xa8] sm:$0xff]
  %v2793 = vld [vmem:[%s5 + $0xb0] sm:$0xff]
  %v2794 = vld [vmem:[%s5 + $0xb8] sm:$0xff]
  %v2795 = vld [vmem:[%s6] sm:$0x1]
  %v2797 = vperm.slane %v2795, 0
  %v2799 = vsel %vm40, %v2699, 0
  %v2801 = vsel %vm40, %v2700, 0
  %v2803 = vsel %vm40, %v2701, 0
  %v2805 = vsel %vm40, %v2702, 0
  %v2807 = vsel %vm40, %v2703, 0
  %v2809 = vsel %vm40, %v2704, 0
  %v2812 = vsel %vm40, %v2705, 0
  %v2815 = vsel %vm40, %v2706, 0
  %v2818 = vsel %vm40, %v2707, 0
  %v2821 = vsel %vm40, %v2708, 0
  %v2824 = vsel %vm40, %v2709, 0
  %v2827 = vsel %vm40, %v2710, 0
  %2829 = vmatpush.msra.mxu0 %v2786
  %2830 = vmatpush.msra.mxu0 %v2785
  %2831 = vmatpush.msra.mxu0 %v2784
  %2832 = vmatpush.msra.mxu0 %v2783
  %2833 = vmatpush.msra.mxu0 %v2782
  %2834 = vmatpush.msra.mxu0 %v2781
  %2835 = vmatpush.msra.mxu0 %v2780
  %2836 = vmatpush.msra.mxu0 %v2779
  %2837 = vmatpush.msra.mxu0 %v2778
  %2838 = vmatpush.msra.mxu0 %v2777
  %2839 = vmatpush.msra.mxu0 %v2776
  %2840 = vmatpush.msra.mxu0 %v2775
  %2841 = vmatpush.msra.mxu0 %v2774
  %2842 = vmatpush.msra.mxu0 %v2773
  %2843 = vmatpush.msra.mxu0 %v2772
  %2844 = vmatpush.msra.mxu0 %v2771
  %2845 = vmatmul.f32.gmra.mxu0 %v2759
  %v2846 = vpop.f32.mrf.mxu0
  %v2847 = vadd.f32 %v2797, %v2846
  %2848 = vmatmul.f32.gmra.mxu0 %v2760
  %v2849 = vpop.f32.mrf.mxu0
  %v2850 = vadd.f32 %v2797, %v2849
  %2851 = vmatmul.f32.gmra.mxu0 %v2761
  %v2852 = vpop.f32.mrf.mxu0
  %v2853 = vadd.f32 %v2797, %v2852
  %2854 = vmatmul.f32.gmra.mxu0 %v2762
  %v2855 = vpop.f32.mrf.mxu0
  %v2856 = vadd.f32 %v2797, %v2855
  %2857 = vmatmul.f32.gmra.mxu0 %v2763
  %v2858 = vpop.f32.mrf.mxu0
  %v2859 = vadd.f32 %v2797, %v2858
  %2860 = vmatmul.f32.gmra.mxu0 %v2764
  %v2861 = vpop.f32.mrf.mxu0
  %v2862 = vadd.f32 %v2797, %v2861
  %2863 = vmatmul.f32.gmra.mxu0 %v2765
  %v2864 = vpop.f32.mrf.mxu0
  %v2865 = vadd.f32 %v2797, %v2864
  %2866 = vmatmul.f32.gmra.mxu0 %v2766
  %v2867 = vpop.f32.mrf.mxu0
  %v2868 = vadd.f32 %v2797, %v2867
  %2869 = vmatmul.f32.gmra.mxu0 %v2767
  %v2870 = vpop.f32.mrf.mxu0
  %v2871 = vadd.f32 %v2797, %v2870
  %2872 = vmatmul.f32.gmra.mxu0 %v2768
  %v2873 = vpop.f32.mrf.mxu0
  %v2874 = vadd.f32 %v2797, %v2873
  %2875 = vmatmul.f32.gmra.mxu0 %v2769
  %v2876 = vpop.f32.mrf.mxu0
  %v2877 = vadd.f32 %v2797, %v2876
  %2878 = vmatmul.f32.gmra.mxu0 %v2770
  %v2879 = vpop.f32.mrf.mxu0
  %v2880 = vadd.f32 %v2797, %v2879
  %2881 = vdwg.mxu0
  %2882 = vmatpush.msra.mxu0 0.0
  %2883 = vmatpush.msra.mxu0 0.0
  %2884 = vmatpush.msra.mxu0 0.0
  %2885 = vmatpush.msra.mxu0 0.0
  %2886 = vmatpush.msra.mxu0 0.0
  %2887 = vmatpush.msra.mxu0 0.0
  %2888 = vmatpush.msra.mxu0 0.0
  %2889 = vmatpush.msra.mxu0 0.0
  %2890 = vmatpush.msra.mxu0 %v2794
  %2891 = vmatpush.msra.mxu0 %v2793
  %2892 = vmatpush.msra.mxu0 %v2792
  %2893 = vmatpush.msra.mxu0 %v2791
  %2894 = vmatpush.msra.mxu0 %v2790
  %2895 = vmatpush.msra.mxu0 %v2789
  %2896 = vmatpush.msra.mxu0 %v2788
  %2897 = vmatpush.msra.mxu0 %v2787
  %2898 = vmatmul.f32.gmra.mxu0 %v2799
  %v2899 = vpop.f32.mrf.mxu0
  %v2900 = vadd.f32 %v2847, %v2899
  %2901 = vmatmul.f32.gmra.mxu0 %v2801
  %v2902 = vpop.f32.mrf.mxu0
  %v2903 = vadd.f32 %v2850, %v2902
  %2904 = vmatmul.f32.gmra.mxu0 %v2803
  %v2905 = vpop.f32.mrf.mxu0
  %v2906 = vadd.f32 %v2853, %v2905
  %2907 = vmatmul.f32.gmra.mxu0 %v2805
  %v2908 = vpop.f32.mrf.mxu0
  %v2909 = vadd.f32 %v2856, %v2908
  %2910 = vmatmul.f32.gmra.mxu0 %v2807
  %v2911 = vpop.f32.mrf.mxu0
  %v2912 = vadd.f32 %v2859, %v2911
  %2913 = vmatmul.f32.gmra.mxu0 %v2809
  %v2914 = vpop.f32.mrf.mxu0
  %v2915 = vadd.f32 %v2862, %v2914
  %2916 = vmatmul.f32.gmra.mxu0 %v2812
  %v2917 = vpop.f32.mrf.mxu0
  %v2918 = vadd.f32 %v2865, %v2917
  %2919 = vmatmul.f32.gmra.mxu0 %v2815
  %v2920 = vpop.f32.mrf.mxu0
  %v2921 = vadd.f32 %v2868, %v2920
  %2922 = vmatmul.f32.gmra.mxu0 %v2818
  %v2923 = vpop.f32.mrf.mxu0
  %v2924 = vadd.f32 %v2871, %v2923
  %2925 = vmatmul.f32.gmra.mxu0 %v2821
  %v2926 = vpop.f32.mrf.mxu0
  %v2927 = vadd.f32 %v2874, %v2926
  %2928 = vmatmul.f32.gmra.mxu0 %v2824
  %v2929 = vpop.f32.mrf.mxu0
  %v2930 = vadd.f32 %v2877, %v2929
  %2931 = vmatmul.f32.gmra.mxu0 %v2827
  %v2932 = vpop.f32.mrf.mxu0
  %v2933 = vadd.f32 %v2880, %v2932
  %2934 = vdwg.mxu0
  %v2935 = vmax.f32 %v2900, 0.0
  %v2936 = vmax.f32 %v2903, 0.0
  %v2937 = vmax.f32 %v2906, 0.0
  %v2938 = vmax.f32 %v2909, 0.0
  %v2939 = vmax.f32 %v2912, 0.0
  %v2940 = vmax.f32 %v2915, 0.0
  %v2941 = vmax.f32 %v2918, 0.0
  %v2942 = vmax.f32 %v2921, 0.0
  %v2943 = vmax.f32 %v2924, 0.0
  %v2944 = vmax.f32 %v2927, 0.0
  %v2945 = vmax.f32 %v2930, 0.0
  %v2946 = vmax.f32 %v2933, 0.0
  %v2947 = vadd.f32 %v2935, %v2941
  %v2948 = vadd.f32 %v2936, %v2942
  %v2949 = vadd.f32 %v2937, %v2943
  %v2950 = vadd.f32 %v2938, %v2944
  %v2951 = vadd.f32 %v2939, %v2945
  %v2952 = vadd.f32 %v2940, %v2946
  %2959 = vrot.lane.b32.xlu0 %v2947, 64
  %v2960 = vpop.permute.xlu0 %2959
  %2961 = vrot.lane.b32.xlu0 %v2948, 64
  %v2962 = vpop.permute.xlu0 %2961
  %2963 = vrot.lane.b32.xlu0 %v2949, 64
  %v2964 = vpop.permute.xlu0 %2963
  %2965 = vrot.lane.b32.xlu0 %v2950, 64
  %v2966 = vpop.permute.xlu0 %2965
  %2967 = vrot.lane.b32.xlu0 %v2951, 64
  %v2968 = vpop.permute.xlu0 %2967
  %2969 = vrot.lane.b32.xlu0 %v2952, 64
  %v2970 = vpop.permute.xlu0 %2969
  %v2977 = vadd.f32 %v2947, %v2960
  %v2978 = vadd.f32 %v2948, %v2962
  %v2979 = vadd.f32 %v2949, %v2964
  %v2980 = vadd.f32 %v2950, %v2966
  %v2981 = vadd.f32 %v2951, %v2968
  %v2982 = vadd.f32 %v2952, %v2970
  %v2983 = vmul.f32 %v2977, 0.25
  %v2984 = vmul.f32 %v2978, 0.25
  %v2985 = vmul.f32 %v2979, 0.25
  %v2986 = vmul.f32 %v2980, 0.25
  %v2987 = vmul.f32 %v2981, 0.25
  %v2988 = vmul.f32 %v2982, 0.25
  %v2989 = vld [vmem:[%s2062] sm:$0xff]
  %v2990 = vld [vmem:[%s2062 + $0x8] sm:$0xff]
  %v2991 = vld [vmem:[%s2062 + $0x10] sm:$0xff]
  %v2992 = vld [vmem:[%s2062 + $0x18] sm:$0xff]
  %v2993 = vld [vmem:[%s2062 + $0x20] sm:$0xff]
  %v2994 = vld [vmem:[%s2062 + $0x28] sm:$0xff]
  %v2995 = vld [vmem:[%s2062 + $0x30] sm:$0xff]
  %v2996 = vld [vmem:[%s2062 + $0x38] sm:$0xff]
  %v2997 = vld [vmem:[%s2062 + $0x40] sm:$0xff]
  %v2998 = vld [vmem:[%s2062 + $0x48] sm:$0xff]
  %v2999 = vld [vmem:[%s2062 + $0x50] sm:$0xff]
  %v3000 = vld [vmem:[%s2062 + $0x58] sm:$0xff]
  %v3001 = vld [vmem:[%s2062 + $0x60] sm:$0xff]
  %v3002 = vld [vmem:[%s2062 + $0x68] sm:$0xff]
  %v3003 = vld [vmem:[%s2062 + $0x70] sm:$0xff]
  %v3004 = vld [vmem:[%s2062 + $0x78] sm:$0xff]
  %v3005 = vld [vmem:[%s2062 + $0x80] sm:$0xff]
  %v3006 = vld [vmem:[%s2062 + $0x88] sm:$0xff]
  %v3007 = vld [vmem:[%s2062 + $0x90] sm:$0xff]
  %v3008 = vld [vmem:[%s2062 + $0x98] sm:$0xff]
  %v3009 = vld [vmem:[%s2062 + $0xa0] sm:$0xff]
  %v3010 = vld [vmem:[%s2062 + $0xa8] sm:$0xff]
  %v3011 = vld [vmem:[%s2062 + $0xb0] sm:$0xff]
  %v3012 = vld [vmem:[%s2062 + $0xb8] sm:$0xff]
  %3025 = vrot.lane.b32.xlu0 %v2995, 64
  %v3026 = vpop.permute.xlu0 %3025
  %3027 = vrot.lane.b32.xlu0 %v2996, 64
  %v3028 = vpop.permute.xlu0 %3027
  %3029 = vrot.lane.b32.xlu0 %v2997, 64
  %v3030 = vpop.permute.xlu0 %3029
  %3031 = vrot.lane.b32.xlu0 %v2998, 64
  %v3032 = vpop.permute.xlu0 %3031
  %3033 = vrot.lane.b32.xlu0 %v2999, 64
  %v3034 = vpop.permute.xlu0 %3033
  %3035 = vrot.lane.b32.xlu0 %v3000, 64
  %v3036 = vpop.permute.xlu0 %3035
  %3037 = vrot.lane.b32.xlu0 %v3001, 64
  %v3038 = vpop.permute.xlu0 %3037
  %3039 = vrot.lane.b32.xlu0 %v3002, 64
  %v3040 = vpop.permute.xlu0 %3039
  %3041 = vrot.lane.b32.xlu0 %v3003, 64
  %v3042 = vpop.permute.xlu0 %3041
  %3043 = vrot.lane.b32.xlu0 %v3004, 64
  %v3044 = vpop.permute.xlu0 %3043
  %3045 = vrot.lane.b32.xlu0 %v3005, 64
  %v3046 = vpop.permute.xlu0 %3045
  %3047 = vrot.lane.b32.xlu0 %v3006, 64
  %v3048 = vpop.permute.xlu0 %3047
  %v3061 = vsel %vm40, %v2989, %v3026
  %v3062 = vsel %vm40, %v2990, %v3028
  %v3063 = vsel %vm40, %v2991, %v3030
  %v3064 = vsel %vm40, %v2992, %v3032
  %v3065 = vsel %vm40, %v2993, %v3034
  %v3066 = vsel %vm40, %v2994, %v3036
  %v3067 = vsel %vm40, %v2995, %v3038
  %v3068 = vsel %vm40, %v2996, %v3040
  %v3069 = vsel %vm40, %v2997, %v3042
  %v3070 = vsel %vm40, %v2998, %v3044
  %v3071 = vsel %vm40, %v2999, %v3046
  %v3072 = vsel %vm40, %v3000, %v3048
  %v3073 = vsel %vm40, %v3001, 0
  %v3075 = vsel %vm40, %v3002, 0
  %v3077 = vsel %vm40, %v3003, 0
  %v3079 = vsel %vm40, %v3004, 0
  %v3081 = vsel %vm40, %v3005, 0
  %v3083 = vsel %vm40, %v3006, 0
  %v3086 = vsel %vm40, %v3007, 0
  %v3089 = vsel %vm40, %v3008, 0
  %v3092 = vsel %vm40, %v3009, 0
  %v3095 = vsel %vm40, %v3010, 0
  %v3098 = vsel %vm40, %v3011, 0
  %v3101 = vsel %vm40, %v3012, 0
  %3103 = vmatpush.msra.mxu0 %v2786
  %3104 = vmatpush.msra.mxu0 %v2785
  %3105 = vmatpush.msra.mxu0 %v2784
  %3106 = vmatpush.msra.mxu0 %v2783
  %3107 = vmatpush.msra.mxu0 %v2782
  %3108 = vmatpush.msra.mxu0 %v2781
  %3109 = vmatpush.msra.mxu0 %v2780
  %3110 = vmatpush.msra.mxu0 %v2779
  %3111 = vmatpush.msra.mxu0 %v2778
  %3112 = vmatpush.msra.mxu0 %v2777
  %3113 = vmatpush.msra.mxu0 %v2776
  %3114 = vmatpush.msra.mxu0 %v2775
  %3115 = vmatpush.msra.mxu0 %v2774
  %3116 = vmatpush.msra.mxu0 %v2773
  %3117 = vmatpush.msra.mxu0 %v2772
  %3118 = vmatpush.msra.mxu0 %v2771
  %3119 = vmatmul.f32.gmra.mxu0 %v3061
  %v3120 = vpop.f32.mrf.mxu0
  %v3121 = vadd.f32 %v2797, %v3120
  %3122 = vmatmul.f32.gmra.mxu0 %v3062
  %v3123 = vpop.f32.mrf.mxu0
  %v3124 = vadd.f32 %v2797, %v3123
  %3125 = vmatmul.f32.gmra.mxu0 %v3063
  %v3126 = vpop.f32.mrf.mxu0
  %v3127 = vadd.f32 %v2797, %v3126
  %3128 = vmatmul.f32.gmra.mxu0 %v3064
  %v3129 = vpop.f32.mrf.mxu0
  %v3130 = vadd.f32 %v2797, %v3129
  %3131 = vmatmul.f32.gmra.mxu0 %v3065
  %v3132 = vpop.f32.mrf.mxu0
  %v3133 = vadd.f32 %v2797, %v3132
  %3134 = vmatmul.f32.gmra.mxu0 %v3066
  %v3135 = vpop.f32.mrf.mxu0
  %v3136 = vadd.f32 %v2797, %v3135
  %3137 = vmatmul.f32.gmra.mxu0 %v3067
  %v3138 = vpop.f32.mrf.mxu0
  %v3139 = vadd.f32 %v2797, %v3138
  %3140 = vmatmul.f32.gmra.mxu0 %v3068
  %v3141 = vpop.f32.mrf.mxu0
  %v3142 = vadd.f32 %v2797, %v3141
  %3143 = vmatmul.f32.gmra.mxu0 %v3069
  %v3144 = vpop.f32.mrf.mxu0
  %v3145 = vadd.f32 %v2797, %v3144
  %3146 = vmatmul.f32.gmra.mxu0 %v3070
  %v3147 = vpop.f32.mrf.mxu0
  %v3148 = vadd.f32 %v2797, %v3147
  %3149 = vmatmul.f32.gmra.mxu0 %v3071
  %v3150 = vpop.f32.mrf.mxu0
  %v3151 = vadd.f32 %v2797, %v3150
  %3152 = vmatmul.f32.gmra.mxu0 %v3072
  %v3153 = vpop.f32.mrf.mxu0
  %v3154 = vadd.f32 %v2797, %v3153
  %3155 = vdwg.mxu0
  %3156 = vmatpush.msra.mxu0 0.0
  %3157 = vmatpush.msra.mxu0 0.0
  %3158 = vmatpush.msra.mxu0 0.0
  %3159 = vmatpush.msra.mxu0 0.0
  %3160 = vmatpush.msra.mxu0 0.0
  %3161 = vmatpush.msra.mxu0 0.0
  %3162 = vmatpush.msra.mxu0 0.0
  %3163 = vmatpush.msra.mxu0 0.0
  %3164 = vmatpush.msra.mxu0 %v2794
  %3165 = vmatpush.msra.mxu0 %v2793
  %3166 = vmatpush.msra.mxu0 %v2792
  %3167 = vmatpush.msra.mxu0 %v2791
  %3168 = vmatpush.msra.mxu0 %v2790
  %3169 = vmatpush.msra.mxu0 %v2789
  %3170 = vmatpush.msra.mxu0 %v2788
  %3171 = vmatpush.msra.mxu0 %v2787
  %3172 = vmatmul.f32.gmra.mxu0 %v3073
  %v3173 = vpop.f32.mrf.mxu0
  %v3174 = vadd.f32 %v3121, %v3173
  %3175 = vmatmul.f32.gmra.mxu0 %v3075
  %v3176 = vpop.f32.mrf.mxu0
  %v3177 = vadd.f32 %v3124, %v3176
  %3178 = vmatmul.f32.gmra.mxu0 %v3077
  %v3179 = vpop.f32.mrf.mxu0
  %v3180 = vadd.f32 %v3127, %v3179
  %3181 = vmatmul.f32.gmra.mxu0 %v3079
  %v3182 = vpop.f32.mrf.mxu0
  %v3183 = vadd.f32 %v3130, %v3182
  %3184 = vmatmul.f32.gmra.mxu0 %v3081
  %v3185 = vpop.f32.mrf.mxu0
  %v3186 = vadd.f32 %v3133, %v3185
  %3187 = vmatmul.f32.gmra.mxu0 %v3083
  %v3188 = vpop.f32.mrf.mxu0
  %v3189 = vadd.f32 %v3136, %v3188
  %3190 = vmatmul.f32.gmra.mxu0 %v3086
  %v3191 = vpop.f32.mrf.mxu0
  %v3192 = vadd.f32 %v3139, %v3191
  %3193 = vmatmul.f32.gmra.mxu0 %v3089
  %v3194 = vpop.f32.mrf.mxu0
  %v3195 = vadd.f32 %v3142, %v3194
  %3196 = vmatmul.f32.gmra.mxu0 %v3092
  %v3197 = vpop.f32.mrf.mxu0
  %v3198 = vadd.f32 %v3145, %v3197
  %3199 = vmatmul.f32.gmra.mxu0 %v3095
  %v3200 = vpop.f32.mrf.mxu0
  %v3201 = vadd.f32 %v3148, %v3200
  %3202 = vmatmul.f32.gmra.mxu0 %v3098
  %v3203 = vpop.f32.mrf.mxu0
  %v3204 = vadd.f32 %v3151, %v3203
  %3205 = vmatmul.f32.gmra.mxu0 %v3101
  %v3206 = vpop.f32.mrf.mxu0
  %v3207 = vadd.f32 %v3154, %v3206
  %3208 = vdwg.mxu0
  %v3209 = vmax.f32 %v3174, 0.0
  %v3210 = vmax.f32 %v3177, 0.0
  %v3211 = vmax.f32 %v3180, 0.0
  %v3212 = vmax.f32 %v3183, 0.0
  %v3213 = vmax.f32 %v3186, 0.0
  %v3214 = vmax.f32 %v3189, 0.0
  %v3215 = vmax.f32 %v3192, 0.0
  %v3216 = vmax.f32 %v3195, 0.0
  %v3217 = vmax.f32 %v3198, 0.0
  %v3218 = vmax.f32 %v3201, 0.0
  %v3219 = vmax.f32 %v3204, 0.0
  %v3220 = vmax.f32 %v3207, 0.0
  %v3221 = vadd.f32 %v3209, %v3215
  %v3222 = vadd.f32 %v3210, %v3216
  %v3223 = vadd.f32 %v3211, %v3217
  %v3224 = vadd.f32 %v3212, %v3218
  %v3225 = vadd.f32 %v3213, %v3219
  %v3226 = vadd.f32 %v3214, %v3220
  %3233 = vrot.lane.b32.xlu0 %v3221, 64
  %v3234 = vpop.permute.xlu0 %3233
  %3235 = vrot.lane.b32.xlu0 %v3222, 64
  %v3236 = vpop.permute.xlu0 %3235
  %3237 = vrot.lane.b32.xlu0 %v3223, 64
  %v3238 = vpop.permute.xlu0 %3237
  %3239 = vrot.lane.b32.xlu0 %v3224, 64
  %v3240 = vpop.permute.xlu0 %3239
  %3241 = vrot.lane.b32.xlu0 %v3225, 64
  %v3242 = vpop.permute.xlu0 %3241
  %3243 = vrot.lane.b32.xlu0 %v3226, 64
  %v3244 = vpop.permute.xlu0 %3243
  %v3251 = vadd.f32 %v3221, %v3234
  %v3252 = vadd.f32 %v3222, %v3236
  %v3253 = vadd.f32 %v3223, %v3238
  %v3254 = vadd.f32 %v3224, %v3240
  %v3255 = vadd.f32 %v3225, %v3242
  %v3256 = vadd.f32 %v3226, %v3244
  %v3257 = vmul.f32 %v3251, 0.25
  %v3258 = vmul.f32 %v3252, 0.25
  %v3259 = vmul.f32 %v3253, 0.25
  %v3260 = vmul.f32 %v3254, 0.25
  %v3261 = vmul.f32 %v3255, 0.25
  %v3262 = vmul.f32 %v3256, 0.25
  %3264 = vrot.lane.b32.xlu0 %v2984, 64
  %v3265 = vpop.permute.xlu0 %3264
  %v3267 = vsel %vm40, %v2983, %v3265
  %3269 = vrot.lane.b32.xlu0 %v2986, 64
  %v3270 = vpop.permute.xlu0 %3269
  %v3272 = vsel %vm40, %v2985, %v3270
  %3274 = vrot.lane.b32.xlu0 %v2988, 64
  %v3275 = vpop.permute.xlu0 %3274
  %v3277 = vsel %vm40, %v2987, %v3275
  %3279 = vrot.lane.b32.xlu0 %v3258, 64
  %v3280 = vpop.permute.xlu0 %3279
  %v3282 = vsel %vm40, %v3257, %v3280
  %3284 = vrot.lane.b32.xlu0 %v3260, 64
  %v3285 = vpop.permute.xlu0 %3284
  %v3287 = vsel %vm40, %v3259, %v3285
  %3289 = vrot.lane.b32.xlu0 %v3262, 64
  %v3290 = vpop.permute.xlu0 %3289
  %v3292 = vsel %vm40, %v3261, %v3290
  %3293 = vst [vmem:[%s11] sm:$0xff] %v3267
  %3294 = vst [vmem:[%s11 + $0x8] sm:$0xff] %v3272
  %3295 = vst [vmem:[%s11 + $0x10] sm:$0xff] %v3277
  %3296 = vst [vmem:[%s11 + $0x18] sm:$0xff] %v3282
  %3297 = vst [vmem:[%s11 + $0x20] sm:$0xff] %v3287
  %3298 = vst [vmem:[%s11 + $0x28] sm:$0xff] %v3292
  %v3299 = vld [vmem:[%s7] sm:$0xff]
  %v3300 = vld [vmem:[%s7 + $0x8] sm:$0xff]
  %v3301 = vld [vmem:[%s7 + $0x10] sm:$0xff]
  %v3302 = vld [vmem:[%s7 + $0x18] sm:$0xff]
  %v3303 = vld [vmem:[%s7 + $0x20] sm:$0xff]
  %v3304 = vld [vmem:[%s7 + $0x28] sm:$0xff]
  %v3305 = vld [vmem:[%s7 + $0x30] sm:$0xff]
  %v3306 = vld [vmem:[%s7 + $0x38] sm:$0xff]
  %v3307 = vld [vmem:[%s7 + $0x40] sm:$0xff]
  %v3308 = vld [vmem:[%s7 + $0x48] sm:$0xff]
  %v3309 = vld [vmem:[%s7 + $0x50] sm:$0xff]
  %v3310 = vld [vmem:[%s7 + $0x58] sm:$0xff]
  %v3311 = vld [vmem:[%s7 + $0x60] sm:$0xff]
  %v3312 = vld [vmem:[%s7 + $0x68] sm:$0xff]
  %v3313 = vld [vmem:[%s7 + $0x70] sm:$0xff]
  %v3314 = vld [vmem:[%s7 + $0x78] sm:$0xff]
  %v3315 = vld [vmem:[%s7 + $0x80] sm:$0xff]
  %v3316 = vld [vmem:[%s7 + $0x88] sm:$0xff]
  %v3317 = vld [vmem:[%s7 + $0x90] sm:$0xff]
  %v3318 = vld [vmem:[%s7 + $0x98] sm:$0xff]
  %v3319 = vld [vmem:[%s7 + $0xa0] sm:$0xff]
  %v3320 = vld [vmem:[%s7 + $0xa8] sm:$0xff]
  %v3321 = vld [vmem:[%s7 + $0xb0] sm:$0xff]
  %v3322 = vld [vmem:[%s7 + $0xb8] sm:$0xff]
  %v3323 = vld [vmem:[%s7 + $0xc0] sm:$0xff]
  %v3324 = vld [vmem:[%s7 + $0xc8] sm:$0xff]
  %v3325 = vld [vmem:[%s7 + $0xd0] sm:$0xff]
  %v3326 = vld [vmem:[%s7 + $0xd8] sm:$0xff]
  %v3327 = vld [vmem:[%s7 + $0xe0] sm:$0xff]
  %v3328 = vld [vmem:[%s7 + $0xe8] sm:$0xff]
  %v3329 = vld [vmem:[%s7 + $0xf0] sm:$0xff]
  %v3330 = vld [vmem:[%s7 + $0xf8] sm:$0xff]
  %v3331 = vld [vmem:[%s7 + $0x100] sm:$0xff]
  %v3332 = vld [vmem:[%s7 + $0x108] sm:$0xff]
  %v3333 = vld [vmem:[%s7 + $0x110] sm:$0xff]
  %v3334 = vld [vmem:[%s7 + $0x118] sm:$0xff]
  %v3335 = vld [vmem:[%s7 + $0x120] sm:$0xff]
  %v3336 = vld [vmem:[%s7 + $0x128] sm:$0xff]
  %v3337 = vld [vmem:[%s7 + $0x130] sm:$0xff]
  %v3338 = vld [vmem:[%s7 + $0x138] sm:$0xff]
  %v3339 = vld [vmem:[%s7 + $0x140] sm:$0xff]
  %v3340 = vld [vmem:[%s7 + $0x148] sm:$0xff]
  %v3341 = vld [vmem:[%s7 + $0x150] sm:$0xff]
  %v3342 = vld [vmem:[%s7 + $0x158] sm:$0xff]
  %v3343 = vld [vmem:[%s7 + $0x160] sm:$0xff]
  %v3344 = vld [vmem:[%s7 + $0x168] sm:$0xff]
  %v3345 = vld [vmem:[%s7 + $0x170] sm:$0xff]
  %v3346 = vld [vmem:[%s7 + $0x178] sm:$0xff]
  %v3347 = vld [vmem:[%s7 + $0x180] sm:$0xff]
  %v3348 = vld [vmem:[%s7 + $0x188] sm:$0xff]
  %v3349 = vld [vmem:[%s7 + $0x190] sm:$0xff]
  %v3350 = vld [vmem:[%s7 + $0x198] sm:$0xff]
  %v3351 = vld [vmem:[%s7 + $0x1a0] sm:$0xff]
  %v3352 = vld [vmem:[%s7 + $0x1a8] sm:$0xff]
  %v3353 = vld [vmem:[%s7 + $0x1b0] sm:$0xff]
  %v3354 = vld [vmem:[%s7 + $0x1b8] sm:$0xff]
  %v3355 = vld [vmem:[%s7 + $0x1c0] sm:$0xff]
  %v3356 = vld [vmem:[%s7 + $0x1c8] sm:$0xff]
  %v3357 = vld [vmem:[%s7 + $0x1d0] sm:$0xff]
  %v3358 = vld [vmem:[%s7 + $0x1d8] sm:$0xff]
  %v3359 = vld [vmem:[%s7 + $0x1e0] sm:$0xff]
  %v3360 = vld [vmem:[%s7 + $0x1e8] sm:$0xff]
  %v3361 = vld [vmem:[%s7 + $0x1f0] sm:$0xff]
  %v3362 = vld [vmem:[%s7 + $0x1f8] sm:$0xff]
  %v3363 = vld [vmem:[%s7 + $0x200] sm:$0xff]
  %v3364 = vld [vmem:[%s7 + $0x208] sm:$0xff]
  %v3365 = vld [vmem:[%s7 + $0x210] sm:$0xff]
  %v3366 = vld [vmem:[%s7 + $0x218] sm:$0xff]
  %v3367 = vld [vmem:[%s7 + $0x220] sm:$0xff]
  %v3368 = vld [vmem:[%s7 + $0x228] sm:$0xff]
  %v3369 = vld [vmem:[%s7 + $0x230] sm:$0xff]
  %v3370 = vld [vmem:[%s7 + $0x238] sm:$0xff]
  %v3371 = vld [vmem:[%s7 + $0x240] sm:$0xff]
  %v3372 = vld [vmem:[%s7 + $0x248] sm:$0xff]
  %v3373 = vld [vmem:[%s7 + $0x250] sm:$0xff]
  %v3374 = vld [vmem:[%s7 + $0x258] sm:$0xff]
  %v3375 = vld [vmem:[%s7 + $0x260] sm:$0xff]
  %v3376 = vld [vmem:[%s7 + $0x268] sm:$0xff]
  %v3377 = vld [vmem:[%s7 + $0x270] sm:$0xff]
  %v3378 = vld [vmem:[%s7 + $0x278] sm:$0xff]
  %v3379 = vld [vmem:[%s7 + $0x280] sm:$0xff]
  %v3380 = vld [vmem:[%s7 + $0x288] sm:$0xff]
  %v3381 = vld [vmem:[%s7 + $0x290] sm:$0xff]
  %v3382 = vld [vmem:[%s7 + $0x298] sm:$0xff]
  %v3383 = vld [vmem:[%s7 + $0x2a0] sm:$0xff]
  %v3384 = vld [vmem:[%s7 + $0x2a8] sm:$0xff]
  %v3385 = vld [vmem:[%s7 + $0x2b0] sm:$0xff]
  %v3386 = vld [vmem:[%s7 + $0x2b8] sm:$0xff]
  %v3387 = vld [vmem:[%s7 + $0x2c0] sm:$0xff]
  %v3388 = vld [vmem:[%s7 + $0x2c8] sm:$0xff]
  %v3389 = vld [vmem:[%s7 + $0x2d0] sm:$0xff]
  %v3390 = vld [vmem:[%s7 + $0x2d8] sm:$0xff]
  %v3391 = vld [vmem:[%s7 + $0x2e0] sm:$0xff]
  %v3392 = vld [vmem:[%s7 + $0x2e8] sm:$0xff]
  %v3393 = vld [vmem:[%s7 + $0x2f0] sm:$0xff]
  %v3394 = vld [vmem:[%s7 + $0x2f8] sm:$0xff]
  %v3395 = vld [vmem:[%s7 + $0x300] sm:$0xff]
  %v3396 = vld [vmem:[%s7 + $0x308] sm:$0xff]
  %v3397 = vld [vmem:[%s7 + $0x310] sm:$0xff]
  %v3398 = vld [vmem:[%s7 + $0x318] sm:$0xff]
  %v3399 = vld [vmem:[%s7 + $0x320] sm:$0xff]
  %v3400 = vld [vmem:[%s7 + $0x328] sm:$0xff]
  %v3401 = vld [vmem:[%s7 + $0x330] sm:$0xff]
  %v3402 = vld [vmem:[%s7 + $0x338] sm:$0xff]
  %v3403 = vld [vmem:[%s7 + $0x340] sm:$0xff]
  %v3404 = vld [vmem:[%s7 + $0x348] sm:$0xff]
  %v3405 = vld [vmem:[%s7 + $0x350] sm:$0xff]
  %v3406 = vld [vmem:[%s7 + $0x358] sm:$0xff]
  %v3407 = vld [vmem:[%s7 + $0x360] sm:$0xff]
  %v3408 = vld [vmem:[%s7 + $0x368] sm:$0xff]
  %v3409 = vld [vmem:[%s7 + $0x370] sm:$0xff]
  %v3410 = vld [vmem:[%s7 + $0x378] sm:$0xff]
  %v3411 = vld [vmem:[%s7 + $0x380] sm:$0xff]
  %v3412 = vld [vmem:[%s7 + $0x388] sm:$0xff]
  %v3413 = vld [vmem:[%s7 + $0x390] sm:$0xff]
  %v3414 = vld [vmem:[%s7 + $0x398] sm:$0xff]
  %v3415 = vld [vmem:[%s7 + $0x3a0] sm:$0xff]
  %v3416 = vld [vmem:[%s7 + $0x3a8] sm:$0xff]
  %v3417 = vld [vmem:[%s7 + $0x3b0] sm:$0xff]
  %v3418 = vld [vmem:[%s7 + $0x3b8] sm:$0xff]
  %v3419 = vld [vmem:[%s7 + $0x3c0] sm:$0xff]
  %v3420 = vld [vmem:[%s7 + $0x3c8] sm:$0xff]
  %v3421 = vld [vmem:[%s7 + $0x3d0] sm:$0xff]
  %v3422 = vld [vmem:[%s7 + $0x3d8] sm:$0xff]
  %v3423 = vld [vmem:[%s7 + $0x3e0] sm:$0xff]
  %v3424 = vld [vmem:[%s7 + $0x3e8] sm:$0xff]
  %v3425 = vld [vmem:[%s7 + $0x3f0] sm:$0xff]
  %v3426 = vld [vmem:[%s7 + $0x3f8] sm:$0xff]
  %v3427 = vld [vmem:[%s7 + $0x400] sm:$0xff]
  %v3428 = vld [vmem:[%s7 + $0x408] sm:$0xff]
  %v3429 = vld [vmem:[%s7 + $0x410] sm:$0xff]
  %v3430 = vld [vmem:[%s7 + $0x418] sm:$0xff]
  %v3431 = vld [vmem:[%s7 + $0x420] sm:$0xff]
  %v3432 = vld [vmem:[%s7 + $0x428] sm:$0xff]
  %v3433 = vld [vmem:[%s7 + $0x430] sm:$0xff]
  %v3434 = vld [vmem:[%s7 + $0x438] sm:$0xff]
  %v3435 = vld [vmem:[%s7 + $0x440] sm:$0xff]
  %v3436 = vld [vmem:[%s7 + $0x448] sm:$0xff]
  %v3437 = vld [vmem:[%s7 + $0x450] sm:$0xff]
  %v3438 = vld [vmem:[%s7 + $0x458] sm:$0xff]
  %v3439 = vld [vmem:[%s7 + $0x460] sm:$0xff]
  %v3440 = vld [vmem:[%s7 + $0x468] sm:$0xff]
  %v3441 = vld [vmem:[%s7 + $0x470] sm:$0xff]
  %v3442 = vld [vmem:[%s7 + $0x478] sm:$0xff]
  %v3443 = vld [vmem:[%s7 + $0x480] sm:$0xff]
  %v3444 = vld [vmem:[%s7 + $0x488] sm:$0xff]
  %v3445 = vld [vmem:[%s7 + $0x490] sm:$0xff]
  %v3446 = vld [vmem:[%s7 + $0x498] sm:$0xff]
  %v3447 = vld [vmem:[%s7 + $0x4a0] sm:$0xff]
  %v3448 = vld [vmem:[%s7 + $0x4a8] sm:$0xff]
  %v3449 = vld [vmem:[%s7 + $0x4b0] sm:$0xff]
  %v3450 = vld [vmem:[%s7 + $0x4b8] sm:$0xff]
  %v3451 = vld [vmem:[%s7 + $0x4c0] sm:$0xff]
  %v3452 = vld [vmem:[%s7 + $0x4c8] sm:$0xff]
  %v3453 = vld [vmem:[%s7 + $0x4d0] sm:$0xff]
  %v3454 = vld [vmem:[%s7 + $0x4d8] sm:$0xff]
  %v3455 = vld [vmem:[%s7 + $0x4e0] sm:$0xff]
  %v3456 = vld [vmem:[%s7 + $0x4e8] sm:$0xff]
  %v3457 = vld [vmem:[%s7 + $0x4f0] sm:$0xff]
  %v3458 = vld [vmem:[%s7 + $0x4f8] sm:$0xff]
  %v3459 = vld [vmem:[%s7 + $0x500] sm:$0xff]
  %v3460 = vld [vmem:[%s7 + $0x508] sm:$0xff]
  %v3461 = vld [vmem:[%s7 + $0x510] sm:$0xff]
  %v3462 = vld [vmem:[%s7 + $0x518] sm:$0xff]
  %v3463 = vld [vmem:[%s7 + $0x520] sm:$0xff]
  %v3464 = vld [vmem:[%s7 + $0x528] sm:$0xff]
  %v3465 = vld [vmem:[%s7 + $0x530] sm:$0xff]
  %v3466 = vld [vmem:[%s7 + $0x538] sm:$0xff]
  %v3467 = vld [vmem:[%s7 + $0x540] sm:$0xff]
  %v3468 = vld [vmem:[%s7 + $0x548] sm:$0xff]
  %v3469 = vld [vmem:[%s7 + $0x550] sm:$0xff]
  %v3470 = vld [vmem:[%s7 + $0x558] sm:$0xff]
  %v3471 = vld [vmem:[%s7 + $0x560] sm:$0xff]
  %v3472 = vld [vmem:[%s7 + $0x568] sm:$0xff]
  %v3473 = vld [vmem:[%s7 + $0x570] sm:$0xff]
  %v3474 = vld [vmem:[%s7 + $0x578] sm:$0xff]
  %v3475 = vld [vmem:[%s7 + $0x580] sm:$0xff]
  %v3476 = vld [vmem:[%s7 + $0x588] sm:$0xff]
  %v3477 = vld [vmem:[%s7 + $0x590] sm:$0xff]
  %v3478 = vld [vmem:[%s7 + $0x598] sm:$0xff]
  %v3479 = vld [vmem:[%s7 + $0x5a0] sm:$0xff]
  %v3480 = vld [vmem:[%s7 + $0x5a8] sm:$0xff]
  %v3481 = vld [vmem:[%s7 + $0x5b0] sm:$0xff]
  %v3482 = vld [vmem:[%s7 + $0x5b8] sm:$0xff]
  %v3483 = vld [vmem:[%s7 + $0x5c0] sm:$0xff]
  %v3484 = vld [vmem:[%s7 + $0x5c8] sm:$0xff]
  %v3485 = vld [vmem:[%s7 + $0x5d0] sm:$0xff]
  %v3486 = vld [vmem:[%s7 + $0x5d8] sm:$0xff]
  %v3487 = vld [vmem:[%s7 + $0x5e0] sm:$0xff]
  %v3488 = vld [vmem:[%s7 + $0x5e8] sm:$0xff]
  %v3489 = vld [vmem:[%s7 + $0x5f0] sm:$0xff]
  %v3490 = vld [vmem:[%s7 + $0x5f8] sm:$0xff]
  %v3491 = vld [vmem:[%s8] sm:$0x3]
  %v3493 = vperm.slane %v3491, 0
  %v3494 = vperm.slane %v3491, 1
  %3497 = vmatpush.msra.mxu0 %v3329
  %3498 = vmatpush.msra.mxu0 %v3327
  %3499 = vmatpush.msra.mxu0 %v3325
  %3500 = vmatpush.msra.mxu0 %v3323
  %3501 = vmatpush.msra.mxu0 %v3321
  %3502 = vmatpush.msra.mxu0 %v3319
  %3503 = vmatpush.msra.mxu0 %v3317
  %3504 = vmatpush.msra.mxu0 %v3315
  %3505 = vmatpush.msra.mxu0 %v3313
  %3506 = vmatpush.msra.mxu0 %v3311
  %3507 = vmatpush.msra.mxu0 %v3309
  %3508 = vmatpush.msra.mxu0 %v3307
  %3509 = vmatpush.msra.mxu0 %v3305
  %3510 = vmatpush.msra.mxu0 %v3303
  %3511 = vmatpush.msra.mxu0 %v3301
  %3512 = vmatpush.msra.mxu0 %v3299
  %3513 = vmatmul.f32.gmra.mxu0 %v3267
  %v3514 = vpop.f32.mrf.mxu0
  %v3515 = vadd.f32 %v3493, %v3514
  %3516 = vdwg.mxu0
  %3517 = vmatpush.msra.mxu0 %v3361
  %3518 = vmatpush.msra.mxu0 %v3359
  %3519 = vmatpush.msra.mxu0 %v3357
  %3520 = vmatpush.msra.mxu0 %v3355
  %3521 = vmatpush.msra.mxu0 %v3353
  %3522 = vmatpush.msra.mxu0 %v3351
  %3523 = vmatpush.msra.mxu0 %v3349
  %3524 = vmatpush.msra.mxu0 %v3347
  %3525 = vmatpush.msra.mxu0 %v3345
  %3526 = vmatpush.msra.mxu0 %v3343
  %3527 = vmatpush.msra.mxu0 %v3341
  %3528 = vmatpush.msra.mxu0 %v3339
  %3529 = vmatpush.msra.mxu0 %v3337
  %3530 = vmatpush.msra.mxu0 %v3335
  %3531 = vmatpush.msra.mxu0 %v3333
  %3532 = vmatpush.msra.mxu0 %v3331
  %3533 = vmatmul.f32.gmra.mxu0 %v3272
  %v3534 = vpop.f32.mrf.mxu0
  %v3535 = vadd.f32 %v3515, %v3534
  %3536 = vdwg.mxu0
  %3537 = vmatpush.msra.mxu0 %v3393
  %3538 = vmatpush.msra.mxu0 %v3391
  %3539 = vmatpush.msra.mxu0 %v3389
  %3540 = vmatpush.msra.mxu0 %v3387
  %3541 = vmatpush.msra.mxu0 %v3385
  %3542 = vmatpush.msra.mxu0 %v3383
  %3543 = vmatpush.msra.mxu0 %v3381
  %3544 = vmatpush.msra.mxu0 %v3379
  %3545 = vmatpush.msra.mxu0 %v3377
  %3546 = vmatpush.msra.mxu0 %v3375
  %3547 = vmatpush.msra.mxu0 %v3373
  %3548 = vmatpush.msra.mxu0 %v3371
  %3549 = vmatpush.msra.mxu0 %v3369
  %3550 = vmatpush.msra.mxu0 %v3367
  %3551 = vmatpush.msra.mxu0 %v3365
  %3552 = vmatpush.msra.mxu0 %v3363
  %3553 = vmatmul.f32.gmra.mxu0 %v3277
  %v3554 = vpop.f32.mrf.mxu0
  %v3555 = vadd.f32 %v3535, %v3554
  %3556 = vdwg.mxu0
  %3557 = vmatpush.msra.mxu0 %v3425
  %3558 = vmatpush.msra.mxu0 %v3423
  %3559 = vmatpush.msra.mxu0 %v3421
  %3560 = vmatpush.msra.mxu0 %v3419
  %3561 = vmatpush.msra.mxu0 %v3417
  %3562 = vmatpush.msra.mxu0 %v3415
  %3563 = vmatpush.msra.mxu0 %v3413
  %3564 = vmatpush.msra.mxu0 %v3411
  %3565 = vmatpush.msra.mxu0 %v3409
  %3566 = vmatpush.msra.mxu0 %v3407
  %3567 = vmatpush.msra.mxu0 %v3405
  %3568 = vmatpush.msra.mxu0 %v3403
  %3569 = vmatpush.msra.mxu0 %v3401
  %3570 = vmatpush.msra.mxu0 %v3399
  %3571 = vmatpush.msra.mxu0 %v3397
  %3572 = vmatpush.msra.mxu0 %v3395
  %3573 = vmatmul.f32.gmra.mxu0 %v3282
  %v3574 = vpop.f32.mrf.mxu0
  %v3575 = vadd.f32 %v3555, %v3574
  %3576 = vdwg.mxu0
  %3577 = vmatpush.msra.mxu0 %v3457
  %3578 = vmatpush.msra.mxu0 %v3455
  %3579 = vmatpush.msra.mxu0 %v3453
  %3580 = vmatpush.msra.mxu0 %v3451
  %3581 = vmatpush.msra.mxu0 %v3449
  %3582 = vmatpush.msra.mxu0 %v3447
  %3583 = vmatpush.msra.mxu0 %v3445
  %3584 = vmatpush.msra.mxu0 %v3443
  %3585 = vmatpush.msra.mxu0 %v3441
  %3586 = vmatpush.msra.mxu0 %v3439
  %3587 = vmatpush.msra.mxu0 %v3437
  %3588 = vmatpush.msra.mxu0 %v3435
  %3589 = vmatpush.msra.mxu0 %v3433
  %3590 = vmatpush.msra.mxu0 %v3431
  %3591 = vmatpush.msra.mxu0 %v3429
  %3592 = vmatpush.msra.mxu0 %v3427
  %3593 = vmatmul.f32.gmra.mxu0 %v3287
  %v3594 = vpop.f32.mrf.mxu0
  %v3595 = vadd.f32 %v3575, %v3594
  %3596 = vdwg.mxu0
  %3597 = vmatpush.msra.mxu0 %v3489
  %3598 = vmatpush.msra.mxu0 %v3487
  %3599 = vmatpush.msra.mxu0 %v3485
  %3600 = vmatpush.msra.mxu0 %v3483
  %3601 = vmatpush.msra.mxu0 %v3481
  %3602 = vmatpush.msra.mxu0 %v3479
  %3603 = vmatpush.msra.mxu0 %v3477
  %3604 = vmatpush.msra.mxu0 %v3475
  %3605 = vmatpush.msra.mxu0 %v3473
  %3606 = vmatpush.msra.mxu0 %v3471
  %3607 = vmatpush.msra.mxu0 %v3469
  %3608 = vmatpush.msra.mxu0 %v3467
  %3609 = vmatpush.msra.mxu0 %v3465
  %3610 = vmatpush.msra.mxu0 %v3463
  %3611 = vmatpush.msra.mxu0 %v3461
  %3612 = vmatpush.msra.mxu0 %v3459
  %3613 = vmatmul.f32.gmra.mxu0 %v3292
  %v3614 = vpop.f32.mrf.mxu0
  %v3615 = vadd.f32 %v3595, %v3614
  %3616 = vdwg.mxu0
  %3617 = vmatpush.msra.mxu0 %v3330
  %3618 = vmatpush.msra.mxu0 %v3328
  %3619 = vmatpush.msra.mxu0 %v3326
  %3620 = vmatpush.msra.mxu0 %v3324
  %3621 = vmatpush.msra.mxu0 %v3322
  %3622 = vmatpush.msra.mxu0 %v3320
  %3623 = vmatpush.msra.mxu0 %v3318
  %3624 = vmatpush.msra.mxu0 %v3316
  %3625 = vmatpush.msra.mxu0 %v3314
  %3626 = vmatpush.msra.mxu0 %v3312
  %3627 = vmatpush.msra.mxu0 %v3310
  %3628 = vmatpush.msra.mxu0 %v3308
  %3629 = vmatpush.msra.mxu0 %v3306
  %3630 = vmatpush.msra.mxu0 %v3304
  %3631 = vmatpush.msra.mxu0 %v3302
  %3632 = vmatpush.msra.mxu0 %v3300
  %3633 = vmatmul.f32.gmra.mxu0 %v3267
  %v3634 = vpop.f32.mrf.mxu0
  %v3635 = vadd.f32 %v3494, %v3634
  %3636 = vdwg.mxu0
  %3637 = vmatpush.msra.mxu0 %v3362
  %3638 = vmatpush.msra.mxu0 %v3360
  %3639 = vmatpush.msra.mxu0 %v3358
  %3640 = vmatpush.msra.mxu0 %v3356
  %3641 = vmatpush.msra.mxu0 %v3354
  %3642 = vmatpush.msra.mxu0 %v3352
  %3643 = vmatpush.msra.mxu0 %v3350
  %3644 = vmatpush.msra.mxu0 %v3348
  %3645 = vmatpush.msra.mxu0 %v3346
  %3646 = vmatpush.msra.mxu0 %v3344
  %3647 = vmatpush.msra.mxu0 %v3342
  %3648 = vmatpush.msra.mxu0 %v3340
  %3649 = vmatpush.msra.mxu0 %v3338
  %3650 = vmatpush.msra.mxu0 %v3336
  %3651 = vmatpush.msra.mxu0 %v3334
  %3652 = vmatpush.msra.mxu0 %v3332
  %3653 = vmatmul.f32.gmra.mxu0 %v3272
  %v3654 = vpop.f32.mrf.mxu0
  %v3655 = vadd.f32 %v3635, %v3654
  %3656 = vdwg.mxu0
  %3657 = vmatpush.msra.mxu0 %v3394
  %3658 = vmatpush.msra.mxu0 %v3392
  %3659 = vmatpush.msra.mxu0 %v3390
  %3660 = vmatpush.msra.mxu0 %v3388
  %3661 = vmatpush.msra.mxu0 %v3386
  %3662 = vmatpush.msra.mxu0 %v3384
  %3663 = vmatpush.msra.mxu0 %v3382
  %3664 = vmatpush.msra.mxu0 %v3380
  %3665 = vmatpush.msra.mxu0 %v3378
  %3666 = vmatpush.msra.mxu0 %v3376
  %3667 = vmatpush.msra.mxu0 %v3374
  %3668 = vmatpush.msra.mxu0 %v3372
  %3669 = vmatpush.msra.mxu0 %v3370
  %3670 = vmatpush.msra.mxu0 %v3368
  %3671 = vmatpush.msra.mxu0 %v3366
  %3672 = vmatpush.msra.mxu0 %v3364
  %3673 = vmatmul.f32.gmra.mxu0 %v3277
  %v3674 = vpop.f32.mrf.mxu0
  %v3675 = vadd.f32 %v3655, %v3674
  %3676 = vdwg.mxu0
  %3677 = vmatpush.msra.mxu0 %v3426
  %3678 = vmatpush.msra.mxu0 %v3424
  %3679 = vmatpush.msra.mxu0 %v3422
  %3680 = vmatpush.msra.mxu0 %v3420
  %3681 = vmatpush.msra.mxu0 %v3418
  %3682 = vmatpush.msra.mxu0 %v3416
  %3683 = vmatpush.msra.mxu0 %v3414
  %3684 = vmatpush.msra.mxu0 %v3412
  %3685 = vmatpush.msra.mxu0 %v3410
  %3686 = vmatpush.msra.mxu0 %v3408
  %3687 = vmatpush.msra.mxu0 %v3406
  %3688 = vmatpush.msra.mxu0 %v3404
  %3689 = vmatpush.msra.mxu0 %v3402
  %3690 = vmatpush.msra.mxu0 %v3400
  %3691 = vmatpush.msra.mxu0 %v3398
  %3692 = vmatpush.msra.mxu0 %v3396
  %3693 = vmatmul.f32.gmra.mxu0 %v3282
  %v3694 = vpop.f32.mrf.mxu0
  %v3695 = vadd.f32 %v3675, %v3694
  %3696 = vdwg.mxu0
  %3697 = vmatpush.msra.mxu0 %v3458
  %3698 = vmatpush.msra.mxu0 %v3456
  %3699 = vmatpush.msra.mxu0 %v3454
  %3700 = vmatpush.msra.mxu0 %v3452
  %3701 = vmatpush.msra.mxu0 %v3450
  %3702 = vmatpush.msra.mxu0 %v3448
  %3703 = vmatpush.msra.mxu0 %v3446
  %3704 = vmatpush.msra.mxu0 %v3444
  %3705 = vmatpush.msra.mxu0 %v3442
  %3706 = vmatpush.msra.mxu0 %v3440
  %3707 = vmatpush.msra.mxu0 %v3438
  %3708 = vmatpush.msra.mxu0 %v3436
  %3709 = vmatpush.msra.mxu0 %v3434
  %3710 = vmatpush.msra.mxu0 %v3432
  %3711 = vmatpush.msra.mxu0 %v3430
  %3712 = vmatpush.msra.mxu0 %v3428
  %3713 = vmatmul.f32.gmra.mxu0 %v3287
  %v3714 = vpop.f32.mrf.mxu0
  %v3715 = vadd.f32 %v3695, %v3714
  %3716 = vdwg.mxu0
  %3717 = vmatpush.msra.mxu0 %v3490
  %3718 = vmatpush.msra.mxu0 %v3488
  %3719 = vmatpush.msra.mxu0 %v3486
  %3720 = vmatpush.msra.mxu0 %v3484
  %3721 = vmatpush.msra.mxu0 %v3482
  %3722 = vmatpush.msra.mxu0 %v3480
  %3723 = vmatpush.msra.mxu0 %v3478
  %3724 = vmatpush.msra.mxu0 %v3476
  %3725 = vmatpush.msra.mxu0 %v3474
  %3726 = vmatpush.msra.mxu0 %v3472
  %3727 = vmatpush.msra.mxu0 %v3470
  %3728 = vmatpush.msra.mxu0 %v3468
  %3729 = vmatpush.msra.mxu0 %v3466
  %3730 = vmatpush.msra.mxu0 %v3464
  %3731 = vmatpush.msra.mxu0 %v3462
  %3732 = vmatpush.msra.mxu0 %v3460
  %3733 = vmatmul.f32.gmra.mxu0 %v3292
  %v3734 = vpop.f32.mrf.mxu0
  %v3735 = vadd.f32 %v3715, %v3734
  %3736 = vdwg.mxu0
  %v3737 = vld [vmem:[%s9] sm:$0xff]
  %v3738 = vld [vmem:[%s9 + $0x8] sm:$0xff]
  %v3739 = vld [vmem:[%s9 + $0x10] sm:$0xff]
  %v3740 = vld [vmem:[%s9 + $0x18] sm:$0xff]
  %v3741 = vld [vmem:[%s9 + $0x20] sm:$0xff]
  %v3742 = vld [vmem:[%s9 + $0x28] sm:$0xff]
  %v3743 = vld [vmem:[%s9 + $0x30] sm:$0xff]
  %v3744 = vld [vmem:[%s9 + $0x38] sm:$0xff]
  %v3745 = vld [vmem:[%s9 + $0x40] sm:$0xff]
  %v3746 = vld [vmem:[%s9 + $0x48] sm:$0xff]
  %v3747 = vld [vmem:[%s9 + $0x50] sm:$0xff]
  %v3748 = vld [vmem:[%s9 + $0x58] sm:$0xff]
  %v3749 = vld [vmem:[%s9 + $0x60] sm:$0xff]
  %v3750 = vld [vmem:[%s9 + $0x68] sm:$0xff]
  %v3751 = vld [vmem:[%s9 + $0x70] sm:$0xff]
  %v3752 = vld [vmem:[%s9 + $0x78] sm:$0xff]
  %v3753 = vld [vmem:[%s9 + $0x80] sm:$0xff]
  %v3754 = vld [vmem:[%s9 + $0x88] sm:$0xff]
  %v3755 = vld [vmem:[%s9 + $0x90] sm:$0xff]
  %v3756 = vld [vmem:[%s9 + $0x98] sm:$0xff]
  %v3757 = vld [vmem:[%s9 + $0xa0] sm:$0xff]
  %v3758 = vld [vmem:[%s9 + $0xa8] sm:$0xff]
  %v3759 = vld [vmem:[%s9 + $0xb0] sm:$0xff]
  %v3760 = vld [vmem:[%s9 + $0xb8] sm:$0xff]
  %v3761 = vld [vmem:[%s10] sm:$0x1]
  %v3763 = vperm.slane %v3761, 0
  %v3766 = vsel %vm40, %v3735, 0
  %3768 = vmatpush.msra.mxu0 %v3752
  %3769 = vmatpush.msra.mxu0 %v3751
  %3770 = vmatpush.msra.mxu0 %v3750
  %3771 = vmatpush.msra.mxu0 %v3749
  %3772 = vmatpush.msra.mxu0 %v3748
  %3773 = vmatpush.msra.mxu0 %v3747
  %3774 = vmatpush.msra.mxu0 %v3746
  %3775 = vmatpush.msra.mxu0 %v3745
  %3776 = vmatpush.msra.mxu0 %v3744
  %3777 = vmatpush.msra.mxu0 %v3743
  %3778 = vmatpush.msra.mxu0 %v3742
  %3779 = vmatpush.msra.mxu0 %v3741
  %3780 = vmatpush.msra.mxu0 %v3740
  %3781 = vmatpush.msra.mxu0 %v3739
  %3782 = vmatpush.msra.mxu0 %v3738
  %3783 = vmatpush.msra.mxu0 %v3737
  %3784 = vmatmul.f32.gmra.mxu0 %v3615
  %v3785 = vpop.f32.mrf.mxu0
  %v3786 = vadd.f32 %v3763, %v3785
  %3787 = vdwg.mxu0
  %3788 = vmatpush.msra.mxu0 0.0
  %3789 = vmatpush.msra.mxu0 0.0
  %3790 = vmatpush.msra.mxu0 0.0
  %3791 = vmatpush.msra.mxu0 0.0
  %3792 = vmatpush.msra.mxu0 0.0
  %3793 = vmatpush.msra.mxu0 0.0
  %3794 = vmatpush.msra.mxu0 0.0
  %3795 = vmatpush.msra.mxu0 0.0
  %3796 = vmatpush.msra.mxu0 %v3760
  %3797 = vmatpush.msra.mxu0 %v3759
  %3798 = vmatpush.msra.mxu0 %v3758
  %3799 = vmatpush.msra.mxu0 %v3757
  %3800 = vmatpush.msra.mxu0 %v3756
  %3801 = vmatpush.msra.mxu0 %v3755
  %3802 = vmatpush.msra.mxu0 %v3754
  %3803 = vmatpush.msra.mxu0 %v3753
  %3804 = vmatmul.f32.gmra.mxu0 %v3766
  %v3805 = vpop.f32.mrf.mxu0
  %v3806 = vadd.f32 %v3786, %v3805
  %3807 = vdwg.mxu0
  %vm3808 = vcmask 15360
  %3809 = vst.msk [vmem:[%s12] sm:$0xff] %vm3808, %v3806
  // Predicated region
  $region46: #{forward.1} parent=0 // pred_check
    _
  $region47: #{forward.1} parent=0 // pred_check_branch
    %3811 = sbr.rel (0) target = $region49
  $region48: #{forward.1} parent=0 // pred_region
    _
  $region49: #{forward.1} parent=0 // pred_fallthru
    _
  // Predicated region
  $region50: #{forward.1} parent=0 // pred_check
    _
  $region51: #{forward.1} parent=0 // pred_check_branch
    %3813 = sbr.rel (0) target = $region53
  $region52: #{forward.1} parent=0 // pred_region
    _
  $region53: #{forward.1} parent=0 // pred_fallthru
    _
  // Predicated region
  $region54: #{forward.1} parent=0 // pred_check
    _
  $region55: #{forward.1} parent=0 // pred_check_branch
    %3815 = sbr.rel (0) target = $region57
  $region56: #{forward.1} parent=0 // pred_region
    _
  $region57: #{forward.1} parent=0 // pred_fallthru
    _
  // Predicated region
  $region58: #{forward.1} parent=0 // pred_check
    _
  $region59: #{forward.1} parent=0 // pred_check_branch
    %3817 = sbr.rel (0) target = $region61
  $region60: #{forward.1} parent=0 // pred_region
    _
  $region61: #{forward.1} parent=0 // pred_fallthru
    _

</llo_original>
